<compile_context>
chip_gen: v6e
topology: v6e:2x2x1
jax: 0.10.0
libtpu: 0.0.40
codegen_flags: <defaults>
</compile_context>

<pallas_src>
import collections
import functools

import jax
import jax.numpy as jnp
import numpy as np
from jax.experimental import pallas as pl
from jax.experimental.pallas import tpu as pltpu

_VMEM_LIMIT = 32 * 1024 * 1024
_BN_EPS = 1e-5

LayerCfg = collections.namedtuple("LayerCfg", ["stride", "pad", "k", "cout", "use_bn", "act"])


# ------------------------------ kernel bodies --------------------------------

def _act(y, activation):
    if activation == "leaky":
        return jnp.where(y >= 0.0, y, 0.2 * y)            # LeakyReLU(0.2)
    if activation == "sigmoid":
        # exp + approx reciprocal both run on the EUP slot.
        return pl.reciprocal(1.0 + jnp.exp(-y), approx=True)
    return y


def _gemm_act_kernel(w_ref, p_ref, o_ref, *, activation):
    # w: (Cp, K) bf16   p: (K, tm) bf16   o: (Cp, tm) bf16/f32
    y = jnp.dot(w_ref[...], p_ref[...], preferred_element_type=jnp.float32)
    o_ref[...] = _act(y, activation).astype(o_ref.dtype)


def _gemm_bn_act_kernel(w_ref, p_ref, g_ref, b_ref, o_ref, *, activation):
    # Single-tile fused path: the whole M extent is in this block, so the batch
    # statistics computed here are the global BatchNorm (training-mode) stats.
    y = jnp.dot(w_ref[...], p_ref[...], preferred_element_type=jnp.float32)
    mean = jnp.mean(y, axis=1, keepdims=True)
    var = jnp.maximum(jnp.mean(y * y, axis=1, keepdims=True) - mean * mean, 0.0)
    scale = jax.lax.rsqrt(var + _BN_EPS) * g_ref[...]
    o_ref[...] = _act((y - mean) * scale + b_ref[...], activation).astype(o_ref.dtype)


def _gemm_stats_kernel(w_ref, p_ref, y_ref, sum_ref, sumsq_ref):
    # Tiled-BN pass 1: GEMM + per-tile partial sums (stats reduced globally in XLA).
    # y is kept in f32 so the normalization in pass 2 matches the fused path.
    y = jnp.dot(w_ref[...], p_ref[...], preferred_element_type=jnp.float32)
    y_ref[...] = y
    sum_ref[0, :, :] = jnp.sum(y, axis=1, keepdims=True)
    sumsq_ref[0, :, :] = jnp.sum(y * y, axis=1, keepdims=True)


def _bn_act_kernel(scale_ref, shift_ref, y_ref, o_ref, *, activation):
    # Tiled-BN pass 2: per-channel affine (folded mean/rstd/gamma/beta) + activation.
    o_ref[...] = _act(y_ref[...] * scale_ref[...] + shift_ref[...],
                      activation).astype(o_ref.dtype)


# ------------------------------ pallas wrappers -------------------------------

def _cparams(semantics):
    return pltpu.CompilerParams(dimension_semantics=semantics,
                                vmem_limit_bytes=_VMEM_LIMIT)


def _gemm_act(w2d, patches, activation, tm, n_m, out_dtype):
    cp, K = w2d.shape
    M = patches.shape[1]
    kern = functools.partial(_gemm_act_kernel, activation=activation)
    return pl.pallas_call(
        kern,
        out_shape=jax.ShapeDtypeStruct((cp, M), out_dtype),
        grid=(n_m,),
        in_specs=[
            pl.BlockSpec((cp, K), lambda m: (0, 0)),
            pl.BlockSpec((K, tm), lambda m: (0, m)),
        ],
        out_specs=pl.BlockSpec((cp, tm), lambda m: (0, m)),
        compiler_params=_cparams(("parallel",)),
    )(w2d, patches)


def _gemm_bn_act(w2d, patches, gamma, beta, activation, out_dtype):
    cp, K = w2d.shape
    M = patches.shape[1]
    kern = functools.partial(_gemm_bn_act_kernel, activation=activation)
    return pl.pallas_call(
        kern,
        out_shape=jax.ShapeDtypeStruct((cp, M), out_dtype),
        grid=(1,),
        in_specs=[
            pl.BlockSpec((cp, K), lambda m: (0, 0)),
            pl.BlockSpec((K, M), lambda m: (0, 0)),
            pl.BlockSpec((cp, 1), lambda m: (0, 0)),
            pl.BlockSpec((cp, 1), lambda m: (0, 0)),
        ],
        out_specs=pl.BlockSpec((cp, M), lambda m: (0, 0)),
        compiler_params=_cparams(("arbitrary",)),
    )(w2d, patches, gamma, beta)


def _gemm_bn_act_tiled(w2d, patches, gamma, beta, activation, tm, n_m, out_dtype):
    cp, K = w2d.shape
    M = patches.shape[1]

    # Pass 1: GEMM per M tile + per-tile partial sum / sum-of-squares.
    y, psum, psumsq = pl.pallas_call(
        _gemm_stats_kernel,
        out_shape=(
            jax.ShapeDtypeStruct((cp, M), jnp.float32),
            jax.ShapeDtypeStruct((n_m, cp, 1), jnp.float32),
            jax.ShapeDtypeStruct((n_m, cp, 1), jnp.float32),
        ),
        grid=(n_m,),
        in_specs=[
            pl.BlockSpec((cp, K), lambda m: (0, 0)),
            pl.BlockSpec((K, tm), lambda m: (0, m)),
        ],
        out_specs=(
            pl.BlockSpec((cp, tm), lambda m: (0, m)),
            pl.BlockSpec((1, cp, 1), lambda m: (m, 0, 0)),
            pl.BlockSpec((1, cp, 1), lambda m: (m, 0, 0)),
        ),
        compiler_params=_cparams(("parallel",)),
    )(w2d, patches)

    # Global per-channel stats (tiny reduction) folded into one affine per channel.
    mean = jnp.sum(psum, axis=0) / M                     # (cp, 1)
    msq = jnp.sum(psumsq, axis=0) / M
    var = jnp.maximum(msq - mean * mean, 0.0)
    rstd = jax.lax.rsqrt(var + _BN_EPS)
    scale = gamma * rstd
    shift = beta - mean * scale

    # Pass 2: normalize + activation, tiled & parallel over M.
    kern = functools.partial(_bn_act_kernel, activation=activation)
    return pl.pallas_call(
        kern,
        out_shape=jax.ShapeDtypeStruct((cp, M), out_dtype),
        grid=(n_m,),
        in_specs=[
            pl.BlockSpec((cp, 1), lambda m: (0, 0)),
            pl.BlockSpec((cp, 1), lambda m: (0, 0)),
            pl.BlockSpec((cp, tm), lambda m: (0, m)),
        ],
        out_specs=pl.BlockSpec((cp, tm), lambda m: (0, m)),
        compiler_params=_cparams(("parallel",)),
    )(scale, shift, y)


# -------------------------------- JAX glue ------------------------------------

def _round_up(x, m):
    return ((x + m - 1) // m) * m


def _tile_cap(K, cp, tile_m):
    """VMEM-aware upper bound on the M tile (double-buffered patches + f32 y)."""
    budget = (_VMEM_LIMIT // 2) - 2 * cp * K * 2          # leave half as headroom
    per_col = 2 * (2 * K) + 2 * (4 * cp) + 2 * (4 * cp)   # patches + y/out dbuf
    cap = max(128, (budget // max(per_col, 1)) // 128 * 128)
    return min(tile_m, cap)


def _pick_tile(M, max_tile):
    """Largest 128-multiple divisor of M that is <= max_tile (or full M)."""
    if M <= max_tile:
        return M
    t = (max_tile // 128) * 128
    while t >= 128:
        if M % t == 0:
            return t
        t -= 128
    return M


def _im2col_cf(x, k, stride, pad):
    """Channel-first im2col: (C, B, H, W) -> (C*k*k, B*Ho*Wo), no transposes."""
    C, B, H, W = x.shape
    xp = jnp.pad(x, ((0, 0), (0, 0), (pad, pad), (pad, pad)))
    Ho = (H + 2 * pad - k) // stride + 1
    Wo = (W + 2 * pad - k) // stride + 1
    cols = []
    for di in range(k):
        for dj in range(k):
            cols.append(xp[:, :, di:di + stride * Ho:stride, dj:dj + stride * Wo:stride])
    p = jnp.stack(cols, axis=1)                       # (C, k*k, B, Ho, Wo)
    return p.reshape(C * k * k, B * Ho * Wo), Ho, Wo


def _conv_block(x, w_dict, cfg, tile_m, out_dtype):
    """x: (Cin, B, H, W) bf16 -> (Cout, B, Ho, Wo) out_dtype."""
    _, B, _, _ = x.shape
    patches, Ho, Wo = _im2col_cf(x, cfg.k, cfg.stride, cfg.pad)
    M = B * Ho * Wo
    w2d = w_dict["w"]
    cp, K = w2d.shape
    tm = _pick_tile(M, _tile_cap(K, cp, tile_m))
    n_m = M // tm
    if not cfg.use_bn:
        out = _gemm_act(w2d, patches, cfg.act, tm, n_m, out_dtype)
    elif n_m == 1:
        out = _gemm_bn_act(w2d, patches, w_dict["gamma"], w_dict["beta"], cfg.act,
                           out_dtype)
    else:
        out = _gemm_bn_act_tiled(w2d, patches, w_dict["gamma"], w_dict["beta"],
                                 cfg.act, tm, n_m, out_dtype)
    return out[:cfg.cout].reshape(cfg.cout, B, Ho, Wo)


def _prepare_input(img, labels):
    """labels.repeat_interleave(2,1) -> pad(0,16) -> expand to img -> cat,
    built directly in channel-first (C, B, H, W) bf16 layout."""
    B, nc, H, W = img.shape
    lab = jnp.repeat(labels, 2, axis=1)
    lab = jnp.pad(lab, ((0, 0), (0, 16)))
    lab_cf = jnp.broadcast_to(lab[None, :, None, :], (nc, B, H, W))
    img_cf = img.transpose(1, 0, 2, 3)
    return jnp.concatenate([img_cf, lab_cf], axis=0).astype(jnp.bfloat16)


def _forward(weights, img, labels, *, cfgs, tile_m):
    x = _prepare_input(img, labels)
    n = len(cfgs)
    for i, (w_dict, cfg) in enumerate(zip(weights, cfgs)):
        out_dtype = jnp.float32 if i == n - 1 else jnp.bfloat16
        x = _conv_block(x, w_dict, cfg, tile_m, out_dtype)
    return x.transpose(1, 0, 2, 3)                    # (B, 1, 1, 1) f32


def _make_cfgs(nc, ndf):
    del nc
    return (
        LayerCfg(2, 1, 4, ndf,     False, "leaky"),
        LayerCfg(2, 1, 4, ndf * 2, True,  "leaky"),
        LayerCfg(2, 1, 4, ndf * 4, True,  "leaky"),
        LayerCfg(2, 1, 4, ndf * 8, True,  "leaky"),
        LayerCfg(1, 0, 4, 1,       False, "sigmoid"),
    )


def _prepare_weights(params, cfgs):
    """Flatten OIHW -> (Cout_pad, K), pad Cout to a sublane multiple, cast to bf16."""
    prepared = []
    for i, cfg in enumerate(cfgs):
        w = params[f"w{i + 1}"]
        cout, cin, kh, kw = w.shape
        cp = _round_up(cout, 8)
        w2d = jnp.pad(w.reshape(cout, cin * kh * kw), ((0, cp - cout), (0, 0)))
        d = {"w": w2d.astype(jnp.bfloat16)}
        if cfg.use_bn:
            g = params[f"g{i + 1}"]
            b = params[f"b{i + 1}"]
            d["gamma"] = jnp.pad(g, (0, cp - cout)).reshape(cp, 1).astype(jnp.float32)
            d["beta"] = jnp.pad(b, (0, cp - cout)).reshape(cp, 1).astype(jnp.float32)
        prepared.append(d)
    return prepared


class PallasDiscriminator:
    def __init__(self, nc, ndf, num_classes, embedding_dim, key, tile_m=512):
        # num_classes / embedding_dim are constructor args of the PyTorch module but
        # unused in its forward pass.
        del num_classes, embedding_dim
        ks = jax.random.split(key, 5)

        def w(k, co, ci):
            return 0.02 * jax.random.normal(k, (co, ci, 4, 4), jnp.float32)

        self.params = {
            "w1": w(ks[0], ndf, 2 * nc),
            "w2": w(ks[1], ndf * 2, ndf),
            "w3": w(ks[2], ndf * 4, ndf * 2),
            "w4": w(ks[3], ndf * 8, ndf * 4),
            "w5": w(ks[4], 1, ndf * 8),
            # PyTorch BatchNorm2d default init: weight=1, bias=0
            "g2": jnp.ones((ndf * 2,), jnp.float32), "b2": jnp.zeros((ndf * 2,), jnp.float32),
            "g3": jnp.ones((ndf * 4,), jnp.float32), "b3": jnp.zeros((ndf * 4,), jnp.float32),
            "g4": jnp.ones((ndf * 8,), jnp.float32), "b4": jnp.zeros((ndf * 8,), jnp.float32),
        }
        self.cfgs = _make_cfgs(nc, ndf)
        self.weights = _prepare_weights(self.params, self.cfgs)
        self._fwd = jax.jit(functools.partial(_forward, cfgs=self.cfgs, tile_m=tile_m))

    def __call__(self, img, labels):
        return self._fwd(self.weights, img, labels)


# ------------------------- pure-JAX reference check --------------------------

def _ref_forward(params, img, labels):
    lab = jnp.repeat(labels, 2, axis=1)
    lab = jnp.pad(lab, ((0, 0), (0, 16)))
    lab = jnp.broadcast_to(lab[:, None, None, :], img.shape)
    x = jnp.concatenate([img, lab], axis=1)

    def conv(h, w, stride, pad):
        return jax.lax.conv_general_dilated(
            h, w, (stride, stride), [(pad, pad), (pad, pad)],
            dimension_numbers=("NCHW", "OIHW", "NCHW"),
            precision=jax.lax.Precision.HIGHEST)

    def bn(h, g, b):
        mean = jnp.mean(h, axis=(0, 2, 3), keepdims=True)
        var = jnp.mean((h - mean) ** 2, axis=(0, 2, 3), keepdims=True)
        return ((h - mean) * jax.lax.rsqrt(var + _BN_EPS) * g.reshape(1, -1, 1, 1)
                + b.reshape(1, -1, 1, 1))

    def lrelu(h):
        return jnp.where(h >= 0, h, 0.2 * h)

    h = lrelu(conv(x, params["w1"], 2, 1))
    h = lrelu(bn(conv(h, params["w2"], 2, 1), params["g2"], params["b2"]))
    h = lrelu(bn(conv(h, params["w3"], 2, 1), params["g3"], params["b3"]))
    h = lrelu(bn(conv(h, params["w4"], 2, 1), params["g4"], params["b4"]))
    h = conv(h, params["w5"], 1, 0)
    return jax.nn.sigmoid(h)


if __name__ == "__main__":
    key = jax.random.PRNGKey(0)
    k_img, k_lab, k_param = jax.random.split(key, 3)

    # DCGAN-style shapes: spatial must be 64 so the final 4x4 valid conv sees a 4x4
    # feature map; label width must satisfy 2*L + 16 == W (expand semantics).
    B, nc, ndf = 2, 1, 8
    H = W = 64
    L = (W - 16) // 2                                     # 24

    img = jax.random.normal(k_img, (B, nc, H, W), jnp.float32)
    labels = jax.random.normal(k_lab, (B, L), jnp.float32)

    # tile_m=256 so layer 1 runs the tiled GEMM path (8 tiles), layer 2 runs the
    # two-pass tiled-BN path (2 tiles), and layers 3-5 run the single-tile fused
    # kernels — all three kernel variants are exercised at these small shapes.
    disc = PallasDiscriminator(nc=nc, ndf=ndf, num_classes=10, embedding_dim=L,
                               key=k_param, tile_m=256)

    out = jax.block_until_ready(disc(img, labels))
    assert out.shape == (B, 1, 1, 1), out.shape

    ref = jax.block_until_ready(_ref_forward(disc.params, img, labels))
    max_diff = float(np.max(np.abs(np.asarray(out) - np.asarray(ref))))
    assert np.allclose(np.asarray(out), np.asarray(ref), rtol=2e-2, atol=2e-2), max_diff

    print("KERNEL_OK")
</pallas_src>

<mosaic_0001>
module attributes {stable_mosaic.version = 11 : i64} {
  func.func @_gemm_act_kernel(%arg0: i32, %arg1: memref<8x32xbf16, #tpu.memory_space<vmem>>, %arg2: memref<32x256xbf16, #tpu.memory_space<vmem>>, %arg3: memref<8x256xbf16, #tpu.memory_space<vmem>>) attributes {dimension_semantics = [#tpu.dimension_semantics<parallel>], iteration_bounds = array<i64: 8>, scalar_prefetch = 0 : i64, scratch_operands = 0 : i64, tpu.core_type = #tpu.core_type<tc>, window_params = [{pipeline_mode = #tpu.pipeline_mode<synchronous>, transform_indices = @transform_0, window_bounds = array<i64: 8, 32>}, {transform_indices = @transform_1, window_bounds = array<i64: 32, 256>}, {transform_indices = @transform_2, window_bounds = array<i64: 8, 256>}]} {
    %c0 = arith.constant 0 : index
    %c0_0 = arith.constant 0 : index
    %0 = vector.load %arg1[%c0, %c0_0] : memref<8x32xbf16, #tpu.memory_space<vmem>>, vector<8x32xbf16>
    %c0_1 = arith.constant 0 : index
    %c0_2 = arith.constant 0 : index
    %1 = vector.load %arg2[%c0_1, %c0_2] : memref<32x256xbf16, #tpu.memory_space<vmem>>, vector<32x256xbf16>
    %cst = arith.constant dense<0.000000e+00> : vector<8x256xf32>
    %2 = tpu.matmul %0, %1, %cst {dimension_numbers = #tpu.dot_dimension_numbers<[1], [0], [0], [1], [0, 0, 1, 1], [], []>} : vector<8x32xbf16>, vector<32x256xbf16>, vector<8x256xf32> -> vector<8x256xf32>
    %cst_3 = arith.constant 0.000000e+00 : f32
    %3 = vector.broadcast %cst_3 : f32 to vector<8x256xf32>
    %4 = arith.cmpf oge, %2, %3 : vector<8x256xf32>
    %cst_4 = arith.constant 2.000000e-01 : f32
    %5 = vector.broadcast %cst_4 : f32 to vector<8x256xf32>
    %6 = arith.mulf %5, %2 : vector<8x256xf32>
    %7 = arith.select %4, %2, %6 : vector<8x256xi1>, vector<8x256xf32>
    %8 = arith.truncf %7 : vector<8x256xf32> to vector<8x256xbf16>
    %c0_5 = arith.constant 0 : index
    %c0_6 = arith.constant 0 : index
    %9 = vector.load %arg3[%c0_5, %c0_6] : memref<8x256xbf16, #tpu.memory_space<vmem>>, vector<8x256xbf16>
    tpu.vector_store %arg3[%c0_5, %c0_6], %8 {strides = array<i32>} : memref<8x256xbf16, #tpu.memory_space<vmem>>, vector<8x256xbf16>,
    return
  }
  func.func @transform_0(%arg0: i32) -> (i32, i32) {
    %c0_i32 = arith.constant 0 : i32
    %c0_i32_0 = arith.constant 0 : i32
    %c0_i32_1 = arith.constant 0 : i32
    return %c0_i32, %c0_i32_0 : i32, i32
  }
  func.func @transform_1(%arg0: i32) -> (i32, i32) {
    %c0_i32 = arith.constant 0 : i32
    %c0_i32_0 = arith.constant 0 : i32
    return %c0_i32, %arg0 : i32, i32
  }
  func.func @transform_2(%arg0: i32) -> (i32, i32) {
    %c0_i32 = arith.constant 0 : i32
    %c0_i32_0 = arith.constant 0 : i32
    return %c0_i32, %arg0 : i32, i32
  }
}

module attributes {stable_mosaic.version = 11 : i64} {
  func.func @_gemm_stats_kernel(%arg0: i32, %arg1: memref<16x128xbf16, #tpu.memory_space<vmem>>, %arg2: memref<128x256xbf16, #tpu.memory_space<vmem>>, %arg3: memref<16x256xf32, #tpu.memory_space<vmem>>, %arg4: memref<1x16x1xf32, #tpu.memory_space<vmem>>, %arg5: memref<1x16x1xf32, #tpu.memory_space<vmem>>) attributes {dimension_semantics = [#tpu.dimension_semantics<parallel>], iteration_bounds = array<i64: 2>, scalar_prefetch = 0 : i64, scratch_operands = 0 : i64, tpu.core_type = #tpu.core_type<tc>, window_params = [{pipeline_mode = #tpu.pipeline_mode<synchronous>, transform_indices = @transform_0, window_bounds = array<i64: 16, 128>}, {transform_indices = @transform_1, window_bounds = array<i64: 128, 256>}, {transform_indices = @transform_2, window_bounds = array<i64: 16, 256>}, {transform_indices = @transform_3, window_bounds = array<i64: 1, 16, 1>}, {transform_indices = @transform_4, window_bounds = array<i64: 1, 16, 1>}]} {
    %c0 = arith.constant 0 : index
    %c0_0 = arith.constant 0 : index
    %0 = vector.load %arg1[%c0, %c0_0] : memref<16x128xbf16, #tpu.memory_space<vmem>>, vector<16x128xbf16>
    %c0_1 = arith.constant 0 : index
    %c0_2 = arith.constant 0 : index
    %1 = vector.load %arg2[%c0_1, %c0_2] : memref<128x256xbf16, #tpu.memory_space<vmem>>, vector<128x256xbf16>
    %cst = arith.constant dense<0.000000e+00> : vector<16x256xf32>
    %2 = tpu.matmul %0, %1, %cst {dimension_numbers = #tpu.dot_dimension_numbers<[1], [0], [0], [1], [0, 0, 1, 1], [], []>} : vector<16x128xbf16>, vector<128x256xbf16>, vector<16x256xf32> -> vector<16x256xf32>
    %c0_3 = arith.constant 0 : index
    %c0_4 = arith.constant 0 : index
    %3 = vector.load %arg3[%c0_3, %c0_4] : memref<16x256xf32, #tpu.memory_space<vmem>>, vector<16x256xf32>
    tpu.vector_store %arg3[%c0_3, %c0_4], %2 {strides = array<i32>} : memref<16x256xf32, #tpu.memory_space<vmem>>, vector<16x256xf32>,
    %cst_5 = arith.constant dense<0.000000e+00> : vector<16xf32>
    %4 = vector.multi_reduction <add>, %2, %cst_5 [1] : vector<16x256xf32> to vector<16xf32>
    %5 = vector.shape_cast %4 : vector<16xf32> to vector<16x1xf32>
    %c0_6 = arith.constant 0 : index
    %c0_7 = arith.constant 0 : index
    %c0_8 = arith.constant 0 : index
    %6 = vector.load %arg4[%c0_6, %c0_7, %c0_8] : memref<1x16x1xf32, #tpu.memory_space<vmem>>, vector<1x16x1xf32>
    %7 = vector.shape_cast %6 : vector<1x16x1xf32> to vector<16x1xf32>
    %8 = vector.shape_cast %5 : vector<16x1xf32> to vector<1x16x1xf32>
    tpu.vector_store %arg4[%c0_6, %c0_7, %c0_8], %8 {strides = array<i32>} : memref<1x16x1xf32, #tpu.memory_space<vmem>>, vector<1x16x1xf32>,
    %9 = arith.mulf %2, %2 : vector<16x256xf32>
    %cst_9 = arith.constant dense<0.000000e+00> : vector<16xf32>
    %10 = vector.multi_reduction <add>, %9, %cst_9 [1] : vector<16x256xf32> to vector<16xf32>
    %11 = vector.shape_cast %10 : vector<16xf32> to vector<16x1xf32>
    %c0_10 = arith.constant 0 : index
    %c0_11 = arith.constant 0 : index
    %c0_12 = arith.constant 0 : index
    %12 = vector.load %arg5[%c0_10, %c0_11, %c0_12] : memref<1x16x1xf32, #tpu.memory_space<vmem>>, vector<1x16x1xf32>
    %13 = vector.shape_cast %12 : vector<1x16x1xf32> to vector<16x1xf32>
    %14 = vector.shape_cast %11 : vector<16x1xf32> to vector<1x16x1xf32>
    tpu.vector_store %arg5[%c0_10, %c0_11, %c0_12], %14 {strides = array<i32>} : memref<1x16x1xf32, #tpu.memory_space<vmem>>, vector<1x16x1xf32>,
    return
  }
  func.func @transform_0(%arg0: i32) -> (i32, i32) {
    %c0_i32 = arith.constant 0 : i32
    %c0_i32_0 = arith.constant 0 : i32
    %c0_i32_1 = arith.constant 0 : i32
    return %c0_i32, %c0_i32_0 : i32, i32
  }
  func.func @transform_1(%arg0: i32) -> (i32, i32) {
    %c0_i32 = arith.constant 0 : i32
    %c0_i32_0 = arith.constant 0 : i32
    return %c0_i32, %arg0 : i32, i32
  }
  func.func @transform_2(%arg0: i32) -> (i32, i32) {
    %c0_i32 = arith.constant 0 : i32
    %c0_i32_0 = arith.constant 0 : i32
    return %c0_i32, %arg0 : i32, i32
  }
  func.func @transform_3(%arg0: i32) -> (i32, i32, i32) {
    %c0_i32 = arith.constant 0 : i32
    %c0_i32_0 = arith.constant 0 : i32
    %c0_i32_1 = arith.constant 0 : i32
    return %arg0, %c0_i32, %c0_i32_0 : i32, i32, i32
  }
  func.func @transform_4(%arg0: i32) -> (i32, i32, i32) {
    %c0_i32 = arith.constant 0 : i32
    %c0_i32_0 = arith.constant 0 : i32
    %c0_i32_1 = arith.constant 0 : i32
    return %arg0, %c0_i32, %c0_i32_0 : i32, i32, i32
  }
}

module attributes {stable_mosaic.version = 11 : i64} {
  func.func @_bn_act_kernel(%arg0: i32, %arg1: memref<16x1xf32, #tpu.memory_space<vmem>>, %arg2: memref<16x1xf32, #tpu.memory_space<vmem>>, %arg3: memref<16x256xf32, #tpu.memory_space<vmem>>, %arg4: memref<16x256xbf16, #tpu.memory_space<vmem>>) attributes {dimension_semantics = [#tpu.dimension_semantics<parallel>], iteration_bounds = array<i64: 2>, scalar_prefetch = 0 : i64, scratch_operands = 0 : i64, tpu.core_type = #tpu.core_type<tc>, window_params = [{pipeline_mode = #tpu.pipeline_mode<synchronous>, transform_indices = @transform_0, window_bounds = array<i64: 16, 1>}, {pipeline_mode = #tpu.pipeline_mode<synchronous>, transform_indices = @transform_1, window_bounds = array<i64: 16, 1>}, {transform_indices = @transform_2, window_bounds = array<i64: 16, 256>}, {transform_indices = @transform_3, window_bounds = array<i64: 16, 256>}]} {
    %c0 = arith.constant 0 : index
    %c0_0 = arith.constant 0 : index
    %0 = vector.load %arg3[%c0, %c0_0] : memref<16x256xf32, #tpu.memory_space<vmem>>, vector<16x256xf32>
    %c0_1 = arith.constant 0 : index
    %c0_2 = arith.constant 0 : index
    %1 = vector.load %arg1[%c0_1, %c0_2] : memref<16x1xf32, #tpu.memory_space<vmem>>, vector<16x1xf32>
    %2 = vector.broadcast %1 : vector<16x1xf32> to vector<16x256xf32>
    %3 = arith.mulf %0, %2 : vector<16x256xf32>
    %c0_3 = arith.constant 0 : index
    %c0_4 = arith.constant 0 : index
    %4 = vector.load %arg2[%c0_3, %c0_4] : memref<16x1xf32, #tpu.memory_space<vmem>>, vector<16x1xf32>
    %5 = vector.broadcast %4 : vector<16x1xf32> to vector<16x256xf32>
    %6 = arith.addf %3, %5 : vector<16x256xf32>
    %cst = arith.constant 0.000000e+00 : f32
    %7 = vector.broadcast %cst : f32 to vector<16x256xf32>
    %8 = arith.cmpf oge, %6, %7 : vector<16x256xf32>
    %cst_5 = arith.constant 2.000000e-01 : f32
    %9 = vector.broadcast %cst_5 : f32 to vector<16x256xf32>
    %10 = arith.mulf %9, %6 : vector<16x256xf32>
    %11 = arith.select %8, %6, %10 : vector<16x256xi1>, vector<16x256xf32>
    %12 = arith.truncf %11 : vector<16x256xf32> to vector<16x256xbf16>
    %c0_6 = arith.constant 0 : index
    %c0_7 = arith.constant 0 : index
    %13 = vector.load %arg4[%c0_6, %c0_7] : memref<16x256xbf16, #tpu.memory_space<vmem>>, vector<16x256xbf16>
    tpu.vector_store %arg4[%c0_6, %c0_7], %12 {strides = array<i32>} : memref<16x256xbf16, #tpu.memory_space<vmem>>, vector<16x256xbf16>,
    return
  }
  func.func @transform_0(%arg0: i32) -> (i32, i32) {
    %c0_i32 = arith.constant 0 : i32
    %c0_i32_0 = arith.constant 0 : i32
    %c0_i32_1 = arith.constant 0 : i32
    return %c0_i32, %c0_i32_0 : i32, i32
  }
  func.func @transform_1(%arg0: i32) -> (i32, i32) {
    %c0_i32 = arith.constant 0 : i32
    %c0_i32_0 = arith.constant 0 : i32
    %c0_i32_1 = arith.constant 0 : i32
    return %c0_i32, %c0_i32_0 : i32, i32
  }
  func.func @transform_2(%arg0: i32) -> (i32, i32) {
    %c0_i32 = arith.constant 0 : i32
    %c0_i32_0 = arith.constant 0 : i32
    return %c0_i32, %arg0 : i32, i32
  }
  func.func @transform_3(%arg0: i32) -> (i32, i32) {
    %c0_i32 = arith.constant 0 : i32
    %c0_i32_0 = arith.constant 0 : i32
    return %c0_i32, %arg0 : i32, i32
  }
}

module attributes {stable_mosaic.version = 11 : i64} {
  func.func @_gemm_bn_act_kernel(%arg0: i32, %arg1: memref<32x256xbf16, #tpu.memory_space<vmem>>, %arg2: memref<256x128xbf16, #tpu.memory_space<vmem>>, %arg3: memref<32x1xf32, #tpu.memory_space<vmem>>, %arg4: memref<32x1xf32, #tpu.memory_space<vmem>>, %arg5: memref<32x128xbf16, #tpu.memory_space<vmem>>) attributes {dimension_semantics = [#tpu.dimension_semantics<arbitrary>], iteration_bounds = array<i64: 1>, scalar_prefetch = 0 : i64, scratch_operands = 0 : i64, tpu.core_type = #tpu.core_type<tc>, window_params = [{pipeline_mode = #tpu.pipeline_mode<synchronous>, transform_indices = @transform_0, window_bounds = array<i64: 32, 256>}, {pipeline_mode = #tpu.pipeline_mode<synchronous>, transform_indices = @transform_1, window_bounds = array<i64: 256, 128>}, {pipeline_mode = #tpu.pipeline_mode<synchronous>, transform_indices = @transform_2, window_bounds = array<i64: 32, 1>}, {pipeline_mode = #tpu.pipeline_mode<synchronous>, transform_indices = @transform_3, window_bounds = array<i64: 32, 1>}, {pipeline_mode = #tpu.pipeline_mode<synchronous>, transform_indices = @transform_4, window_bounds = array<i64: 32, 128>}]} {
    %c0 = arith.constant 0 : index
    %c0_0 = arith.constant 0 : index
    %0 = vector.load %arg1[%c0, %c0_0] : memref<32x256xbf16, #tpu.memory_space<vmem>>, vector<32x256xbf16>
    %c0_1 = arith.constant 0 : index
    %c0_2 = arith.constant 0 : index
    %1 = vector.load %arg2[%c0_1, %c0_2] : memref<256x128xbf16, #tpu.memory_space<vmem>>, vector<256x128xbf16>
    %cst = arith.constant dense<0.000000e+00> : vector<32x128xf32>
    %2 = tpu.matmul %0, %1, %cst {dimension_numbers = #tpu.dot_dimension_numbers<[1], [0], [0], [1], [0, 0, 1, 1], [], []>} : vector<32x256xbf16>, vector<256x128xbf16>, vector<32x128xf32> -> vector<32x128xf32>
    %cst_3 = arith.constant dense<0.000000e+00> : vector<32xf32>
    %3 = vector.multi_reduction <add>, %2, %cst_3 [1] : vector<32x128xf32> to vector<32xf32>
    %4 = vector.shape_cast %3 : vector<32xf32> to vector<32x1xf32>
    %cst_4 = arith.constant 1.280000e+02 : f32
    %5 = vector.broadcast %cst_4 : f32 to vector<32x1xf32>
    %6 = arith.divf %4, %5 : vector<32x1xf32>
    %7 = arith.mulf %2, %2 : vector<32x128xf32>
    %cst_5 = arith.constant dense<0.000000e+00> : vector<32xf32>
    %8 = vector.multi_reduction <add>, %7, %cst_5 [1] : vector<32x128xf32> to vector<32xf32>
    %9 = vector.shape_cast %8 : vector<32xf32> to vector<32x1xf32>
    %cst_6 = arith.constant 1.280000e+02 : f32
    %10 = vector.broadcast %cst_6 : f32 to vector<32x1xf32>
    %11 = arith.divf %9, %10 : vector<32x1xf32>
    %12 = arith.mulf %6, %6 : vector<32x1xf32>
    %13 = arith.subf %11, %12 : vector<32x1xf32>
    %cst_7 = arith.constant 0.000000e+00 : f32
    %14 = vector.broadcast %cst_7 : f32 to vector<32x1xf32>
    %15 = arith.maximumf %13, %14 : vector<32x1xf32>
    %cst_8 = arith.constant 9.99999974E-6 : f32
    %16 = vector.broadcast %cst_8 : f32 to vector<32x1xf32>
    %17 = arith.addf %15, %16 : vector<32x1xf32>
    %18 = math.rsqrt %17 : vector<32x1xf32>
    %c0_9 = arith.constant 0 : index
    %c0_10 = arith.constant 0 : index
    %19 = vector.load %arg3[%c0_9, %c0_10] : memref<32x1xf32, #tpu.memory_space<vmem>>, vector<32x1xf32>
    %20 = arith.mulf %18, %19 : vector<32x1xf32>
    %21 = vector.broadcast %6 : vector<32x1xf32> to vector<32x128xf32>
    %22 = arith.subf %2, %21 : vector<32x128xf32>
    %23 = vector.broadcast %20 : vector<32x1xf32> to vector<32x128xf32>
    %24 = arith.mulf %22, %23 : vector<32x128xf32>
    %c0_11 = arith.constant 0 : index
    %c0_12 = arith.constant 0 : index
    %25 = vector.load %arg4[%c0_11, %c0_12] : memref<32x1xf32, #tpu.memory_space<vmem>>, vector<32x1xf32>
    %26 = vector.broadcast %25 : vector<32x1xf32> to vector<32x128xf32>
    %27 = arith.addf %24, %26 : vector<32x128xf32>
    %cst_13 = arith.constant 0.000000e+00 : f32
    %28 = vector.broadcast %cst_13 : f32 to vector<32x128xf32>
    %29 = arith.cmpf oge, %27, %28 : vector<32x128xf32>
    %cst_14 = arith.constant 2.000000e-01 : f32
    %30 = vector.broadcast %cst_14 : f32 to vector<32x128xf32>
    %31 = arith.mulf %30, %27 : vector<32x128xf32>
    %32 = arith.select %29, %27, %31 : vector<32x128xi1>, vector<32x128xf32>
    %33 = arith.truncf %32 : vector<32x128xf32> to vector<32x128xbf16>
    %c0_15 = arith.constant 0 : index
    %c0_16 = arith.constant 0 : index
    %34 = vector.load %arg5[%c0_15, %c0_16] : memref<32x128xbf16, #tpu.memory_space<vmem>>, vector<32x128xbf16>
    tpu.vector_store %arg5[%c0_15, %c0_16], %33 {strides = array<i32>} : memref<32x128xbf16, #tpu.memory_space<vmem>>, vector<32x128xbf16>,
    return
  }
  func.func @transform_0(%arg0: i32) -> (i32, i32) {
    %c0_i32 = arith.constant 0 : i32
    %c0_i32_0 = arith.constant 0 : i32
    %c0_i32_1 = arith.constant 0 : i32
    return %c0_i32, %c0_i32_0 : i32, i32
  }
  func.func @transform_1(%arg0: i32) -> (i32, i32) {
    %c0_i32 = arith.constant 0 : i32
    %c0_i32_0 = arith.constant 0 : i32
    %c0_i32_1 = arith.constant 0 : i32
    return %c0_i32, %c0_i32_0 : i32, i32
  }
  func.func @transform_2(%arg0: i32) -> (i32, i32) {
    %c0_i32 = arith.constant 0 : i32
    %c0_i32_0 = arith.constant 0 : i32
    %c0_i32_1 = arith.constant 0 : i32
    return %c0_i32, %c0_i32_0 : i32, i32
  }
  func.func @transform_3(%arg0: i32) -> (i32, i32) {
    %c0_i32 = arith.constant 0 : i32
    %c0_i32_0 = arith.constant 0 : i32
    %c0_i32_1 = arith.constant 0 : i32
    return %c0_i32, %c0_i32_0 : i32, i32
  }
  func.func @transform_4(%arg0: i32) -> (i32, i32) {
    %c0_i32 = arith.constant 0 : i32
    %c0_i32_0 = arith.constant 0 : i32
    %c0_i32_1 = arith.constant 0 : i32
    return %c0_i32, %c0_i32_0 : i32, i32
  }
}

module attributes {stable_mosaic.version = 11 : i64} {
  func.func @_gemm_bn_act_kernel(%arg0: i32, %arg1: memref<64x512xbf16, #tpu.memory_space<vmem>>, %arg2: memref<512x32xbf16, #tpu.memory_space<vmem>>, %arg3: memref<64x1xf32, #tpu.memory_space<vmem>>, %arg4: memref<64x1xf32, #tpu.memory_space<vmem>>, %arg5: memref<64x32xbf16, #tpu.memory_space<vmem>>) attributes {dimension_semantics = [#tpu.dimension_semantics<arbitrary>], iteration_bounds = array<i64: 1>, scalar_prefetch = 0 : i64, scratch_operands = 0 : i64, tpu.core_type = #tpu.core_type<tc>, window_params = [{pipeline_mode = #tpu.pipeline_mode<synchronous>, transform_indices = @transform_0, window_bounds = array<i64: 64, 512>}, {pipeline_mode = #tpu.pipeline_mode<synchronous>, transform_indices = @transform_1, window_bounds = array<i64: 512, 32>}, {pipeline_mode = #tpu.pipeline_mode<synchronous>, transform_indices = @transform_2, window_bounds = array<i64: 64, 1>}, {pipeline_mode = #tpu.pipeline_mode<synchronous>, transform_indices = @transform_3, window_bounds = array<i64: 64, 1>}, {pipeline_mode = #tpu.pipeline_mode<synchronous>, transform_indices = @transform_4, window_bounds = array<i64: 64, 32>}]} {
    %c0 = arith.constant 0 : index
    %c0_0 = arith.constant 0 : index
    %0 = vector.load %arg1[%c0, %c0_0] : memref<64x512xbf16, #tpu.memory_space<vmem>>, vector<64x512xbf16>
    %c0_1 = arith.constant 0 : index
    %c0_2 = arith.constant 0 : index
    %1 = vector.load %arg2[%c0_1, %c0_2] : memref<512x32xbf16, #tpu.memory_space<vmem>>, vector<512x32xbf16>
    %cst = arith.constant dense<0.000000e+00> : vector<64x32xf32>
    %2 = tpu.matmul %0, %1, %cst {dimension_numbers = #tpu.dot_dimension_numbers<[1], [0], [0], [1], [0, 0, 1, 1], [], []>} : vector<64x512xbf16>, vector<512x32xbf16>, vector<64x32xf32> -> vector<64x32xf32>
    %cst_3 = arith.constant dense<0.000000e+00> : vector<64xf32>
    %3 = vector.multi_reduction <add>, %2, %cst_3 [1] : vector<64x32xf32> to vector<64xf32>
    %4 = vector.shape_cast %3 : vector<64xf32> to vector<64x1xf32>
    %cst_4 = arith.constant 3.200000e+01 : f32
    %5 = vector.broadcast %cst_4 : f32 to vector<64x1xf32>
    %6 = arith.divf %4, %5 : vector<64x1xf32>
    %7 = arith.mulf %2, %2 : vector<64x32xf32>
    %cst_5 = arith.constant dense<0.000000e+00> : vector<64xf32>
    %8 = vector.multi_reduction <add>, %7, %cst_5 [1] : vector<64x32xf32> to vector<64xf32>
    %9 = vector.shape_cast %8 : vector<64xf32> to vector<64x1xf32>
    %cst_6 = arith.constant 3.200000e+01 : f32
    %10 = vector.broadcast %cst_6 : f32 to vector<64x1xf32>
    %11 = arith.divf %9, %10 : vector<64x1xf32>
    %12 = arith.mulf %6, %6 : vector<64x1xf32>
    %13 = arith.subf %11, %12 : vector<64x1xf32>
    %cst_7 = arith.constant 0.000000e+00 : f32
    %14 = vector.broadcast %cst_7 : f32 to vector<64x1xf32>
    %15 = arith.maximumf %13, %14 : vector<64x1xf32>
    %cst_8 = arith.constant 9.99999974E-6 : f32
    %16 = vector.broadcast %cst_8 : f32 to vector<64x1xf32>
    %17 = arith.addf %15, %16 : vector<64x1xf32>
    %18 = math.rsqrt %17 : vector<64x1xf32>
    %c0_9 = arith.constant 0 : index
    %c0_10 = arith.constant 0 : index
    %19 = vector.load %arg3[%c0_9, %c0_10] : memref<64x1xf32, #tpu.memory_space<vmem>>, vector<64x1xf32>
    %20 = arith.mulf %18, %19 : vector<64x1xf32>
    %21 = vector.broadcast %6 : vector<64x1xf32> to vector<64x32xf32>
    %22 = arith.subf %2, %21 : vector<64x32xf32>
    %23 = vector.broadcast %20 : vector<64x1xf32> to vector<64x32xf32>
    %24 = arith.mulf %22, %23 : vector<64x32xf32>
    %c0_11 = arith.constant 0 : index
    %c0_12 = arith.constant 0 : index
    %25 = vector.load %arg4[%c0_11, %c0_12] : memref<64x1xf32, #tpu.memory_space<vmem>>, vector<64x1xf32>
    %26 = vector.broadcast %25 : vector<64x1xf32> to vector<64x32xf32>
    %27 = arith.addf %24, %26 : vector<64x32xf32>
    %cst_13 = arith.constant 0.000000e+00 : f32
    %28 = vector.broadcast %cst_13 : f32 to vector<64x32xf32>
    %29 = arith.cmpf oge, %27, %28 : vector<64x32xf32>
    %cst_14 = arith.constant 2.000000e-01 : f32
    %30 = vector.broadcast %cst_14 : f32 to vector<64x32xf32>
    %31 = arith.mulf %30, %27 : vector<64x32xf32>
    %32 = arith.select %29, %27, %31 : vector<64x32xi1>, vector<64x32xf32>
    %33 = arith.truncf %32 : vector<64x32xf32> to vector<64x32xbf16>
    %c0_15 = arith.constant 0 : index
    %c0_16 = arith.constant 0 : index
    %34 = vector.load %arg5[%c0_15, %c0_16] : memref<64x32xbf16, #tpu.memory_space<vmem>>, vector<64x32xbf16>
    tpu.vector_store %arg5[%c0_15, %c0_16], %33 {strides = array<i32>} : memref<64x32xbf16, #tpu.memory_space<vmem>>, vector<64x32xbf16>,
    return
  }
  func.func @transform_0(%arg0: i32) -> (i32, i32) {
    %c0_i32 = arith.constant 0 : i32
    %c0_i32_0 = arith.constant 0 : i32
    %c0_i32_1 = arith.constant 0 : i32
    return %c0_i32, %c0_i32_0 : i32, i32
  }
  func.func @transform_1(%arg0: i32) -> (i32, i32) {
    %c0_i32 = arith.constant 0 : i32
    %c0_i32_0 = arith.constant 0 : i32
    %c0_i32_1 = arith.constant 0 : i32
    return %c0_i32, %c0_i32_0 : i32, i32
  }
  func.func @transform_2(%arg0: i32) -> (i32, i32) {
    %c0_i32 = arith.constant 0 : i32
    %c0_i32_0 = arith.constant 0 : i32
    %c0_i32_1 = arith.constant 0 : i32
    return %c0_i32, %c0_i32_0 : i32, i32
  }
  func.func @transform_3(%arg0: i32) -> (i32, i32) {
    %c0_i32 = arith.constant 0 : i32
    %c0_i32_0 = arith.constant 0 : i32
    %c0_i32_1 = arith.constant 0 : i32
    return %c0_i32, %c0_i32_0 : i32, i32
  }
  func.func @transform_4(%arg0: i32) -> (i32, i32) {
    %c0_i32 = arith.constant 0 : i32
    %c0_i32_0 = arith.constant 0 : i32
    %c0_i32_1 = arith.constant 0 : i32
    return %c0_i32, %c0_i32_0 : i32, i32
  }
}

module attributes {stable_mosaic.version = 11 : i64} {
  func.func @_gemm_act_kernel(%arg0: i32, %arg1: memref<8x1024xbf16, #tpu.memory_space<vmem>>, %arg2: memref<1024x2xbf16, #tpu.memory_space<vmem>>, %arg3: memref<8x2xf32, #tpu.memory_space<vmem>>) attributes {dimension_semantics = [#tpu.dimension_semantics<parallel>], iteration_bounds = array<i64: 1>, scalar_prefetch = 0 : i64, scratch_operands = 0 : i64, tpu.core_type = #tpu.core_type<tc>, window_params = [{pipeline_mode = #tpu.pipeline_mode<synchronous>, transform_indices = @transform_0, window_bounds = array<i64: 8, 1024>}, {transform_indices = @transform_1, window_bounds = array<i64: 1024, 2>}, {transform_indices = @transform_2, window_bounds = array<i64: 8, 2>}]} {
    %c0 = arith.constant 0 : index
    %c0_0 = arith.constant 0 : index
    %0 = vector.load %arg1[%c0, %c0_0] : memref<8x1024xbf16, #tpu.memory_space<vmem>>, vector<8x1024xbf16>
    %c0_1 = arith.constant 0 : index
    %c0_2 = arith.constant 0 : index
    %1 = vector.load %arg2[%c0_1, %c0_2] : memref<1024x2xbf16, #tpu.memory_space<vmem>>, vector<1024x2xbf16>
    %cst = arith.constant dense<0.000000e+00> : vector<8x2xf32>
    %2 = tpu.matmul %0, %1, %cst {dimension_numbers = #tpu.dot_dimension_numbers<[1], [0], [0], [1], [0, 0, 1, 1], [], []>} : vector<8x1024xbf16>, vector<1024x2xbf16>, vector<8x2xf32> -> vector<8x2xf32>
    %cst_3 = arith.constant 0.000000e+00 : f32
    %3 = vector.broadcast %cst_3 : f32 to vector<8x2xf32>
    %4 = arith.subf %3, %2 : vector<8x2xf32>
    %5 = math.exp %4 : vector<8x2xf32>
    %cst_4 = arith.constant 1.000000e+00 : f32
    %6 = vector.broadcast %cst_4 : f32 to vector<8x2xf32>
    %7 = arith.addf %6, %5 : vector<8x2xf32>
    %8 = tpu.reciprocal %7 {approx = true} : vector<8x2xf32> -> vector<8x2xf32>
    %c0_5 = arith.constant 0 : index
    %c0_6 = arith.constant 0 : index
    %9 = vector.load %arg3[%c0_5, %c0_6] : memref<8x2xf32, #tpu.memory_space<vmem>>, vector<8x2xf32>
    tpu.vector_store %arg3[%c0_5, %c0_6], %8 {strides = array<i32>} : memref<8x2xf32, #tpu.memory_space<vmem>>, vector<8x2xf32>,
    return
  }
  func.func @transform_0(%arg0: i32) -> (i32, i32) {
    %c0_i32 = arith.constant 0 : i32
    %c0_i32_0 = arith.constant 0 : i32
    %c0_i32_1 = arith.constant 0 : i32
    return %c0_i32, %c0_i32_0 : i32, i32
  }
  func.func @transform_1(%arg0: i32) -> (i32, i32) {
    %c0_i32 = arith.constant 0 : i32
    %c0_i32_0 = arith.constant 0 : i32
    return %c0_i32, %arg0 : i32, i32
  }
  func.func @transform_2(%arg0: i32) -> (i32, i32) {
    %c0_i32 = arith.constant 0 : i32
    %c0_i32_0 = arith.constant 0 : i32
    return %c0_i32, %arg0 : i32, i32
  }
}

</mosaic_0001>

<llo_original>
// kernel: _forward.6
$region0: #{_forward.6}
  #allocation0 [shape = 'u32[]', space=smem, size = 0x4, offset = 0x4, fixed_abs, tag = 'smem constant byte address 0x4 - core index']
  #allocation1 [shape = 'u32[144,128]{1,0:T(1,128)}', space=vmem, size = 0x12000, scoped, tag = 'internal scratch']
  %s0 = inlined_call_operand.vmem [shape: bf16[8,32], index: 0, kind: input, shape index: {}]
  %s1 = inlined_call_operand.vmem [shape: bf16[32,2048], index: 1, kind: input, shape index: {}]
  %s2 = inlined_call_operand.vmem [shape: bf16[8,2048], index: 2, kind: output, shape index: {}]
  %s3 = sld [smem:[#allocation0]]
  $region79: #{_forward.6} parent=0
    _
  %s5 = ssub.s32 1, %s3
  %s6 = scalar_select 0, %s5, %s3
  $region1: #{_forward.6} parent=0
    #allocation2 [shape = 'u8[32768]{0}', space=vmem, size = 0x8000, scoped, tag = 'input window, operand 1']
    loop: start=0, step=1, limit=10
    $region2: #{_forward.6} parent=1 // loop_pre_header
      _
    $region3: #{_forward.6} parent=1 // loop_header
      %s8 = sphi 0, %s12
      %p9 = scmp.ge.s32.totalorder %s8, 10
      %s16 = sphi 0, %s16
      %s18 = sphi 0, %s16
      %s19 = sphi 0, %s18
      %s33 = sphi 0, %s19
      %s39 = sphi 0, %s41
      %s42 = sphi 0, %s39
      %s43 = sphi 0, %s42
      %s59 = sphi 0, %s43
      %s65 = sphi 0, %s67
      %s68 = sphi 0, %s65
      %s69 = sphi 0, %s68
      %s85 = sphi 0, %s69
    $region4: #{_forward.6} parent=1 // loop_header_branch
      %11 = sbr.rel (%p9) target = $region8
    $region5: #{_forward.6} parent=1 // loop_body
      %s13 = ssub.s32 %s8, 1
      %s14 = ssub.s32 %s8, 2
      %s15 = sadd.s32 %s8, 1
      %s17 = sadd.s32 %s16, 1
      %p20 = scmp.eq.s32.totalorder %s8, 7
      %p21 = scmp.ne.s32.totalorder %s16, %s18
      %p22 = scmp.eq.s32.totalorder %s8, 0
      %p23 = por %p21, %p22
      %p24 = scmp.ne.s32.totalorder %s16, %s18
      %p25 = scmp.eq.s32.totalorder %s13, 7
      %p26 = por %p24, %p25
      %p27 = scmp.ne.s32.totalorder %s18, %s19
      %p28 = scmp.eq.s32.totalorder %s13, 0
      %p29 = por %p27, %p28
      %p30 = scmp.ne.s32.totalorder %s18, %s19
      %p31 = scmp.eq.s32.totalorder %s14, 7
      %p32 = por %p30, %p31
      %p34 = scmp.ne.s32.totalorder %s19, %s33
      %p35 = scmp.eq.s32.totalorder %s14, 0
      %p36 = por %p34, %p35
      %s37 = ssub.s32 %s8, %s15
      %p38 = scmp.eq.s32.totalorder %s37, 0
      %s40 = sadd.s32 %s39, 1
      %s41 = scalar_select %p38, %s39, %s40
      %p44 = pneg %p38
      %p45 = scmp.eq.s32.totalorder %s8, 7
      %p46 = por %p44, %p45
      %p47 = scmp.ne.s32.totalorder %s39, %s42
      %p48 = scmp.eq.s32.totalorder %s8, 0
      %p49 = por %p47, %p48
      %p50 = scmp.ne.s32.totalorder %s39, %s42
      %p51 = scmp.eq.s32.totalorder %s13, 7
      %p52 = por %p50, %p51
      %p53 = scmp.ne.s32.totalorder %s42, %s43
      %p54 = scmp.eq.s32.totalorder %s13, 0
      %p55 = por %p53, %p54
      %p56 = scmp.ne.s32.totalorder %s42, %s43
      %p57 = scmp.eq.s32.totalorder %s14, 7
      %p58 = por %p56, %p57
      %p60 = scmp.ne.s32.totalorder %s43, %s59
      %p61 = scmp.eq.s32.totalorder %s14, 0
      %p62 = por %p60, %p61
      %s63 = ssub.s32 %s8, %s15
      %p64 = scmp.eq.s32.totalorder %s63, 0
      %s66 = sadd.s32 %s65, 1
      %s67 = scalar_select %p64, %s65, %s66
      %p70 = pneg %p64
      %p71 = scmp.eq.s32.totalorder %s8, 7
      %p72 = por %p70, %p71
      %p73 = scmp.ne.s32.totalorder %s65, %s68
      %p74 = scmp.eq.s32.totalorder %s8, 0
      %p75 = por %p73, %p74
      %p76 = scmp.ne.s32.totalorder %s65, %s68
      %p77 = scmp.eq.s32.totalorder %s13, 7
      %p78 = por %p76, %p77
      %p79 = scmp.ne.s32.totalorder %s68, %s69
      %p80 = scmp.eq.s32.totalorder %s13, 0
      %p81 = por %p79, %p80
      %p82 = scmp.ne.s32.totalorder %s68, %s69
      %p83 = scmp.eq.s32.totalorder %s14, 7
      %p84 = por %p82, %p83
      %p86 = scmp.ne.s32.totalorder %s69, %s85
      %p87 = scmp.eq.s32.totalorder %s14, 0
      %p88 = por %p86, %p87
      %p89 = scmp.le.s32.totalorder 1, %s8
      %p90 = scmp.lt.s32.totalorder %s8, 9
      %p91 = pnand %p89, %p90
      %p92 = pneg %p91
      // Predicated region
      $region9: #{_forward.6} parent=5 // pred_check
        _
      $region10: #{_forward.6} parent=5 // pred_check_branch
        %94 = sbr.rel (%p91) target = $region12
      $region11: #{_forward.6} parent=5 // pred_region
        %s95 = ssub.s32 %s8, 1
        // Predicated region
        $region13: #{_forward.6} parent=11 // pred_check
          %p96 = pneg %p29
        $region14: #{_forward.6} parent=11 // pred_check_branch
          %98 = sbr.rel (%p96) target = $region16
        $region15: #{_forward.6} parent=11 // pred_region
          _
        $region16: #{_forward.6} parent=11 // pred_fallthru
          _
      $region12: #{_forward.6} parent=5 // pred_fallthru
        _
      %p99 = scmp.lt.s32.totalorder %s8, 8
      // Predicated region
      $region17: #{_forward.6} parent=5 // pred_check
        %p100 = pneg %p99
      $region18: #{_forward.6} parent=5 // pred_check_branch
        %102 = sbr.rel (%p100) target = $region20
      $region19: #{_forward.6} parent=5 // pred_region
        // Predicated region
        $region21: #{_forward.6} parent=19 // pred_check
          %p103 = pneg %p49
        $region22: #{_forward.6} parent=19 // pred_check_branch
          %105 = sbr.rel (%p103) target = $region24
        $region23: #{_forward.6} parent=19 // pred_region
          %s106 = sand.u32 %s39, 1
          %s107 = sand.u32 %s39, 1
          %s108 = smul.addr %s107, 32
          %s109 = scalar_lea.vmem [#allocation2], %s108
          %s110 = smul.u32 2, %s8
          %s111 = smul.addr %s110, 4
          %s112 = scalar_lea.vmem %s1, %s111
          // Predicated region
          $region25: #{_forward.6} parent=23 // pred_check
            _
          $region26: #{_forward.6} parent=23 // pred_check_branch
            %114 = sbr.rel (0) target = $region28
          $region27: #{_forward.6} parent=23 // pred_region
            // Predicated region
            $region29: #{_forward.6} parent=27 // pred_check
              _
            $region30: #{_forward.6} parent=27 // pred_check_branch
              %116 = sbr.rel (0) target = $region32
            $region31: #{_forward.6} parent=27 // pred_region
              // Predicated region
              $region44: #{_forward.6} parent=31 // pred_check
                _
              $region45: #{_forward.6} parent=31 // pred_check_branch
                %138 = sbr.rel (0) target = $region47
              $region46: #{_forward.6} parent=31 // pred_region
                loop: start=0, step=1, limit=1
                $region48: #{_forward.6} parent=46 // loop_pre_header
                  _
                $region49: #{_forward.6} parent=46 // loop_header
                  %s140 = sphi 0, %s144
                  %p141 = scmp.ge.s32.totalorder %s140, 1
                  %s145 = sphi %s112, %s112
                  %s146 = sphi %s109, %s109
                $region50: #{_forward.6} parent=46 // loop_header_branch
                  %143 = sbr.rel (%p141) target = $region54
                $region51: #{_forward.6} parent=46 // loop_body
                  %v147 = vld [vmem:[%s145] sm:$0xff]
                  %148 = vst [vmem:[%s146] sm:$0xff] %v147
                  %v149 = vld [vmem:[%s145 + $0x40] sm:$0xff]
                  %150 = vst [vmem:[%s146 + $0x8] sm:$0xff] %v149
                  %v151 = vld [vmem:[%s145 + $0x80] sm:$0xff]
                  %152 = vst [vmem:[%s146 + $0x10] sm:$0xff] %v151
                  %v153 = vld [vmem:[%s145 + $0xc0] sm:$0xff]
                  %154 = vst [vmem:[%s146 + $0x18] sm:$0xff] %v153
                $region52: #{_forward.6} parent=46 // loop_footer
                  %s144 = sadd.s32 1, %s140
                $region53: #{_forward.6} parent=46 // loop_footer_branch
                  %139 = sbr.rel target = $region49
                $region54: #{_forward.6} parent=46 // loop_exit
                  _
              $region47: #{_forward.6} parent=31 // pred_fallthru
                _
              // Predicated region
              $region55: #{_forward.6} parent=31 // pred_check
                _
              $region56: #{_forward.6} parent=31 // pred_check_branch
                %156 = sbr.rel target = $region58
              $region57: #{_forward.6} parent=31 // pred_region
                _
              $region58: #{_forward.6} parent=31 // pred_fallthru
                _
            $region32: #{_forward.6} parent=27 // pred_fallthru
              _
            // Predicated region
            $region33: #{_forward.6} parent=27 // pred_check
              _
            $region34: #{_forward.6} parent=27 // pred_check_branch
              %118 = sbr.rel target = $region36
            $region35: #{_forward.6} parent=27 // pred_region
              %s120 = ssub.s32 256, 1
              loop: start=0, step=1, limit=1
              $region37: #{_forward.6} parent=35 // loop_pre_header
                _
              $region38: #{_forward.6} parent=35 // loop_header
                %s122 = sphi 0, %s126
                %p123 = scmp.ge.s32.totalorder %s122, 1
                %s127 = sphi %s112, %s112
                %s128 = sphi %s109, %s109
              $region39: #{_forward.6} parent=35 // loop_header_branch
                %125 = sbr.rel (%p123) target = $region43
              $region40: #{_forward.6} parent=35 // loop_body
                %v129 = vld [vmem:[%s127] sm:%s120]
                %130 = vst [vmem:[%s128] sm:%s120] %v129
                %v131 = vld [vmem:[%s127 + $0x40] sm:%s120]
                %132 = vst [vmem:[%s128 + $0x8] sm:%s120] %v131
                %v133 = vld [vmem:[%s127 + $0x80] sm:%s120]
                %134 = vst [vmem:[%s128 + $0x10] sm:%s120] %v133
                %v135 = vld [vmem:[%s127 + $0xc0] sm:%s120]
                %136 = vst [vmem:[%s128 + $0x18] sm:%s120] %v135
              $region41: #{_forward.6} parent=35 // loop_footer
                %s126 = sadd.s32 1, %s122
              $region42: #{_forward.6} parent=35 // loop_footer_branch
                %121 = sbr.rel target = $region38
              $region43: #{_forward.6} parent=35 // loop_exit
                _
            $region36: #{_forward.6} parent=27 // pred_fallthru
              _
          $region28: #{_forward.6} parent=23 // pred_fallthru
            _
          %157 = vnop
        $region24: #{_forward.6} parent=19 // pred_fallthru
          _
      $region20: #{_forward.6} parent=5 // pred_fallthru
        _
      %p158 = scmp.le.s32.totalorder 1, %s8
      %p159 = scmp.lt.s32.totalorder %s8, 9
      %p160 = pnand %p158, %p159
      %p161 = pneg %p160
      // Predicated region
      $region59: #{_forward.6} parent=5 // pred_check
        _
      $region60: #{_forward.6} parent=5 // pred_check_branch
        %163 = sbr.rel (%p160) target = $region62
      $region61: #{_forward.6} parent=5 // pred_region
        %s164 = ssub.s32 %s8, 1
        %s165 = sand.u32 %s42, 1
        %s166 = sand.u32 %s42, 1
        %s167 = smul.addr %s166, 32
        %s168 = scalar_lea.vmem [#allocation2], %s167
        // Predicated region
        $region63: #{_forward.6} parent=61 // pred_check
          %p169 = pneg %p55
        $region64: #{_forward.6} parent=61 // pred_check_branch
          %171 = sbr.rel (%p169) target = $region66
        $region65: #{_forward.6} parent=61 // pred_region
          _
        $region66: #{_forward.6} parent=61 // pred_fallthru
          _
        %p172 = pneg %p29
        %p173 = pneg %p26
        %s174 = sand.u32 %s42, 1
        %s175 = sand.u32 %s42, 1
        %s176 = smul.addr %s175, 32
        %s177 = scalar_lea.vmem [#allocation2], %s176
        %p178 = pneg %p55
        %p179 = pneg %p52
        %p180 = pneg %p81
        %p181 = pneg %p78
        %s182 = smul.u32 2, %s13
        %p183 = scmp.lt.s32.totalorder %s182, 15
        %s184 = scalar_select %p183, %s182, 15
        %s185 = smul.addr %s184, 4
        %s186 = scalar_lea.vmem %s2, %s185
        %s187 = smul.u32 2, %s13
        %s188 = smul.u32 2, %s13
        %p189 = scmp.lt.s32.totalorder %s188, 15
        %s190 = scalar_select %p189, %s188, 15
        %s191 = smul.addr %s190, 4
        %s192 = scalar_lea.vmem %s2, %s191
        %s193 = smul.u32 2, %s13
        %v195 = vld [vmem:[%s0] sm:$0xf]
        %v196 = vld [vmem:[%s168] sm:$0xff]
        %v197 = vld [vmem:[%s168 + $0x8] sm:$0xff]
        %v198 = vld [vmem:[%s168 + $0x10] sm:$0xff]
        %v199 = vld [vmem:[%s168 + $0x18] sm:$0xff]
        %v204 = vunpack.c.l.b16 %v196
        %v205 = vunpack.c.h.b16 %v196
        %v206 = vunpack.c.l.b16 %v197
        %v207 = vunpack.c.h.b16 %v197
        %v208 = vunpack.c.l.b16 %v198
        %v209 = vunpack.c.h.b16 %v198
        %v210 = vunpack.c.l.b16 %v199
        %v211 = vunpack.c.h.b16 %v199
        %v212 = vpack.c.b16 %v206, %v204
        %v213 = vpack.c.b16 %v207, %v205
        %v214 = vpack.c.b16 %v210, %v208
        %v215 = vpack.c.b16 %v211, %v209
        %vm220 = vcmask 261120
        %v222 = vsel %vm220, %v195, 0
        %224 = vmatprep.subr.bf16.mxu0 0
        %225 = vmatpush1.bf16.msra.mxu0 0
        %226 = vmatprep.subr.bf16.mxu0 0
        %227 = vmatpush1.bf16.msra.mxu0 0
        %228 = vmatprep.subr.bf16.mxu0 0
        %229 = vmatpush1.bf16.msra.mxu0 0
        %230 = vmatprep.subr.bf16.mxu0 0
        %231 = vmatpush1.bf16.msra.mxu0 0
        %232 = vmatprep.subr.bf16.mxu0 0
        %233 = vmatpush1.bf16.msra.mxu0 0
        %234 = vmatprep.subr.bf16.mxu0 0
        %235 = vmatpush1.bf16.msra.mxu0 0
        %236 = vmatprep.subr.bf16.mxu0 %v215
        %237 = vmatpush1.bf16.msra.mxu0 %v214
        %238 = vmatprep.subr.bf16.mxu0 %v213
        %239 = vmatpush1.bf16.msra.mxu0 %v212
        %240 = vmatprep.subr.bf16.mxu0 0
        %241 = vmatpush2.bf16.msra.mxu0 0
        %242 = vmatprep.subr.bf16.mxu0 0
        %243 = vmatpush2.bf16.msra.mxu0 0
        %244 = vmatprep.subr.bf16.mxu0 0
        %245 = vmatpush2.bf16.msra.mxu0 0
        %246 = vmatprep.subr.bf16.mxu0 0
        %247 = vmatpush2.bf16.msra.mxu0 0
        %248 = vmatprep.subr.bf16.mxu0 0
        %249 = vmatpush2.bf16.msra.mxu0 0
        %250 = vmatprep.subr.bf16.mxu0 0
        %251 = vmatpush2.bf16.msra.mxu0 0
        %252 = vmatprep.subr.bf16.mxu0 0
        %253 = vmatpush2.bf16.msra.mxu0 0
        %254 = vmatprep.subr.bf16.mxu0 0
        %255 = vmatpush2.bf16.msra.mxu0 0
        %256 = vmatprep.mubr.bf16.mxu0 0
        %257 = vmatmul.mubr.bf16.gmra.mxu0 %v222
        %v258 = vpop.f32.mrf.mxu0
        %v259 = vadd.f32 0.0, %v258
        %v260 = vpop.f32.mrf.mxu0
        %v261 = vadd.f32 0.0, %v260
        %v262 = vpop.f32.mrf.mxu0
        %v263 = vpop.f32.mrf.mxu0
        %264 = vdwg.mxu0
        %vm265 = vcmp.ge.f32.partialorder %v259, 0.0
        %vm266 = vcmp.ge.f32.partialorder %v261, 0.0
        %v267 = vmul.f32 %v259, 0.2
        %v268 = vmul.f32 %v261, 0.2
        %v269 = vsel %vm265, %v259, %v267
        %v270 = vsel %vm266, %v261, %v268
        %v271 = vpack.c.bf16 %v269, %v269
        %v272 = vpack.c.bf16 %v270, %v270
        %v275 = vunpack.c.l.b16 %v271
        %v276 = vunpack.c.l.b16 %v272
        %v277 = vpack.c.b16 %v276, %v275
        %279 = vst [vmem:[%s192] sm:$0xff] %v277
        %s280 = smul.u32 2, %s13
        %p281 = scmp.lt.s32.totalorder %s280, 15
        %s282 = scalar_select %p281, %s280, 15
        %s283 = smul.addr %s282, 4
        %s284 = scalar_lea.vmem %s2, %s283
        // Predicated region
        $region67: #{_forward.6} parent=61 // pred_check
          %p285 = pneg %p78
        $region68: #{_forward.6} parent=61 // pred_check_branch
          %287 = sbr.rel (%p285) target = $region70
        $region69: #{_forward.6} parent=61 // pred_region
          %s288 = smul.u32 2, %s13
        $region70: #{_forward.6} parent=61 // pred_fallthru
          _
      $region62: #{_forward.6} parent=5 // pred_fallthru
        _
      %p289 = scmp.le.s32.totalorder 2, %s8
      // Predicated region
      $region71: #{_forward.6} parent=5 // pred_check
        %p290 = pneg %p289
      $region72: #{_forward.6} parent=5 // pred_check_branch
        %292 = sbr.rel (%p290) target = $region74
      $region73: #{_forward.6} parent=5 // pred_region
        %s293 = ssub.s32 %s8, 2
        // Predicated region
        $region75: #{_forward.6} parent=73 // pred_check
          %p294 = pneg %p84
        $region76: #{_forward.6} parent=73 // pred_check_branch
          %296 = sbr.rel (%p294) target = $region78
        $region77: #{_forward.6} parent=73 // pred_region
          %s297 = smul.u32 2, %s14
          %p298 = scmp.lt.s32.totalorder %s297, 15
          %s299 = scalar_select %p298, %s297, 15
          %s300 = smul.addr %s299, 4
          %s301 = scalar_lea.vmem %s2, %s300
        $region78: #{_forward.6} parent=73 // pred_fallthru
          _
      $region74: #{_forward.6} parent=5 // pred_fallthru
        _
    $region6: #{_forward.6} parent=1 // loop_footer
      %s12 = sadd.s32 1, %s8
    $region7: #{_forward.6} parent=1 // loop_footer_branch
      %7 = sbr.rel target = $region3
    $region8: #{_forward.6} parent=1 // loop_exit
      _

// kernel: _forward.7
$region0: #{_forward.7}
  #allocation0 [shape = 'u32[]', space=smem, size = 0x4, offset = 0x4, fixed_abs, tag = 'smem constant byte address 0x4 - core index']
  #allocation1 [shape = 'u32[144,128]{1,0:T(1,128)}', space=vmem, size = 0x12000, scoped, tag = 'internal scratch']
  %s0 = inlined_call_operand.vmem [shape: bf16[16,128], index: 0, kind: input, shape index: {}]
  %s1 = inlined_call_operand.vmem [shape: bf16[128,512], index: 1, kind: input, shape index: {}]
  %s2 = inlined_call_operand.vmem [shape: f32[16,512], index: 2, kind: output, shape index: {0}]
  %s3 = inlined_call_operand.vmem [shape: f32[2,16,1], index: 3, kind: output, shape index: {1}]
  %s4 = inlined_call_operand.vmem [shape: f32[2,16,1], index: 4, kind: output, shape index: {2}]
  %5 = xla_tuple %s2, %s3, %s4
  %s6 = sld [smem:[#allocation0]]
  $region114: #{_forward.7} parent=0
    _
  %s8 = ssub.s32 1, %s6
  %s9 = scalar_select 0, %s8, %s6
  $region1: #{_forward.7} parent=0
    #allocation2 [shape = 'u8[131072]{0}', space=vmem, size = 0x20000, scoped, tag = 'input window, operand 1']
    #allocation3 [shape = 'u8[32768]{0}', space=vmem, size = 0x8000, scoped, tag = 'output window, operand 0']
    loop: start=0, step=1, limit=4
    $region2: #{_forward.7} parent=1 // loop_pre_header
      _
    $region3: #{_forward.7} parent=1 // loop_header
      %s11 = sphi 0, %s15
      %p12 = scmp.ge.s32.totalorder %s11, 4
      %s19 = sphi 0, %s19
      %s21 = sphi 0, %s19
      %s22 = sphi 0, %s21
      %s36 = sphi 0, %s22
      %s42 = sphi 0, %s44
      %s45 = sphi 0, %s42
      %s46 = sphi 0, %s45
      %s62 = sphi 0, %s46
      %s68 = sphi 0, %s70
      %s71 = sphi 0, %s68
      %s72 = sphi 0, %s71
      %s88 = sphi 0, %s72
      %s94 = sphi 0, %s96
      %s97 = sphi 0, %s94
      %s98 = sphi 0, %s97
      %s114 = sphi 0, %s98
      %s120 = sphi 0, %s122
      %s123 = sphi 0, %s120
      %s124 = sphi 0, %s123
      %s140 = sphi 0, %s124
    $region4: #{_forward.7} parent=1 // loop_header_branch
      %14 = sbr.rel (%p12) target = $region8
    $region5: #{_forward.7} parent=1 // loop_body
      %s16 = ssub.s32 %s11, 1
      %s17 = ssub.s32 %s11, 2
      %s18 = sadd.s32 %s11, 1
      %s20 = sadd.s32 %s19, 1
      %p23 = scmp.eq.s32.totalorder %s11, 1
      %p24 = scmp.ne.s32.totalorder %s19, %s21
      %p25 = scmp.eq.s32.totalorder %s11, 0
      %p26 = por %p24, %p25
      %p27 = scmp.ne.s32.totalorder %s19, %s21
      %p28 = scmp.eq.s32.totalorder %s16, 1
      %p29 = por %p27, %p28
      %p30 = scmp.ne.s32.totalorder %s21, %s22
      %p31 = scmp.eq.s32.totalorder %s16, 0
      %p32 = por %p30, %p31
      %p33 = scmp.ne.s32.totalorder %s21, %s22
      %p34 = scmp.eq.s32.totalorder %s17, 1
      %p35 = por %p33, %p34
      %p37 = scmp.ne.s32.totalorder %s22, %s36
      %p38 = scmp.eq.s32.totalorder %s17, 0
      %p39 = por %p37, %p38
      %s40 = ssub.s32 %s11, %s18
      %p41 = scmp.eq.s32.totalorder %s40, 0
      %s43 = sadd.s32 %s42, 1
      %s44 = scalar_select %p41, %s42, %s43
      %p47 = pneg %p41
      %p48 = scmp.eq.s32.totalorder %s11, 1
      %p49 = por %p47, %p48
      %p50 = scmp.ne.s32.totalorder %s42, %s45
      %p51 = scmp.eq.s32.totalorder %s11, 0
      %p52 = por %p50, %p51
      %p53 = scmp.ne.s32.totalorder %s42, %s45
      %p54 = scmp.eq.s32.totalorder %s16, 1
      %p55 = por %p53, %p54
      %p56 = scmp.ne.s32.totalorder %s45, %s46
      %p57 = scmp.eq.s32.totalorder %s16, 0
      %p58 = por %p56, %p57
      %p59 = scmp.ne.s32.totalorder %s45, %s46
      %p60 = scmp.eq.s32.totalorder %s17, 1
      %p61 = por %p59, %p60
      %p63 = scmp.ne.s32.totalorder %s46, %s62
      %p64 = scmp.eq.s32.totalorder %s17, 0
      %p65 = por %p63, %p64
      %s66 = ssub.s32 %s11, %s18
      %p67 = scmp.eq.s32.totalorder %s66, 0
      %s69 = sadd.s32 %s68, 1
      %s70 = scalar_select %p67, %s68, %s69
      %p73 = pneg %p67
      %p74 = scmp.eq.s32.totalorder %s11, 1
      %p75 = por %p73, %p74
      %p76 = scmp.ne.s32.totalorder %s68, %s71
      %p77 = scmp.eq.s32.totalorder %s11, 0
      %p78 = por %p76, %p77
      %p79 = scmp.ne.s32.totalorder %s68, %s71
      %p80 = scmp.eq.s32.totalorder %s16, 1
      %p81 = por %p79, %p80
      %p82 = scmp.ne.s32.totalorder %s71, %s72
      %p83 = scmp.eq.s32.totalorder %s16, 0
      %p84 = por %p82, %p83
      %p85 = scmp.ne.s32.totalorder %s71, %s72
      %p86 = scmp.eq.s32.totalorder %s17, 1
      %p87 = por %p85, %p86
      %p89 = scmp.ne.s32.totalorder %s72, %s88
      %p90 = scmp.eq.s32.totalorder %s17, 0
      %p91 = por %p89, %p90
      %s92 = ssub.s32 %s11, %s18
      %p93 = scmp.eq.s32.totalorder %s92, 0
      %s95 = sadd.s32 %s94, 1
      %s96 = scalar_select %p93, %s94, %s95
      %p99 = pneg %p93
      %p100 = scmp.eq.s32.totalorder %s11, 1
      %p101 = por %p99, %p100
      %p102 = scmp.ne.s32.totalorder %s94, %s97
      %p103 = scmp.eq.s32.totalorder %s11, 0
      %p104 = por %p102, %p103
      %p105 = scmp.ne.s32.totalorder %s94, %s97
      %p106 = scmp.eq.s32.totalorder %s16, 1
      %p107 = por %p105, %p106
      %p108 = scmp.ne.s32.totalorder %s97, %s98
      %p109 = scmp.eq.s32.totalorder %s16, 0
      %p110 = por %p108, %p109
      %p111 = scmp.ne.s32.totalorder %s97, %s98
      %p112 = scmp.eq.s32.totalorder %s17, 1
      %p113 = por %p111, %p112
      %p115 = scmp.ne.s32.totalorder %s98, %s114
      %p116 = scmp.eq.s32.totalorder %s17, 0
      %p117 = por %p115, %p116
      %s118 = ssub.s32 %s11, %s18
      %p119 = scmp.eq.s32.totalorder %s118, 0
      %s121 = sadd.s32 %s120, 1
      %s122 = scalar_select %p119, %s120, %s121
      %p125 = pneg %p119
      %p126 = scmp.eq.s32.totalorder %s11, 1
      %p127 = por %p125, %p126
      %p128 = scmp.ne.s32.totalorder %s120, %s123
      %p129 = scmp.eq.s32.totalorder %s11, 0
      %p130 = por %p128, %p129
      %p131 = scmp.ne.s32.totalorder %s120, %s123
      %p132 = scmp.eq.s32.totalorder %s16, 1
      %p133 = por %p131, %p132
      %p134 = scmp.ne.s32.totalorder %s123, %s124
      %p135 = scmp.eq.s32.totalorder %s16, 0
      %p136 = por %p134, %p135
      %p137 = scmp.ne.s32.totalorder %s123, %s124
      %p138 = scmp.eq.s32.totalorder %s17, 1
      %p139 = por %p137, %p138
      %p141 = scmp.ne.s32.totalorder %s124, %s140
      %p142 = scmp.eq.s32.totalorder %s17, 0
      %p143 = por %p141, %p142
      %p144 = scmp.le.s32.totalorder 1, %s11
      %p145 = scmp.lt.s32.totalorder %s11, 3
      %p146 = pnand %p144, %p145
      %p147 = pneg %p146
      // Predicated region
      $region9: #{_forward.7} parent=5 // pred_check
        _
      $region10: #{_forward.7} parent=5 // pred_check_branch
        %149 = sbr.rel (%p146) target = $region12
      $region11: #{_forward.7} parent=5 // pred_region
        %s150 = ssub.s32 %s11, 1
        // Predicated region
        $region13: #{_forward.7} parent=11 // pred_check
          %p151 = pneg %p32
        $region14: #{_forward.7} parent=11 // pred_check_branch
          %153 = sbr.rel (%p151) target = $region16
        $region15: #{_forward.7} parent=11 // pred_region
          _
        $region16: #{_forward.7} parent=11 // pred_fallthru
          _
      $region12: #{_forward.7} parent=5 // pred_fallthru
        _
      %p154 = scmp.lt.s32.totalorder %s11, 2
      // Predicated region
      $region17: #{_forward.7} parent=5 // pred_check
        %p155 = pneg %p154
      $region18: #{_forward.7} parent=5 // pred_check_branch
        %157 = sbr.rel (%p155) target = $region20
      $region19: #{_forward.7} parent=5 // pred_region
        // Predicated region
        $region21: #{_forward.7} parent=19 // pred_check
          %p158 = pneg %p52
        $region22: #{_forward.7} parent=19 // pred_check_branch
          %160 = sbr.rel (%p158) target = $region24
        $region23: #{_forward.7} parent=19 // pred_region
          %s161 = sand.u32 %s42, 1
          %s162 = sand.u32 %s42, 1
          %s163 = smul.addr %s162, 128
          %s164 = scalar_lea.vmem [#allocation2], %s163
          %s165 = smul.u32 2, %s11
          %s166 = smul.addr %s165, 4
          %s167 = scalar_lea.vmem %s1, %s166
          // Predicated region
          $region25: #{_forward.7} parent=23 // pred_check
            _
          $region26: #{_forward.7} parent=23 // pred_check_branch
            %169 = sbr.rel (0) target = $region28
          $region27: #{_forward.7} parent=23 // pred_region
            // Predicated region
            $region29: #{_forward.7} parent=27 // pred_check
              _
            $region30: #{_forward.7} parent=27 // pred_check_branch
              %171 = sbr.rel (0) target = $region32
            $region31: #{_forward.7} parent=27 // pred_region
              // Predicated region
              $region44: #{_forward.7} parent=31 // pred_check
                _
              $region45: #{_forward.7} parent=31 // pred_check_branch
                %217 = sbr.rel (0) target = $region47
              $region46: #{_forward.7} parent=31 // pred_region
                loop: start=0, step=1, limit=1
                $region48: #{_forward.7} parent=46 // loop_pre_header
                  _
                $region49: #{_forward.7} parent=46 // loop_header
                  %s219 = sphi 0, %s223
                  %p220 = scmp.ge.s32.totalorder %s219, 1
                  %s224 = sphi %s167, %s167
                  %s225 = sphi %s164, %s164
                $region50: #{_forward.7} parent=46 // loop_header_branch
                  %222 = sbr.rel (%p220) target = $region54
                $region51: #{_forward.7} parent=46 // loop_body
                  %v226 = vld [vmem:[%s224] sm:$0xff]
                  %227 = vst [vmem:[%s225] sm:$0xff] %v226
                  %v228 = vld [vmem:[%s224 + $0x10] sm:$0xff]
                  %229 = vst [vmem:[%s225 + $0x8] sm:$0xff] %v228
                  %v230 = vld [vmem:[%s224 + $0x20] sm:$0xff]
                  %231 = vst [vmem:[%s225 + $0x10] sm:$0xff] %v230
                  %v232 = vld [vmem:[%s224 + $0x30] sm:$0xff]
                  %233 = vst [vmem:[%s225 + $0x18] sm:$0xff] %v232
                  %v234 = vld [vmem:[%s224 + $0x40] sm:$0xff]
                  %235 = vst [vmem:[%s225 + $0x20] sm:$0xff] %v234
                  %v236 = vld [vmem:[%s224 + $0x50] sm:$0xff]
                  %237 = vst [vmem:[%s225 + $0x28] sm:$0xff] %v236
                  %v238 = vld [vmem:[%s224 + $0x60] sm:$0xff]
                  %239 = vst [vmem:[%s225 + $0x30] sm:$0xff] %v238
                  %v240 = vld [vmem:[%s224 + $0x70] sm:$0xff]
                  %241 = vst [vmem:[%s225 + $0x38] sm:$0xff] %v240
                  %v242 = vld [vmem:[%s224 + $0x80] sm:$0xff]
                  %243 = vst [vmem:[%s225 + $0x40] sm:$0xff] %v242
                  %v244 = vld [vmem:[%s224 + $0x90] sm:$0xff]
                  %245 = vst [vmem:[%s225 + $0x48] sm:$0xff] %v244
                  %v246 = vld [vmem:[%s224 + $0xa0] sm:$0xff]
                  %247 = vst [vmem:[%s225 + $0x50] sm:$0xff] %v246
                  %v248 = vld [vmem:[%s224 + $0xb0] sm:$0xff]
                  %249 = vst [vmem:[%s225 + $0x58] sm:$0xff] %v248
                  %v250 = vld [vmem:[%s224 + $0xc0] sm:$0xff]
                  %251 = vst [vmem:[%s225 + $0x60] sm:$0xff] %v250
                  %v252 = vld [vmem:[%s224 + $0xd0] sm:$0xff]
                  %253 = vst [vmem:[%s225 + $0x68] sm:$0xff] %v252
                  %v254 = vld [vmem:[%s224 + $0xe0] sm:$0xff]
                  %255 = vst [vmem:[%s225 + $0x70] sm:$0xff] %v254
                  %v256 = vld [vmem:[%s224 + $0xf0] sm:$0xff]
                  %257 = vst [vmem:[%s225 + $0x78] sm:$0xff] %v256
                $region52: #{_forward.7} parent=46 // loop_footer
                  %s223 = sadd.s32 1, %s219
                $region53: #{_forward.7} parent=46 // loop_footer_branch
                  %218 = sbr.rel target = $region49
                $region54: #{_forward.7} parent=46 // loop_exit
                  _
              $region47: #{_forward.7} parent=31 // pred_fallthru
                _
              // Predicated region
              $region55: #{_forward.7} parent=31 // pred_check
                _
              $region56: #{_forward.7} parent=31 // pred_check_branch
                %259 = sbr.rel target = $region58
              $region57: #{_forward.7} parent=31 // pred_region
                _
              $region58: #{_forward.7} parent=31 // pred_fallthru
                _
            $region32: #{_forward.7} parent=27 // pred_fallthru
              _
            // Predicated region
            $region33: #{_forward.7} parent=27 // pred_check
              _
            $region34: #{_forward.7} parent=27 // pred_check_branch
              %173 = sbr.rel target = $region36
            $region35: #{_forward.7} parent=27 // pred_region
              %s175 = ssub.s32 256, 1
              loop: start=0, step=1, limit=1
              $region37: #{_forward.7} parent=35 // loop_pre_header
                _
              $region38: #{_forward.7} parent=35 // loop_header
                %s177 = sphi 0, %s181
                %p178 = scmp.ge.s32.totalorder %s177, 1
                %s182 = sphi %s167, %s167
                %s183 = sphi %s164, %s164
              $region39: #{_forward.7} parent=35 // loop_header_branch
                %180 = sbr.rel (%p178) target = $region43
              $region40: #{_forward.7} parent=35 // loop_body
                %v184 = vld [vmem:[%s182] sm:%s175]
                %185 = vst [vmem:[%s183] sm:%s175] %v184
                %v186 = vld [vmem:[%s182 + $0x10] sm:%s175]
                %187 = vst [vmem:[%s183 + $0x8] sm:%s175] %v186
                %v188 = vld [vmem:[%s182 + $0x20] sm:%s175]
                %189 = vst [vmem:[%s183 + $0x10] sm:%s175] %v188
                %v190 = vld [vmem:[%s182 + $0x30] sm:%s175]
                %191 = vst [vmem:[%s183 + $0x18] sm:%s175] %v190
                %v192 = vld [vmem:[%s182 + $0x40] sm:%s175]
                %193 = vst [vmem:[%s183 + $0x20] sm:%s175] %v192
                %v194 = vld [vmem:[%s182 + $0x50] sm:%s175]
                %195 = vst [vmem:[%s183 + $0x28] sm:%s175] %v194
                %v196 = vld [vmem:[%s182 + $0x60] sm:%s175]
                %197 = vst [vmem:[%s183 + $0x30] sm:%s175] %v196
                %v198 = vld [vmem:[%s182 + $0x70] sm:%s175]
                %199 = vst [vmem:[%s183 + $0x38] sm:%s175] %v198
                %v200 = vld [vmem:[%s182 + $0x80] sm:%s175]
                %201 = vst [vmem:[%s183 + $0x40] sm:%s175] %v200
                %v202 = vld [vmem:[%s182 + $0x90] sm:%s175]
                %203 = vst [vmem:[%s183 + $0x48] sm:%s175] %v202
                %v204 = vld [vmem:[%s182 + $0xa0] sm:%s175]
                %205 = vst [vmem:[%s183 + $0x50] sm:%s175] %v204
                %v206 = vld [vmem:[%s182 + $0xb0] sm:%s175]
                %207 = vst [vmem:[%s183 + $0x58] sm:%s175] %v206
                %v208 = vld [vmem:[%s182 + $0xc0] sm:%s175]
                %209 = vst [vmem:[%s183 + $0x60] sm:%s175] %v208
                %v210 = vld [vmem:[%s182 + $0xd0] sm:%s175]
                %211 = vst [vmem:[%s183 + $0x68] sm:%s175] %v210
                %v212 = vld [vmem:[%s182 + $0xe0] sm:%s175]
                %213 = vst [vmem:[%s183 + $0x70] sm:%s175] %v212
                %v214 = vld [vmem:[%s182 + $0xf0] sm:%s175]
                %215 = vst [vmem:[%s183 + $0x78] sm:%s175] %v214
              $region41: #{_forward.7} parent=35 // loop_footer
                %s181 = sadd.s32 1, %s177
              $region42: #{_forward.7} parent=35 // loop_footer_branch
                %176 = sbr.rel target = $region38
              $region43: #{_forward.7} parent=35 // loop_exit
                _
            $region36: #{_forward.7} parent=27 // pred_fallthru
              _
          $region28: #{_forward.7} parent=23 // pred_fallthru
            _
          %260 = vnop
        $region24: #{_forward.7} parent=19 // pred_fallthru
          _
      $region20: #{_forward.7} parent=5 // pred_fallthru
        _
      %p261 = scmp.le.s32.totalorder 1, %s11
      %p262 = scmp.lt.s32.totalorder %s11, 3
      %p263 = pnand %p261, %p262
      %p264 = pneg %p263
      // Predicated region
      $region59: #{_forward.7} parent=5 // pred_check
        _
      $region60: #{_forward.7} parent=5 // pred_check_branch
        %266 = sbr.rel (%p263) target = $region62
      $region61: #{_forward.7} parent=5 // pred_region
        %s267 = ssub.s32 %s11, 1
        %s268 = sand.u32 %s45, 1
        %s269 = sand.u32 %s45, 1
        %s270 = smul.addr %s269, 128
        %s271 = scalar_lea.vmem [#allocation2], %s270
        // Predicated region
        $region63: #{_forward.7} parent=61 // pred_check
          %p272 = pneg %p58
        $region64: #{_forward.7} parent=61 // pred_check_branch
          %274 = sbr.rel (%p272) target = $region66
        $region65: #{_forward.7} parent=61 // pred_region
          _
        $region66: #{_forward.7} parent=61 // pred_fallthru
          _
        %p275 = pneg %p32
        %p276 = pneg %p29
        %s277 = sand.u32 %s45, 1
        %s278 = sand.u32 %s45, 1
        %s279 = smul.addr %s278, 128
        %s280 = scalar_lea.vmem [#allocation2], %s279
        %p281 = pneg %p58
        %p282 = pneg %p55
        %p283 = pneg %p84
        %p284 = pneg %p81
        %s285 = sand.u32 %s71, 1
        %s286 = sand.u32 %s71, 1
        %s287 = smul.addr %s286, 32
        %s288 = scalar_lea.vmem [#allocation3], %s287
        %p289 = pneg %p110
        %p290 = pneg %p107
        %p291 = scmp.lt.s32.totalorder %s16, 1
        %s292 = scalar_select %p291, %s16, 1
        %s293 = smul.addr %s292, 2
        %s294 = smul.addr %s293, 8
        %s295 = scalar_lea.vmem %s3, %s294
        %p296 = pneg %p136
        %p297 = pneg %p133
        %p298 = scmp.lt.s32.totalorder %s16, 1
        %s299 = scalar_select %p298, %s16, 1
        %s300 = smul.addr %s299, 2
        %s301 = smul.addr %s300, 8
        %s302 = scalar_lea.vmem %s4, %s301
        %s303 = smul.u32 2, %s16
        %s304 = smul.u32 2, %s16
        %p305 = scmp.lt.s32.totalorder %s16, 1
        %s306 = scalar_select %p305, %s16, 1
        %s307 = smul.addr %s306, 2
        %s308 = smul.addr %s307, 8
        %s309 = scalar_lea.vmem %s3, %s308
        %p310 = scmp.lt.s32.totalorder %s16, 1
        %s311 = scalar_select %p310, %s16, 1
        %s312 = smul.addr %s311, 2
        %s313 = smul.addr %s312, 8
        %s314 = scalar_lea.vmem %s4, %s313
        %v316 = vld [vmem:[%s0] sm:$0xf]
        %v317 = vld [vmem:[%s0 + $0x4] sm:$0xf]
        %v318 = vld [vmem:[%s271] sm:$0xff]
        %v319 = vld [vmem:[%s271 + $0x8] sm:$0xff]
        %v320 = vld [vmem:[%s271 + $0x10] sm:$0xff]
        %v321 = vld [vmem:[%s271 + $0x18] sm:$0xff]
        %v322 = vld [vmem:[%s271 + $0x20] sm:$0xff]
        %v323 = vld [vmem:[%s271 + $0x28] sm:$0xff]
        %v324 = vld [vmem:[%s271 + $0x30] sm:$0xff]
        %v325 = vld [vmem:[%s271 + $0x38] sm:$0xff]
        %v326 = vld [vmem:[%s271 + $0x40] sm:$0xff]
        %v327 = vld [vmem:[%s271 + $0x48] sm:$0xff]
        %v328 = vld [vmem:[%s271 + $0x50] sm:$0xff]
        %v329 = vld [vmem:[%s271 + $0x58] sm:$0xff]
        %v330 = vld [vmem:[%s271 + $0x60] sm:$0xff]
        %v331 = vld [vmem:[%s271 + $0x68] sm:$0xff]
        %v332 = vld [vmem:[%s271 + $0x70] sm:$0xff]
        %v333 = vld [vmem:[%s271 + $0x78] sm:$0xff]
        %v336 = vunpack.c.l.b16 %v316
        %v337 = vunpack.c.l.b16 %v317
        %v338 = vpack.c.b16 %v337, %v336
        %v356 = vunpack.c.l.b16 %v318
        %v357 = vunpack.c.h.b16 %v318
        %v358 = vunpack.c.l.b16 %v319
        %v359 = vunpack.c.h.b16 %v319
        %v360 = vunpack.c.l.b16 %v320
        %v361 = vunpack.c.h.b16 %v320
        %v362 = vunpack.c.l.b16 %v321
        %v363 = vunpack.c.h.b16 %v321
        %v364 = vunpack.c.l.b16 %v322
        %v365 = vunpack.c.h.b16 %v322
        %v366 = vunpack.c.l.b16 %v323
        %v367 = vunpack.c.h.b16 %v323
        %v368 = vunpack.c.l.b16 %v324
        %v369 = vunpack.c.h.b16 %v324
        %v370 = vunpack.c.l.b16 %v325
        %v371 = vunpack.c.h.b16 %v325
        %v372 = vunpack.c.l.b16 %v326
        %v373 = vunpack.c.h.b16 %v326
        %v374 = vunpack.c.l.b16 %v327
        %v375 = vunpack.c.h.b16 %v327
        %v376 = vunpack.c.l.b16 %v328
        %v377 = vunpack.c.h.b16 %v328
        %v378 = vunpack.c.l.b16 %v329
        %v379 = vunpack.c.h.b16 %v329
        %v380 = vunpack.c.l.b16 %v330
        %v381 = vunpack.c.h.b16 %v330
        %v382 = vunpack.c.l.b16 %v331
        %v383 = vunpack.c.h.b16 %v331
        %v384 = vunpack.c.l.b16 %v332
        %v385 = vunpack.c.h.b16 %v332
        %v386 = vunpack.c.l.b16 %v333
        %v387 = vunpack.c.h.b16 %v333
        %v388 = vpack.c.b16 %v358, %v356
        %v389 = vpack.c.b16 %v359, %v357
        %v390 = vpack.c.b16 %v362, %v360
        %v391 = vpack.c.b16 %v363, %v361
        %v392 = vpack.c.b16 %v366, %v364
        %v393 = vpack.c.b16 %v367, %v365
        %v394 = vpack.c.b16 %v370, %v368
        %v395 = vpack.c.b16 %v371, %v369
        %v396 = vpack.c.b16 %v374, %v372
        %v397 = vpack.c.b16 %v375, %v373
        %v398 = vpack.c.b16 %v378, %v376
        %v399 = vpack.c.b16 %v379, %v377
        %v400 = vpack.c.b16 %v382, %v380
        %v401 = vpack.c.b16 %v383, %v381
        %v402 = vpack.c.b16 %v386, %v384
        %v403 = vpack.c.b16 %v387, %v385
        %420 = vmatprep.subr.bf16.mxu0 %v403
        %421 = vmatpush1.bf16.msra.mxu0 %v402
        %422 = vmatprep.subr.bf16.mxu0 %v401
        %423 = vmatpush1.bf16.msra.mxu0 %v400
        %424 = vmatprep.subr.bf16.mxu0 %v399
        %425 = vmatpush1.bf16.msra.mxu0 %v398
        %426 = vmatprep.subr.bf16.mxu0 %v397
        %427 = vmatpush1.bf16.msra.mxu0 %v396
        %428 = vmatprep.subr.bf16.mxu0 %v395
        %429 = vmatpush1.bf16.msra.mxu0 %v394
        %430 = vmatprep.subr.bf16.mxu0 %v393
        %431 = vmatpush1.bf16.msra.mxu0 %v392
        %432 = vmatprep.subr.bf16.mxu0 %v391
        %433 = vmatpush1.bf16.msra.mxu0 %v390
        %434 = vmatprep.subr.bf16.mxu0 %v389
        %435 = vmatpush1.bf16.msra.mxu0 %v388
        %436 = vmatprep.subr.bf16.mxu0 0
        %437 = vmatpush2.bf16.msra.mxu0 0
        %438 = vmatprep.subr.bf16.mxu0 0
        %439 = vmatpush2.bf16.msra.mxu0 0
        %440 = vmatprep.subr.bf16.mxu0 0
        %441 = vmatpush2.bf16.msra.mxu0 0
        %442 = vmatprep.subr.bf16.mxu0 0
        %443 = vmatpush2.bf16.msra.mxu0 0
        %444 = vmatprep.subr.bf16.mxu0 0
        %445 = vmatpush2.bf16.msra.mxu0 0
        %446 = vmatprep.subr.bf16.mxu0 0
        %447 = vmatpush2.bf16.msra.mxu0 0
        %448 = vmatprep.subr.bf16.mxu0 0
        %449 = vmatpush2.bf16.msra.mxu0 0
        %450 = vmatprep.subr.bf16.mxu0 0
        %451 = vmatpush2.bf16.msra.mxu0 0
        %452 = vmatprep.mubr.bf16.mxu0 0
        %453 = vmatmul.mubr.bf16.gmra.mxu0 %v338
        %v454 = vpop.f32.mrf.mxu0
        %v455 = vadd.f32 0.0, %v454
        %v456 = vpop.f32.mrf.mxu0
        %v457 = vadd.f32 0.0, %v456
        %v458 = vpop.f32.mrf.mxu0
        %v459 = vadd.f32 0.0, %v458
        %v460 = vpop.f32.mrf.mxu0
        %v461 = vadd.f32 0.0, %v460
        %462 = vdwg.mxu0
        %463 = vst [vmem:[%s288] sm:$0xff] %v455
        %464 = vst [vmem:[%s288 + $0x8] sm:$0xff] %v457
        %465 = vst [vmem:[%s288 + $0x10] sm:$0xff] %v459
        %466 = vst [vmem:[%s288 + $0x18] sm:$0xff] %v461
        %v467 = vadd.f32 %v455, %v457
        %468 = vadd.xlane.f32.xlu0 %v467
        %v469 = vpop.xlane.xlu0 %468
        %v470 = vadd.f32 %v459, %v461
        %471 = vadd.xlane.f32.xlu0 %v470
        %v472 = vpop.xlane.xlu0 %471
        %vm473 = vcmask 7168
        %474 = vst.msk [vmem:[%s309] sm:$0xff] %vm473, %v469
        %475 = vst.msk [vmem:[%s309 + $0x8] sm:$0xff] %vm473, %v472
        %v476 = vmul.f32 %v455, %v455
        %v477 = vmul.f32 %v457, %v457
        %v478 = vmul.f32 %v459, %v459
        %v479 = vmul.f32 %v461, %v461
        %v480 = vadd.f32 %v476, %v477
        %481 = vadd.xlane.f32.xlu0 %v480
        %v482 = vpop.xlane.xlu0 %481
        %v483 = vadd.f32 %v478, %v479
        %484 = vadd.xlane.f32.xlu0 %v483
        %v485 = vpop.xlane.xlu0 %484
        %486 = vst.msk [vmem:[%s314] sm:$0xff] %vm473, %v482
        %487 = vst.msk [vmem:[%s314 + $0x8] sm:$0xff] %vm473, %v485
        %s488 = sand.u32 %s71, 1
        %s489 = sand.u32 %s71, 1
        %s490 = smul.addr %s489, 32
        %s491 = scalar_lea.vmem [#allocation3], %s490
        %p492 = scmp.lt.s32.totalorder %s16, 1
        %s493 = scalar_select %p492, %s16, 1
        %s494 = smul.addr %s493, 2
        %s495 = smul.addr %s494, 8
        %s496 = scalar_lea.vmem %s3, %s495
        %p497 = scmp.lt.s32.totalorder %s16, 1
        %s498 = scalar_select %p497, %s16, 1
        %s499 = smul.addr %s498, 2
        %s500 = smul.addr %s499, 8
        %s501 = scalar_lea.vmem %s4, %s500
        // Predicated region
        $region67: #{_forward.7} parent=61 // pred_check
          %p502 = pneg %p81
        $region68: #{_forward.7} parent=61 // pred_check_branch
          %504 = sbr.rel (%p502) target = $region70
        $region69: #{_forward.7} parent=61 // pred_region
          %s505 = smul.u32 2, %s16
          %s506 = smul.addr %s505, 8
          %s507 = scalar_lea.vmem %s2, %s506
          // Predicated region
          $region71: #{_forward.7} parent=69 // pred_check
            _
          $region72: #{_forward.7} parent=69 // pred_check_branch
            %509 = sbr.rel (0) target = $region74
          $region73: #{_forward.7} parent=69 // pred_region
            // Predicated region
            $region75: #{_forward.7} parent=73 // pred_check
              _
            $region76: #{_forward.7} parent=73 // pred_check_branch
              %511 = sbr.rel (0) target = $region78
            $region77: #{_forward.7} parent=73 // pred_region
              loop: start=0, step=1, limit=1
              $region79: #{_forward.7} parent=77 // loop_pre_header
                _
              $region80: #{_forward.7} parent=77 // loop_header
                %s513 = sphi 0, %s517
                %p514 = scmp.ge.s32.totalorder %s513, 1
                %s518 = sphi %s491, %s491
                %s519 = sphi %s507, %s507
              $region81: #{_forward.7} parent=77 // loop_header_branch
                %516 = sbr.rel (%p514) target = $region85
              $region82: #{_forward.7} parent=77 // loop_body
                %v520 = vld [vmem:[%s518] sm:$0xff]
                %521 = vst [vmem:[%s519] sm:$0xff] %v520
                %v522 = vld [vmem:[%s518 + $0x8] sm:$0xff]
                %523 = vst [vmem:[%s519 + $0x8] sm:$0xff] %v522
                %v524 = vld [vmem:[%s518 + $0x10] sm:$0xff]
                %525 = vst [vmem:[%s519 + $0x20] sm:$0xff] %v524
                %v526 = vld [vmem:[%s518 + $0x18] sm:$0xff]
                %527 = vst [vmem:[%s519 + $0x28] sm:$0xff] %v526
              $region83: #{_forward.7} parent=77 // loop_footer
                %s517 = sadd.s32 1, %s513
              $region84: #{_forward.7} parent=77 // loop_footer_branch
                %512 = sbr.rel target = $region80
              $region85: #{_forward.7} parent=77 // loop_exit
                _
            $region78: #{_forward.7} parent=73 // pred_fallthru
              _
            // Predicated region
            $region86: #{_forward.7} parent=73 // pred_check
              _
            $region87: #{_forward.7} parent=73 // pred_check_branch
              %529 = sbr.rel target = $region89
            $region88: #{_forward.7} parent=73 // pred_region
              _
            $region89: #{_forward.7} parent=73 // pred_fallthru
              _
          $region74: #{_forward.7} parent=69 // pred_fallthru
            _
          %530 = vnop
        $region70: #{_forward.7} parent=61 // pred_fallthru
          _
        // Predicated region
        $region90: #{_forward.7} parent=61 // pred_check
          %p531 = pneg %p107
        $region91: #{_forward.7} parent=61 // pred_check_branch
          %533 = sbr.rel (%p531) target = $region93
        $region92: #{_forward.7} parent=61 // pred_region
          _
        $region93: #{_forward.7} parent=61 // pred_fallthru
          _
        // Predicated region
        $region94: #{_forward.7} parent=61 // pred_check
          %p534 = pneg %p133
        $region95: #{_forward.7} parent=61 // pred_check_branch
          %536 = sbr.rel (%p534) target = $region97
        $region96: #{_forward.7} parent=61 // pred_region
          _
        $region97: #{_forward.7} parent=61 // pred_fallthru
          _
      $region62: #{_forward.7} parent=5 // pred_fallthru
        _
      %p537 = scmp.le.s32.totalorder 2, %s11
      // Predicated region
      $region98: #{_forward.7} parent=5 // pred_check
        %p538 = pneg %p537
      $region99: #{_forward.7} parent=5 // pred_check_branch
        %540 = sbr.rel (%p538) target = $region101
      $region100: #{_forward.7} parent=5 // pred_region
        %s541 = ssub.s32 %s11, 2
        // Predicated region
        $region102: #{_forward.7} parent=100 // pred_check
          %p542 = pneg %p87
        $region103: #{_forward.7} parent=100 // pred_check_branch
          %544 = sbr.rel (%p542) target = $region105
        $region104: #{_forward.7} parent=100 // pred_region
          %s545 = sand.u32 %s72, 1
          %s546 = sand.u32 %s72, 1
          %s547 = smul.addr %s546, 32
          %s548 = scalar_lea.vmem [#allocation3], %s547
        $region105: #{_forward.7} parent=100 // pred_fallthru
          _
        // Predicated region
        $region106: #{_forward.7} parent=100 // pred_check
          %p549 = pneg %p113
        $region107: #{_forward.7} parent=100 // pred_check_branch
          %551 = sbr.rel (%p549) target = $region109
        $region108: #{_forward.7} parent=100 // pred_region
          %p552 = scmp.lt.s32.totalorder %s17, 1
          %s553 = scalar_select %p552, %s17, 1
          %s554 = smul.addr %s553, 2
          %s555 = smul.addr %s554, 8
          %s556 = scalar_lea.vmem %s3, %s555
        $region109: #{_forward.7} parent=100 // pred_fallthru
          _
        // Predicated region
        $region110: #{_forward.7} parent=100 // pred_check
          %p557 = pneg %p139
        $region111: #{_forward.7} parent=100 // pred_check_branch
          %559 = sbr.rel (%p557) target = $region113
        $region112: #{_forward.7} parent=100 // pred_region
          %p560 = scmp.lt.s32.totalorder %s17, 1
          %s561 = scalar_select %p560, %s17, 1
          %s562 = smul.addr %s561, 2
          %s563 = smul.addr %s562, 8
          %s564 = scalar_lea.vmem %s4, %s563
        $region113: #{_forward.7} parent=100 // pred_fallthru
          _
      $region101: #{_forward.7} parent=5 // pred_fallthru
        _
    $region6: #{_forward.7} parent=1 // loop_footer
      %s15 = sadd.s32 1, %s11
    $region7: #{_forward.7} parent=1 // loop_footer_branch
      %10 = sbr.rel target = $region3
    $region8: #{_forward.7} parent=1 // loop_exit
      _

// kernel: _forward.8
$region0: #{_forward.8}
  #allocation0 [shape = 'u32[]', space=smem, size = 0x4, offset = 0x4, fixed_abs, tag = 'smem constant byte address 0x4 - core index']
  #allocation1 [shape = 'u32[144,128]{1,0:T(1,128)}', space=vmem, size = 0x12000, scoped, tag = 'internal scratch']
  %s0 = inlined_call_operand.vmem [shape: f32[16,1], index: 0, kind: input, shape index: {}]
  %s1 = inlined_call_operand.vmem [shape: f32[16,1], index: 1, kind: input, shape index: {}]
  %s2 = inlined_call_operand.vmem [shape: f32[16,512], index: 2, kind: input, shape index: {}]
  %s3 = inlined_call_operand.vmem [shape: bf16[16,512], index: 3, kind: output, shape index: {}]
  %s4 = sld [smem:[#allocation0]]
  $region102: #{_forward.8} parent=0
    _
  %s6 = ssub.s32 1, %s4
  %s7 = scalar_select 0, %s6, %s4
  $region1: #{_forward.8} parent=0
    #allocation2 [shape = 'u8[32768]{0}', space=vmem, size = 0x8000, scoped, tag = 'input window, operand 2']
    #allocation3 [shape = 'u8[16384]{0}', space=vmem, size = 0x4000, scoped, tag = 'output window, operand 0']
    loop: start=0, step=1, limit=4
    $region2: #{_forward.8} parent=1 // loop_pre_header
      _
    $region3: #{_forward.8} parent=1 // loop_header
      %s9 = sphi 0, %s13
      %p10 = scmp.ge.s32.totalorder %s9, 4
      %s17 = sphi 0, %s17
      %s19 = sphi 0, %s17
      %s20 = sphi 0, %s19
      %s34 = sphi 0, %s20
      %s38 = sphi 0, %s38
      %s40 = sphi 0, %s38
      %s41 = sphi 0, %s40
      %s55 = sphi 0, %s41
      %s61 = sphi 0, %s63
      %s64 = sphi 0, %s61
      %s65 = sphi 0, %s64
      %s81 = sphi 0, %s65
      %s87 = sphi 0, %s89
      %s90 = sphi 0, %s87
      %s91 = sphi 0, %s90
      %s107 = sphi 0, %s91
    $region4: #{_forward.8} parent=1 // loop_header_branch
      %12 = sbr.rel (%p10) target = $region8
    $region5: #{_forward.8} parent=1 // loop_body
      %s14 = ssub.s32 %s9, 1
      %s15 = ssub.s32 %s9, 2
      %s16 = sadd.s32 %s9, 1
      %s18 = sadd.s32 %s17, 1
      %p21 = scmp.eq.s32.totalorder %s9, 1
      %p22 = scmp.ne.s32.totalorder %s17, %s19
      %p23 = scmp.eq.s32.totalorder %s9, 0
      %p24 = por %p22, %p23
      %p25 = scmp.ne.s32.totalorder %s17, %s19
      %p26 = scmp.eq.s32.totalorder %s14, 1
      %p27 = por %p25, %p26
      %p28 = scmp.ne.s32.totalorder %s19, %s20
      %p29 = scmp.eq.s32.totalorder %s14, 0
      %p30 = por %p28, %p29
      %p31 = scmp.ne.s32.totalorder %s19, %s20
      %p32 = scmp.eq.s32.totalorder %s15, 1
      %p33 = por %p31, %p32
      %p35 = scmp.ne.s32.totalorder %s20, %s34
      %p36 = scmp.eq.s32.totalorder %s15, 0
      %p37 = por %p35, %p36
      %s39 = sadd.s32 %s38, 1
      %p42 = scmp.eq.s32.totalorder %s9, 1
      %p43 = scmp.ne.s32.totalorder %s38, %s40
      %p44 = scmp.eq.s32.totalorder %s9, 0
      %p45 = por %p43, %p44
      %p46 = scmp.ne.s32.totalorder %s38, %s40
      %p47 = scmp.eq.s32.totalorder %s14, 1
      %p48 = por %p46, %p47
      %p49 = scmp.ne.s32.totalorder %s40, %s41
      %p50 = scmp.eq.s32.totalorder %s14, 0
      %p51 = por %p49, %p50
      %p52 = scmp.ne.s32.totalorder %s40, %s41
      %p53 = scmp.eq.s32.totalorder %s15, 1
      %p54 = por %p52, %p53
      %p56 = scmp.ne.s32.totalorder %s41, %s55
      %p57 = scmp.eq.s32.totalorder %s15, 0
      %p58 = por %p56, %p57
      %s59 = ssub.s32 %s9, %s16
      %p60 = scmp.eq.s32.totalorder %s59, 0
      %s62 = sadd.s32 %s61, 1
      %s63 = scalar_select %p60, %s61, %s62
      %p66 = pneg %p60
      %p67 = scmp.eq.s32.totalorder %s9, 1
      %p68 = por %p66, %p67
      %p69 = scmp.ne.s32.totalorder %s61, %s64
      %p70 = scmp.eq.s32.totalorder %s9, 0
      %p71 = por %p69, %p70
      %p72 = scmp.ne.s32.totalorder %s61, %s64
      %p73 = scmp.eq.s32.totalorder %s14, 1
      %p74 = por %p72, %p73
      %p75 = scmp.ne.s32.totalorder %s64, %s65
      %p76 = scmp.eq.s32.totalorder %s14, 0
      %p77 = por %p75, %p76
      %p78 = scmp.ne.s32.totalorder %s64, %s65
      %p79 = scmp.eq.s32.totalorder %s15, 1
      %p80 = por %p78, %p79
      %p82 = scmp.ne.s32.totalorder %s65, %s81
      %p83 = scmp.eq.s32.totalorder %s15, 0
      %p84 = por %p82, %p83
      %s85 = ssub.s32 %s9, %s16
      %p86 = scmp.eq.s32.totalorder %s85, 0
      %s88 = sadd.s32 %s87, 1
      %s89 = scalar_select %p86, %s87, %s88
      %p92 = pneg %p86
      %p93 = scmp.eq.s32.totalorder %s9, 1
      %p94 = por %p92, %p93
      %p95 = scmp.ne.s32.totalorder %s87, %s90
      %p96 = scmp.eq.s32.totalorder %s9, 0
      %p97 = por %p95, %p96
      %p98 = scmp.ne.s32.totalorder %s87, %s90
      %p99 = scmp.eq.s32.totalorder %s14, 1
      %p100 = por %p98, %p99
      %p101 = scmp.ne.s32.totalorder %s90, %s91
      %p102 = scmp.eq.s32.totalorder %s14, 0
      %p103 = por %p101, %p102
      %p104 = scmp.ne.s32.totalorder %s90, %s91
      %p105 = scmp.eq.s32.totalorder %s15, 1
      %p106 = por %p104, %p105
      %p108 = scmp.ne.s32.totalorder %s91, %s107
      %p109 = scmp.eq.s32.totalorder %s15, 0
      %p110 = por %p108, %p109
      %p111 = scmp.le.s32.totalorder 1, %s9
      %p112 = scmp.lt.s32.totalorder %s9, 3
      %p113 = pnand %p111, %p112
      %p114 = pneg %p113
      // Predicated region
      $region9: #{_forward.8} parent=5 // pred_check
        _
      $region10: #{_forward.8} parent=5 // pred_check_branch
        %116 = sbr.rel (%p113) target = $region12
      $region11: #{_forward.8} parent=5 // pred_region
        %s117 = ssub.s32 %s9, 1
        // Predicated region
        $region13: #{_forward.8} parent=11 // pred_check
          %p118 = pneg %p30
        $region14: #{_forward.8} parent=11 // pred_check_branch
          %120 = sbr.rel (%p118) target = $region16
        $region15: #{_forward.8} parent=11 // pred_region
          _
        $region16: #{_forward.8} parent=11 // pred_fallthru
          _
        // Predicated region
        $region17: #{_forward.8} parent=11 // pred_check
          %p121 = pneg %p51
        $region18: #{_forward.8} parent=11 // pred_check_branch
          %123 = sbr.rel (%p121) target = $region20
        $region19: #{_forward.8} parent=11 // pred_region
          _
        $region20: #{_forward.8} parent=11 // pred_fallthru
          _
      $region12: #{_forward.8} parent=5 // pred_fallthru
        _
      %p124 = scmp.lt.s32.totalorder %s9, 2
      // Predicated region
      $region21: #{_forward.8} parent=5 // pred_check
        %p125 = pneg %p124
      $region22: #{_forward.8} parent=5 // pred_check_branch
        %127 = sbr.rel (%p125) target = $region24
      $region23: #{_forward.8} parent=5 // pred_region
        // Predicated region
        $region25: #{_forward.8} parent=23 // pred_check
          %p128 = pneg %p71
        $region26: #{_forward.8} parent=23 // pred_check_branch
          %130 = sbr.rel (%p128) target = $region28
        $region27: #{_forward.8} parent=23 // pred_region
          %s131 = sand.u32 %s61, 1
          %s132 = sand.u32 %s61, 1
          %s133 = smul.addr %s132, 32
          %s134 = scalar_lea.vmem [#allocation2], %s133
          %s135 = smul.u32 2, %s9
          %s136 = smul.addr %s135, 8
          %s137 = scalar_lea.vmem %s2, %s136
          // Predicated region
          $region29: #{_forward.8} parent=27 // pred_check
            _
          $region30: #{_forward.8} parent=27 // pred_check_branch
            %139 = sbr.rel (0) target = $region32
          $region31: #{_forward.8} parent=27 // pred_region
            // Predicated region
            $region33: #{_forward.8} parent=31 // pred_check
              _
            $region34: #{_forward.8} parent=31 // pred_check_branch
              %141 = sbr.rel (0) target = $region36
            $region35: #{_forward.8} parent=31 // pred_region
              loop: start=0, step=1, limit=1
              $region37: #{_forward.8} parent=35 // loop_pre_header
                _
              $region38: #{_forward.8} parent=35 // loop_header
                %s143 = sphi 0, %s147
                %p144 = scmp.ge.s32.totalorder %s143, 1
                %s148 = sphi %s137, %s137
                %s149 = sphi %s134, %s134
              $region39: #{_forward.8} parent=35 // loop_header_branch
                %146 = sbr.rel (%p144) target = $region43
              $region40: #{_forward.8} parent=35 // loop_body
                %v150 = vld [vmem:[%s148] sm:$0xff]
                %151 = vst [vmem:[%s149] sm:$0xff] %v150
                %v152 = vld [vmem:[%s148 + $0x8] sm:$0xff]
                %153 = vst [vmem:[%s149 + $0x8] sm:$0xff] %v152
                %v154 = vld [vmem:[%s148 + $0x20] sm:$0xff]
                %155 = vst [vmem:[%s149 + $0x10] sm:$0xff] %v154
                %v156 = vld [vmem:[%s148 + $0x28] sm:$0xff]
                %157 = vst [vmem:[%s149 + $0x18] sm:$0xff] %v156
              $region41: #{_forward.8} parent=35 // loop_footer
                %s147 = sadd.s32 1, %s143
              $region42: #{_forward.8} parent=35 // loop_footer_branch
                %142 = sbr.rel target = $region38
              $region43: #{_forward.8} parent=35 // loop_exit
                _
            $region36: #{_forward.8} parent=31 // pred_fallthru
              _
            // Predicated region
            $region44: #{_forward.8} parent=31 // pred_check
              _
            $region45: #{_forward.8} parent=31 // pred_check_branch
              %159 = sbr.rel target = $region47
            $region46: #{_forward.8} parent=31 // pred_region
              _
            $region47: #{_forward.8} parent=31 // pred_fallthru
              _
          $region32: #{_forward.8} parent=27 // pred_fallthru
            _
          %160 = vnop
        $region28: #{_forward.8} parent=23 // pred_fallthru
          _
      $region24: #{_forward.8} parent=5 // pred_fallthru
        _
      %p161 = scmp.le.s32.totalorder 1, %s9
      %p162 = scmp.lt.s32.totalorder %s9, 3
      %p163 = pnand %p161, %p162
      %p164 = pneg %p163
      // Predicated region
      $region48: #{_forward.8} parent=5 // pred_check
        _
      $region49: #{_forward.8} parent=5 // pred_check_branch
        %166 = sbr.rel (%p163) target = $region51
      $region50: #{_forward.8} parent=5 // pred_region
        %s167 = ssub.s32 %s9, 1
        %s168 = sand.u32 %s64, 1
        %s169 = sand.u32 %s64, 1
        %s170 = smul.addr %s169, 32
        %s171 = scalar_lea.vmem [#allocation2], %s170
        // Predicated region
        $region52: #{_forward.8} parent=50 // pred_check
          %p172 = pneg %p77
        $region53: #{_forward.8} parent=50 // pred_check_branch
          %174 = sbr.rel (%p172) target = $region55
        $region54: #{_forward.8} parent=50 // pred_region
          _
        $region55: #{_forward.8} parent=50 // pred_fallthru
          _
        %p175 = pneg %p30
        %p176 = pneg %p27
        %p177 = pneg %p51
        %p178 = pneg %p48
        %s179 = sand.u32 %s64, 1
        %s180 = sand.u32 %s64, 1
        %s181 = smul.addr %s180, 32
        %s182 = scalar_lea.vmem [#allocation2], %s181
        %p183 = pneg %p77
        %p184 = pneg %p74
        %p185 = pneg %p103
        %p186 = pneg %p100
        %s187 = sand.u32 %s90, 1
        %s188 = sand.u32 %s90, 1
        %s189 = smul.addr %s188, 16
        %s190 = scalar_lea.vmem [#allocation3], %s189
        %s191 = smul.u32 2, %s14
        %s192 = smul.u32 2, %s14
        %v193 = vld [vmem:[%s171] sm:$0xff]
        %v194 = vld [vmem:[%s171 + $0x8] sm:$0xff]
        %v195 = vld [vmem:[%s171 + $0x10] sm:$0xff]
        %v196 = vld [vmem:[%s171 + $0x18] sm:$0xff]
        %v197 = vld [vmem:[%s0] sm:$0xff]
        %v198 = vld [vmem:[%s0 + $0x8] sm:$0xff]
        %200 = vset.pattern.permute.xlu0 0
        %201 = vperm.xlu0 %200, %v197
        %v202 = vpop.permute.xlu0 %201
        %205 = vset.pattern.permute.xlu0 0
        %206 = vperm.xlu0 %205, %v198
        %v207 = vpop.permute.xlu0 %206
        %v209 = vmul.f32 %v193, %v202
        %v210 = vmul.f32 %v194, %v202
        %v211 = vmul.f32 %v195, %v207
        %v212 = vmul.f32 %v196, %v207
        %v213 = vld [vmem:[%s1] sm:$0xff]
        %v214 = vld [vmem:[%s1 + $0x8] sm:$0xff]
        %216 = vset.pattern.permute.xlu0 0
        %217 = vperm.xlu0 %216, %v213
        %v218 = vpop.permute.xlu0 %217
        %221 = vset.pattern.permute.xlu0 0
        %222 = vperm.xlu0 %221, %v214
        %v223 = vpop.permute.xlu0 %222
        %v225 = vadd.f32 %v209, %v218
        %v226 = vadd.f32 %v210, %v218
        %v227 = vadd.f32 %v211, %v223
        %v228 = vadd.f32 %v212, %v223
        %vm229 = vcmp.ge.f32.partialorder %v225, 0.0
        %vm230 = vcmp.ge.f32.partialorder %v226, 0.0
        %vm231 = vcmp.ge.f32.partialorder %v227, 0.0
        %vm232 = vcmp.ge.f32.partialorder %v228, 0.0
        %v233 = vmul.f32 %v225, 0.2
        %v234 = vmul.f32 %v226, 0.2
        %v235 = vmul.f32 %v227, 0.2
        %v236 = vmul.f32 %v228, 0.2
        %v237 = vsel %vm229, %v225, %v233
        %v238 = vsel %vm230, %v226, %v234
        %v239 = vsel %vm231, %v227, %v235
        %v240 = vsel %vm232, %v228, %v236
        %v241 = vpack.c.bf16 %v239, %v237
        %v242 = vpack.c.bf16 %v240, %v238
        %v245 = vunpack.c.l.b16 %v241
        %v246 = vunpack.c.l.b16 %v242
        %v247 = vunpack.c.h.b16 %v241
        %v248 = vunpack.c.h.b16 %v242
        %v249 = vpack.c.b16 %v246, %v245
        %v250 = vpack.c.b16 %v248, %v247
        %253 = vst [vmem:[%s190] sm:$0xff] %v249
        %254 = vst [vmem:[%s190 + $0x8] sm:$0xff] %v250
        %s255 = sand.u32 %s90, 1
        %s256 = sand.u32 %s90, 1
        %s257 = smul.addr %s256, 16
        %s258 = scalar_lea.vmem [#allocation3], %s257
        // Predicated region
        $region56: #{_forward.8} parent=50 // pred_check
          %p259 = pneg %p100
        $region57: #{_forward.8} parent=50 // pred_check_branch
          %261 = sbr.rel (%p259) target = $region59
        $region58: #{_forward.8} parent=50 // pred_region
          %s262 = smul.u32 2, %s14
          %s263 = smul.addr %s262, 4
          %s264 = scalar_lea.vmem %s3, %s263
          // Predicated region
          $region60: #{_forward.8} parent=58 // pred_check
            _
          $region61: #{_forward.8} parent=58 // pred_check_branch
            %266 = sbr.rel (0) target = $region63
          $region62: #{_forward.8} parent=58 // pred_region
            // Predicated region
            $region64: #{_forward.8} parent=62 // pred_check
              _
            $region65: #{_forward.8} parent=62 // pred_check_branch
              %268 = sbr.rel (0) target = $region67
            $region66: #{_forward.8} parent=62 // pred_region
              // Predicated region
              $region79: #{_forward.8} parent=66 // pred_check
                _
              $region80: #{_forward.8} parent=66 // pred_check_branch
                %286 = sbr.rel (0) target = $region82
              $region81: #{_forward.8} parent=66 // pred_region
                loop: start=0, step=1, limit=1
                $region83: #{_forward.8} parent=81 // loop_pre_header
                  _
                $region84: #{_forward.8} parent=81 // loop_header
                  %s288 = sphi 0, %s292
                  %p289 = scmp.ge.s32.totalorder %s288, 1
                  %s293 = sphi %s258, %s258
                  %s294 = sphi %s264, %s264
                $region85: #{_forward.8} parent=81 // loop_header_branch
                  %291 = sbr.rel (%p289) target = $region89
                $region86: #{_forward.8} parent=81 // loop_body
                  %v295 = vld [vmem:[%s293] sm:$0xff]
                  %296 = vst [vmem:[%s294] sm:$0xff] %v295
                  %v297 = vld [vmem:[%s293 + $0x8] sm:$0xff]
                  %298 = vst [vmem:[%s294 + $0x10] sm:$0xff] %v297
                $region87: #{_forward.8} parent=81 // loop_footer
                  %s292 = sadd.s32 1, %s288
                $region88: #{_forward.8} parent=81 // loop_footer_branch
                  %287 = sbr.rel target = $region84
                $region89: #{_forward.8} parent=81 // loop_exit
                  _
              $region82: #{_forward.8} parent=66 // pred_fallthru
                _
              // Predicated region
              $region90: #{_forward.8} parent=66 // pred_check
                _
              $region91: #{_forward.8} parent=66 // pred_check_branch
                %300 = sbr.rel target = $region93
              $region92: #{_forward.8} parent=66 // pred_region
                _
              $region93: #{_forward.8} parent=66 // pred_fallthru
                _
            $region67: #{_forward.8} parent=62 // pred_fallthru
              _
            // Predicated region
            $region68: #{_forward.8} parent=62 // pred_check
              _
            $region69: #{_forward.8} parent=62 // pred_check_branch
              %270 = sbr.rel target = $region71
            $region70: #{_forward.8} parent=62 // pred_region
              %s272 = ssub.s32 256, 1
              loop: start=0, step=1, limit=1
              $region72: #{_forward.8} parent=70 // loop_pre_header
                _
              $region73: #{_forward.8} parent=70 // loop_header
                %s274 = sphi 0, %s278
                %p275 = scmp.ge.s32.totalorder %s274, 1
                %s279 = sphi %s258, %s258
                %s280 = sphi %s264, %s264
              $region74: #{_forward.8} parent=70 // loop_header_branch
                %277 = sbr.rel (%p275) target = $region78
              $region75: #{_forward.8} parent=70 // loop_body
                %v281 = vld [vmem:[%s279] sm:%s272]
                %282 = vst [vmem:[%s280] sm:%s272] %v281
                %v283 = vld [vmem:[%s279 + $0x8] sm:%s272]
                %284 = vst [vmem:[%s280 + $0x10] sm:%s272] %v283
              $region76: #{_forward.8} parent=70 // loop_footer
                %s278 = sadd.s32 1, %s274
              $region77: #{_forward.8} parent=70 // loop_footer_branch
                %273 = sbr.rel target = $region73
              $region78: #{_forward.8} parent=70 // loop_exit
                _
            $region71: #{_forward.8} parent=62 // pred_fallthru
              _
          $region63: #{_forward.8} parent=58 // pred_fallthru
            _
          %301 = vnop
        $region59: #{_forward.8} parent=50 // pred_fallthru
          _
      $region51: #{_forward.8} parent=5 // pred_fallthru
        _
      %p302 = scmp.le.s32.totalorder 2, %s9
      // Predicated region
      $region94: #{_forward.8} parent=5 // pred_check
        %p303 = pneg %p302
      $region95: #{_forward.8} parent=5 // pred_check_branch
        %305 = sbr.rel (%p303) target = $region97
      $region96: #{_forward.8} parent=5 // pred_region
        %s306 = ssub.s32 %s9, 2
        // Predicated region
        $region98: #{_forward.8} parent=96 // pred_check
          %p307 = pneg %p106
        $region99: #{_forward.8} parent=96 // pred_check_branch
          %309 = sbr.rel (%p307) target = $region101
        $region100: #{_forward.8} parent=96 // pred_region
          %s310 = sand.u32 %s91, 1
          %s311 = sand.u32 %s91, 1
          %s312 = smul.addr %s311, 16
          %s313 = scalar_lea.vmem [#allocation3], %s312
        $region101: #{_forward.8} parent=96 // pred_fallthru
          _
      $region97: #{_forward.8} parent=5 // pred_fallthru
        _
    $region6: #{_forward.8} parent=1 // loop_footer
      %s13 = sadd.s32 1, %s9
    $region7: #{_forward.8} parent=1 // loop_footer_branch
      %8 = sbr.rel target = $region3
    $region8: #{_forward.8} parent=1 // loop_exit
      _

// kernel: _forward.9
$region0: #{_forward.9}
  #allocation0 [shape = 'u32[]', space=smem, size = 0x4, offset = 0x4, fixed_abs, tag = 'smem constant byte address 0x4 - core index']
  #allocation1 [shape = 'u32[144,128]{1,0:T(1,128)}', space=vmem, size = 0x12000, scoped, tag = 'internal scratch']
  %s0 = inlined_call_operand.vmem [shape: bf16[32,256], index: 0, kind: input, shape index: {}]
  %s1 = inlined_call_operand.vmem [shape: bf16[256,128], index: 1, kind: input, shape index: {}]
  %s2 = inlined_call_operand.vmem [shape: f32[32,1], index: 2, kind: input, shape index: {}]
  %s3 = inlined_call_operand.vmem [shape: f32[32,1], index: 3, kind: input, shape index: {}]
  %s4 = inlined_call_operand.vmem [shape: bf16[32,128], index: 4, kind: output, shape index: {}]
  %s5 = sld [smem:[#allocation0]]
  $region26: #{_forward.9} parent=0
    _
  %s7 = ssub.s32 1, %s5
  %s8 = scalar_select 0, %s7, %s5
  // Predicated region
  $region2: #{_forward.9} parent=0 // pred_check
    _
  $region3: #{_forward.9} parent=0 // pred_check_branch
    %10 = sbr.rel (0) target = $region5
  $region4: #{_forward.9} parent=0 // pred_region
    _
  $region5: #{_forward.9} parent=0 // pred_fallthru
    _
  // Predicated region
  $region6: #{_forward.9} parent=0 // pred_check
    _
  $region7: #{_forward.9} parent=0 // pred_check_branch
    %12 = sbr.rel (0) target = $region9
  $region8: #{_forward.9} parent=0 // pred_region
    _
  $region9: #{_forward.9} parent=0 // pred_fallthru
    _
  // Predicated region
  $region10: #{_forward.9} parent=0 // pred_check
    _
  $region11: #{_forward.9} parent=0 // pred_check_branch
    %14 = sbr.rel (0) target = $region13
  $region12: #{_forward.9} parent=0 // pred_region
    _
  $region13: #{_forward.9} parent=0 // pred_fallthru
    _
  // Predicated region
  $region14: #{_forward.9} parent=0 // pred_check
    _
  $region15: #{_forward.9} parent=0 // pred_check_branch
    %16 = sbr.rel (0) target = $region17
  $region16: #{_forward.9} parent=0 // pred_region
    _
  $region17: #{_forward.9} parent=0 // pred_fallthru
    _
  %v18 = vld [vmem:[%s0] sm:$0xff]
  %v19 = vld [vmem:[%s0 + $0x8] sm:$0xff]
  %v20 = vld [vmem:[%s0 + $0x10] sm:$0xff]
  %v21 = vld [vmem:[%s0 + $0x18] sm:$0xff]
  %v22 = vld [vmem:[%s1] sm:$0xf]
  %v23 = vld [vmem:[%s1 + $0x4] sm:$0xf]
  %v24 = vld [vmem:[%s1 + $0x8] sm:$0xf]
  %v25 = vld [vmem:[%s1 + $0xc] sm:$0xf]
  %v26 = vld [vmem:[%s1 + $0x10] sm:$0xf]
  %v27 = vld [vmem:[%s1 + $0x14] sm:$0xf]
  %v28 = vld [vmem:[%s1 + $0x18] sm:$0xf]
  %v29 = vld [vmem:[%s1 + $0x1c] sm:$0xf]
  %v30 = vld [vmem:[%s1 + $0x20] sm:$0xf]
  %v31 = vld [vmem:[%s1 + $0x24] sm:$0xf]
  %v32 = vld [vmem:[%s1 + $0x28] sm:$0xf]
  %v33 = vld [vmem:[%s1 + $0x2c] sm:$0xf]
  %v34 = vld [vmem:[%s1 + $0x30] sm:$0xf]
  %v35 = vld [vmem:[%s1 + $0x34] sm:$0xf]
  %v36 = vld [vmem:[%s1 + $0x38] sm:$0xf]
  %v37 = vld [vmem:[%s1 + $0x3c] sm:$0xf]
  %v38 = vld [vmem:[%s1 + $0x40] sm:$0xf]
  %v39 = vld [vmem:[%s1 + $0x44] sm:$0xf]
  %v40 = vld [vmem:[%s1 + $0x48] sm:$0xf]
  %v41 = vld [vmem:[%s1 + $0x4c] sm:$0xf]
  %v42 = vld [vmem:[%s1 + $0x50] sm:$0xf]
  %v43 = vld [vmem:[%s1 + $0x54] sm:$0xf]
  %v44 = vld [vmem:[%s1 + $0x58] sm:$0xf]
  %v45 = vld [vmem:[%s1 + $0x5c] sm:$0xf]
  %v46 = vld [vmem:[%s1 + $0x60] sm:$0xf]
  %v47 = vld [vmem:[%s1 + $0x64] sm:$0xf]
  %v48 = vld [vmem:[%s1 + $0x68] sm:$0xf]
  %v49 = vld [vmem:[%s1 + $0x6c] sm:$0xf]
  %v50 = vld [vmem:[%s1 + $0x70] sm:$0xf]
  %v51 = vld [vmem:[%s1 + $0x74] sm:$0xf]
  %v52 = vld [vmem:[%s1 + $0x78] sm:$0xf]
  %v53 = vld [vmem:[%s1 + $0x7c] sm:$0xf]
  %v58 = vunpack.c.l.b16 %v18
  %v59 = vunpack.c.h.b16 %v18
  %v60 = vunpack.c.l.b16 %v19
  %v61 = vunpack.c.h.b16 %v19
  %v62 = vunpack.c.l.b16 %v20
  %v63 = vunpack.c.h.b16 %v20
  %v64 = vunpack.c.l.b16 %v21
  %v65 = vunpack.c.h.b16 %v21
  %v66 = vpack.c.b16 %v60, %v58
  %v67 = vpack.c.b16 %v61, %v59
  %v68 = vpack.c.b16 %v64, %v62
  %v69 = vpack.c.b16 %v65, %v63
  %v106 = vunpack.c.l.b16 %v22
  %v107 = vunpack.c.l.b16 %v23
  %v108 = vunpack.c.l.b16 %v24
  %v109 = vunpack.c.l.b16 %v25
  %v110 = vunpack.c.l.b16 %v26
  %v111 = vunpack.c.l.b16 %v27
  %v112 = vunpack.c.l.b16 %v28
  %v113 = vunpack.c.l.b16 %v29
  %v114 = vunpack.c.l.b16 %v30
  %v115 = vunpack.c.l.b16 %v31
  %v116 = vunpack.c.l.b16 %v32
  %v117 = vunpack.c.l.b16 %v33
  %v118 = vunpack.c.l.b16 %v34
  %v119 = vunpack.c.l.b16 %v35
  %v120 = vunpack.c.l.b16 %v36
  %v121 = vunpack.c.l.b16 %v37
  %v122 = vunpack.c.l.b16 %v38
  %v123 = vunpack.c.l.b16 %v39
  %v124 = vunpack.c.l.b16 %v40
  %v125 = vunpack.c.l.b16 %v41
  %v126 = vunpack.c.l.b16 %v42
  %v127 = vunpack.c.l.b16 %v43
  %v128 = vunpack.c.l.b16 %v44
  %v129 = vunpack.c.l.b16 %v45
  %v130 = vunpack.c.l.b16 %v46
  %v131 = vunpack.c.l.b16 %v47
  %v132 = vunpack.c.l.b16 %v48
  %v133 = vunpack.c.l.b16 %v49
  %v134 = vunpack.c.l.b16 %v50
  %v135 = vunpack.c.l.b16 %v51
  %v136 = vunpack.c.l.b16 %v52
  %v137 = vunpack.c.l.b16 %v53
  %v138 = vpack.c.b16 %v107, %v106
  %v139 = vpack.c.b16 %v109, %v108
  %v140 = vpack.c.b16 %v111, %v110
  %v141 = vpack.c.b16 %v113, %v112
  %v142 = vpack.c.b16 %v115, %v114
  %v143 = vpack.c.b16 %v117, %v116
  %v144 = vpack.c.b16 %v119, %v118
  %v145 = vpack.c.b16 %v121, %v120
  %v146 = vpack.c.b16 %v123, %v122
  %v147 = vpack.c.b16 %v125, %v124
  %v148 = vpack.c.b16 %v127, %v126
  %v149 = vpack.c.b16 %v129, %v128
  %v150 = vpack.c.b16 %v131, %v130
  %v151 = vpack.c.b16 %v133, %v132
  %v152 = vpack.c.b16 %v135, %v134
  %v153 = vpack.c.b16 %v137, %v136
  %170 = vmatprep.subr.bf16.mxu0 0
  %171 = vmatpush1.bf16.msra.mxu0 %v145
  %172 = vmatprep.subr.bf16.mxu0 0
  %173 = vmatpush1.bf16.msra.mxu0 %v144
  %174 = vmatprep.subr.bf16.mxu0 0
  %175 = vmatpush1.bf16.msra.mxu0 %v143
  %176 = vmatprep.subr.bf16.mxu0 0
  %177 = vmatpush1.bf16.msra.mxu0 %v142
  %178 = vmatprep.subr.bf16.mxu0 0
  %179 = vmatpush1.bf16.msra.mxu0 %v141
  %180 = vmatprep.subr.bf16.mxu0 0
  %181 = vmatpush1.bf16.msra.mxu0 %v140
  %182 = vmatprep.subr.bf16.mxu0 0
  %183 = vmatpush1.bf16.msra.mxu0 %v139
  %184 = vmatprep.subr.bf16.mxu0 0
  %185 = vmatpush1.bf16.msra.mxu0 %v138
  %186 = vmatprep.subr.bf16.mxu0 0
  %187 = vmatpush2.bf16.msra.mxu0 %v153
  %188 = vmatprep.subr.bf16.mxu0 0
  %189 = vmatpush2.bf16.msra.mxu0 %v152
  %190 = vmatprep.subr.bf16.mxu0 0
  %191 = vmatpush2.bf16.msra.mxu0 %v151
  %192 = vmatprep.subr.bf16.mxu0 0
  %193 = vmatpush2.bf16.msra.mxu0 %v150
  %194 = vmatprep.subr.bf16.mxu0 0
  %195 = vmatpush2.bf16.msra.mxu0 %v149
  %196 = vmatprep.subr.bf16.mxu0 0
  %197 = vmatpush2.bf16.msra.mxu0 %v148
  %198 = vmatprep.subr.bf16.mxu0 0
  %199 = vmatpush2.bf16.msra.mxu0 %v147
  %200 = vmatprep.subr.bf16.mxu0 0
  %201 = vmatpush2.bf16.msra.mxu0 %v146
  %202 = vmatprep.mubr.bf16.mxu0 %v67
  %203 = vmatmul.mubr.bf16.gmra.mxu0 %v66
  %v204 = vpop.f32.mrf.mxu0
  %v205 = vadd.f32 0.0, %v204
  %v206 = vpop.f32.mrf.mxu0
  %v207 = vpop.f32.mrf.mxu0
  %v208 = vadd.f32 0.0, %v207
  %v209 = vpop.f32.mrf.mxu0
  %210 = vmatprep.mubr.bf16.mxu0 %v69
  %211 = vmatmul.mubr.bf16.gmra.mxu0 %v68
  %v212 = vpop.f32.mrf.mxu0
  %v213 = vadd.f32 0.0, %v212
  %v214 = vpop.f32.mrf.mxu0
  %v215 = vpop.f32.mrf.mxu0
  %v216 = vadd.f32 0.0, %v215
  %v217 = vpop.f32.mrf.mxu0
  %218 = vdwg.mxu0
  %219 = vadd.xlane.f32.xlu0 %v205
  %v220 = vpop.xlane.xlu0 %219
  %221 = vadd.xlane.f32.xlu0 %v208
  %v222 = vpop.xlane.xlu0 %221
  %223 = vadd.xlane.f32.xlu0 %v213
  %v224 = vpop.xlane.xlu0 %223
  %225 = vadd.xlane.f32.xlu0 %v216
  %v226 = vpop.xlane.xlu0 %225
  %v227 = vrcp.pop 128.0
  %v228 = vmul.f32 %v220, %v227
  %v229 = vmul.f32 %v222, %v227
  %v230 = vmul.f32 %v224, %v227
  %v231 = vmul.f32 %v226, %v227
  %v232 = vmul.f32 %v205, %v205
  %v233 = vmul.f32 %v208, %v208
  %v234 = vmul.f32 %v213, %v213
  %v235 = vmul.f32 %v216, %v216
  %236 = vadd.xlane.f32.xlu0 %v232
  %v237 = vpop.xlane.xlu0 %236
  %238 = vadd.xlane.f32.xlu0 %v233
  %v239 = vpop.xlane.xlu0 %238
  %240 = vadd.xlane.f32.xlu0 %v234
  %v241 = vpop.xlane.xlu0 %240
  %242 = vadd.xlane.f32.xlu0 %v235
  %v243 = vpop.xlane.xlu0 %242
  %v244 = vmul.f32 %v237, %v227
  %v245 = vmul.f32 %v239, %v227
  %v246 = vmul.f32 %v241, %v227
  %v247 = vmul.f32 %v243, %v227
  %v248 = vmul.f32 %v228, %v228
  %v249 = vmul.f32 %v229, %v229
  %v250 = vmul.f32 %v230, %v230
  %v251 = vmul.f32 %v231, %v231
  %v252 = vsub.f32 %v244, %v248
  %v253 = vsub.f32 %v245, %v249
  %v254 = vsub.f32 %v246, %v250
  %v255 = vsub.f32 %v247, %v251
  %v256 = vmax.f32 %v252, 0.0
  %v257 = vmax.f32 %v253, 0.0
  %v258 = vmax.f32 %v254, 0.0
  %v259 = vmax.f32 %v255, 0.0
  %v260 = vadd.f32 %v256, 1e-05
  %v261 = vadd.f32 %v257, 1e-05
  %v262 = vadd.f32 %v258, 1e-05
  %v263 = vadd.f32 %v259, 1e-05
  %v264 = vrsqrt.pop %v260
  %v265 = vrsqrt.pop %v261
  %v266 = vrsqrt.pop %v262
  %v267 = vrsqrt.pop %v263
  %v268 = vld [vmem:[%s2] sm:$0xff]
  %v269 = vld [vmem:[%s2 + $0x8] sm:$0xff]
  %v270 = vld [vmem:[%s2 + $0x10] sm:$0xff]
  %v271 = vld [vmem:[%s2 + $0x18] sm:$0xff]
  %v272 = vmul.f32 %v264, %v268
  %v273 = vmul.f32 %v265, %v269
  %v274 = vmul.f32 %v266, %v270
  %v275 = vmul.f32 %v267, %v271
  %v276 = vsub.f32 %v205, %v228
  %v277 = vsub.f32 %v208, %v229
  %v278 = vsub.f32 %v213, %v230
  %v279 = vsub.f32 %v216, %v231
  %281 = vset.pattern.permute.xlu0 0
  %282 = vperm.xlu0 %281, %v272
  %v283 = vpop.permute.xlu0 %282
  %286 = vset.pattern.permute.xlu0 0
  %287 = vperm.xlu0 %286, %v273
  %v288 = vpop.permute.xlu0 %287
  %291 = vset.pattern.permute.xlu0 0
  %292 = vperm.xlu0 %291, %v274
  %v293 = vpop.permute.xlu0 %292
  %296 = vset.pattern.permute.xlu0 0
  %297 = vperm.xlu0 %296, %v275
  %v298 = vpop.permute.xlu0 %297
  %v300 = vmul.f32 %v276, %v283
  %v301 = vmul.f32 %v277, %v288
  %v302 = vmul.f32 %v278, %v293
  %v303 = vmul.f32 %v279, %v298
  %v304 = vld [vmem:[%s3] sm:$0xff]
  %v305 = vld [vmem:[%s3 + $0x8] sm:$0xff]
  %v306 = vld [vmem:[%s3 + $0x10] sm:$0xff]
  %v307 = vld [vmem:[%s3 + $0x18] sm:$0xff]
  %309 = vset.pattern.permute.xlu0 0
  %310 = vperm.xlu0 %309, %v304
  %v311 = vpop.permute.xlu0 %310
  %314 = vset.pattern.permute.xlu0 0
  %315 = vperm.xlu0 %314, %v305
  %v316 = vpop.permute.xlu0 %315
  %319 = vset.pattern.permute.xlu0 0
  %320 = vperm.xlu0 %319, %v306
  %v321 = vpop.permute.xlu0 %320
  %324 = vset.pattern.permute.xlu0 0
  %325 = vperm.xlu0 %324, %v307
  %v326 = vpop.permute.xlu0 %325
  %v328 = vadd.f32 %v300, %v311
  %v329 = vadd.f32 %v301, %v316
  %v330 = vadd.f32 %v302, %v321
  %v331 = vadd.f32 %v303, %v326
  %vm332 = vcmp.ge.f32.partialorder %v328, 0.0
  %vm333 = vcmp.ge.f32.partialorder %v329, 0.0
  %vm334 = vcmp.ge.f32.partialorder %v330, 0.0
  %vm335 = vcmp.ge.f32.partialorder %v331, 0.0
  %v336 = vmul.f32 %v328, 0.2
  %v337 = vmul.f32 %v329, 0.2
  %v338 = vmul.f32 %v330, 0.2
  %v339 = vmul.f32 %v331, 0.2
  %v340 = vsel %vm332, %v328, %v336
  %v341 = vsel %vm333, %v329, %v337
  %v342 = vsel %vm334, %v330, %v338
  %v343 = vsel %vm335, %v331, %v339
  %v344 = vpack.c.bf16 %v341, %v340
  %v345 = vpack.c.bf16 %v343, %v342
  %v348 = vunpack.c.l.b16 %v344
  %v349 = vunpack.c.h.b16 %v344
  %v350 = vunpack.c.l.b16 %v345
  %v351 = vunpack.c.h.b16 %v345
  %v352 = vpack.c.b16 %v348, %v348
  %v353 = vpack.c.b16 %v349, %v349
  %v354 = vpack.c.b16 %v350, %v350
  %v355 = vpack.c.b16 %v351, %v351
  %360 = vst [vmem:[%s4] sm:$0xf] %v352
  %361 = vst [vmem:[%s4 + $0x4] sm:$0xf] %v353
  %362 = vst [vmem:[%s4 + $0x8] sm:$0xf] %v354
  %363 = vst [vmem:[%s4 + $0xc] sm:$0xf] %v355
  // Predicated region
  $region18: #{_forward.9} parent=0 // pred_check
    _
  $region19: #{_forward.9} parent=0 // pred_check_branch
    %365 = sbr.rel (0) target = $region21
  $region20: #{_forward.9} parent=0 // pred_region
    _
  $region21: #{_forward.9} parent=0 // pred_fallthru
    _
  // Predicated region
  $region22: #{_forward.9} parent=0 // pred_check
    _
  $region23: #{_forward.9} parent=0 // pred_check_branch
    %367 = sbr.rel (0) target = $region25
  $region24: #{_forward.9} parent=0 // pred_region
    _
  $region25: #{_forward.9} parent=0 // pred_fallthru
    _

// kernel: _forward.10
$region0: #{_forward.10}
  #allocation0 [shape = 'u32[]', space=smem, size = 0x4, offset = 0x4, fixed_abs, tag = 'smem constant byte address 0x4 - core index']
  #allocation1 [shape = 'u32[144,128]{1,0:T(1,128)}', space=vmem, size = 0x12000, scoped, tag = 'internal scratch']
  %s0 = inlined_call_operand.vmem [shape: bf16[64,512], index: 0, kind: input, shape index: {}]
  %s1 = inlined_call_operand.vmem [shape: bf16[512,32], index: 1, kind: input, shape index: {}]
  %s2 = inlined_call_operand.vmem [shape: f32[64,1], index: 2, kind: input, shape index: {}]
  %s3 = inlined_call_operand.vmem [shape: f32[64,1], index: 3, kind: input, shape index: {}]
  %s4 = inlined_call_operand.vmem [shape: bf16[64,32], index: 4, kind: output, shape index: {}]
  %s5 = sld [smem:[#allocation0]]
  $region26: #{_forward.10} parent=0
    _
  %s7 = ssub.s32 1, %s5
  %s8 = scalar_select 0, %s7, %s5
  // Predicated region
  $region2: #{_forward.10} parent=0 // pred_check
    _
  $region3: #{_forward.10} parent=0 // pred_check_branch
    %10 = sbr.rel (0) target = $region5
  $region4: #{_forward.10} parent=0 // pred_region
    _
  $region5: #{_forward.10} parent=0 // pred_fallthru
    _
  // Predicated region
  $region6: #{_forward.10} parent=0 // pred_check
    _
  $region7: #{_forward.10} parent=0 // pred_check_branch
    %12 = sbr.rel (0) target = $region9
  $region8: #{_forward.10} parent=0 // pred_region
    _
  $region9: #{_forward.10} parent=0 // pred_fallthru
    _
  // Predicated region
  $region10: #{_forward.10} parent=0 // pred_check
    _
  $region11: #{_forward.10} parent=0 // pred_check_branch
    %14 = sbr.rel (0) target = $region13
  $region12: #{_forward.10} parent=0 // pred_region
    _
  $region13: #{_forward.10} parent=0 // pred_fallthru
    _
  // Predicated region
  $region14: #{_forward.10} parent=0 // pred_check
    _
  $region15: #{_forward.10} parent=0 // pred_check_branch
    %16 = sbr.rel (0) target = $region17
  $region16: #{_forward.10} parent=0 // pred_region
    _
  $region17: #{_forward.10} parent=0 // pred_fallthru
    _
  %v18 = vld [vmem:[%s0] sm:$0xff]
  %v19 = vld [vmem:[%s0 + $0x8] sm:$0xff]
  %v20 = vld [vmem:[%s0 + $0x10] sm:$0xff]
  %v21 = vld [vmem:[%s0 + $0x18] sm:$0xff]
  %v22 = vld [vmem:[%s0 + $0x20] sm:$0xff]
  %v23 = vld [vmem:[%s0 + $0x28] sm:$0xff]
  %v24 = vld [vmem:[%s0 + $0x30] sm:$0xff]
  %v25 = vld [vmem:[%s0 + $0x38] sm:$0xff]
  %v26 = vld [vmem:[%s0 + $0x40] sm:$0xff]
  %v27 = vld [vmem:[%s0 + $0x48] sm:$0xff]
  %v28 = vld [vmem:[%s0 + $0x50] sm:$0xff]
  %v29 = vld [vmem:[%s0 + $0x58] sm:$0xff]
  %v30 = vld [vmem:[%s0 + $0x60] sm:$0xff]
  %v31 = vld [vmem:[%s0 + $0x68] sm:$0xff]
  %v32 = vld [vmem:[%s0 + $0x70] sm:$0xff]
  %v33 = vld [vmem:[%s0 + $0x78] sm:$0xff]
  %v34 = vld [vmem:[%s1] sm:$0xf]
  %v35 = vld [vmem:[%s1 + $0x4] sm:$0xf]
  %v36 = vld [vmem:[%s1 + $0x8] sm:$0xf]
  %v37 = vld [vmem:[%s1 + $0xc] sm:$0xf]
  %v38 = vld [vmem:[%s1 + $0x10] sm:$0xf]
  %v39 = vld [vmem:[%s1 + $0x14] sm:$0xf]
  %v40 = vld [vmem:[%s1 + $0x18] sm:$0xf]
  %v41 = vld [vmem:[%s1 + $0x1c] sm:$0xf]
  %v42 = vld [vmem:[%s1 + $0x20] sm:$0xf]
  %v43 = vld [vmem:[%s1 + $0x24] sm:$0xf]
  %v44 = vld [vmem:[%s1 + $0x28] sm:$0xf]
  %v45 = vld [vmem:[%s1 + $0x2c] sm:$0xf]
  %v46 = vld [vmem:[%s1 + $0x30] sm:$0xf]
  %v47 = vld [vmem:[%s1 + $0x34] sm:$0xf]
  %v48 = vld [vmem:[%s1 + $0x38] sm:$0xf]
  %v49 = vld [vmem:[%s1 + $0x3c] sm:$0xf]
  %v50 = vld [vmem:[%s1 + $0x40] sm:$0xf]
  %v51 = vld [vmem:[%s1 + $0x44] sm:$0xf]
  %v52 = vld [vmem:[%s1 + $0x48] sm:$0xf]
  %v53 = vld [vmem:[%s1 + $0x4c] sm:$0xf]
  %v54 = vld [vmem:[%s1 + $0x50] sm:$0xf]
  %v55 = vld [vmem:[%s1 + $0x54] sm:$0xf]
  %v56 = vld [vmem:[%s1 + $0x58] sm:$0xf]
  %v57 = vld [vmem:[%s1 + $0x5c] sm:$0xf]
  %v58 = vld [vmem:[%s1 + $0x60] sm:$0xf]
  %v59 = vld [vmem:[%s1 + $0x64] sm:$0xf]
  %v60 = vld [vmem:[%s1 + $0x68] sm:$0xf]
  %v61 = vld [vmem:[%s1 + $0x6c] sm:$0xf]
  %v62 = vld [vmem:[%s1 + $0x70] sm:$0xf]
  %v63 = vld [vmem:[%s1 + $0x74] sm:$0xf]
  %v64 = vld [vmem:[%s1 + $0x78] sm:$0xf]
  %v65 = vld [vmem:[%s1 + $0x7c] sm:$0xf]
  %v66 = vld [vmem:[%s1 + $0x80] sm:$0xf]
  %v67 = vld [vmem:[%s1 + $0x84] sm:$0xf]
  %v68 = vld [vmem:[%s1 + $0x88] sm:$0xf]
  %v69 = vld [vmem:[%s1 + $0x8c] sm:$0xf]
  %v70 = vld [vmem:[%s1 + $0x90] sm:$0xf]
  %v71 = vld [vmem:[%s1 + $0x94] sm:$0xf]
  %v72 = vld [vmem:[%s1 + $0x98] sm:$0xf]
  %v73 = vld [vmem:[%s1 + $0x9c] sm:$0xf]
  %v74 = vld [vmem:[%s1 + $0xa0] sm:$0xf]
  %v75 = vld [vmem:[%s1 + $0xa4] sm:$0xf]
  %v76 = vld [vmem:[%s1 + $0xa8] sm:$0xf]
  %v77 = vld [vmem:[%s1 + $0xac] sm:$0xf]
  %v78 = vld [vmem:[%s1 + $0xb0] sm:$0xf]
  %v79 = vld [vmem:[%s1 + $0xb4] sm:$0xf]
  %v80 = vld [vmem:[%s1 + $0xb8] sm:$0xf]
  %v81 = vld [vmem:[%s1 + $0xbc] sm:$0xf]
  %v82 = vld [vmem:[%s1 + $0xc0] sm:$0xf]
  %v83 = vld [vmem:[%s1 + $0xc4] sm:$0xf]
  %v84 = vld [vmem:[%s1 + $0xc8] sm:$0xf]
  %v85 = vld [vmem:[%s1 + $0xcc] sm:$0xf]
  %v86 = vld [vmem:[%s1 + $0xd0] sm:$0xf]
  %v87 = vld [vmem:[%s1 + $0xd4] sm:$0xf]
  %v88 = vld [vmem:[%s1 + $0xd8] sm:$0xf]
  %v89 = vld [vmem:[%s1 + $0xdc] sm:$0xf]
  %v90 = vld [vmem:[%s1 + $0xe0] sm:$0xf]
  %v91 = vld [vmem:[%s1 + $0xe4] sm:$0xf]
  %v92 = vld [vmem:[%s1 + $0xe8] sm:$0xf]
  %v93 = vld [vmem:[%s1 + $0xec] sm:$0xf]
  %v94 = vld [vmem:[%s1 + $0xf0] sm:$0xf]
  %v95 = vld [vmem:[%s1 + $0xf4] sm:$0xf]
  %v96 = vld [vmem:[%s1 + $0xf8] sm:$0xf]
  %v97 = vld [vmem:[%s1 + $0xfc] sm:$0xf]
  %v114 = vunpack.c.l.b16 %v18
  %v115 = vunpack.c.h.b16 %v18
  %v116 = vunpack.c.l.b16 %v19
  %v117 = vunpack.c.h.b16 %v19
  %v118 = vunpack.c.l.b16 %v20
  %v119 = vunpack.c.h.b16 %v20
  %v120 = vunpack.c.l.b16 %v21
  %v121 = vunpack.c.h.b16 %v21
  %v122 = vunpack.c.l.b16 %v22
  %v123 = vunpack.c.h.b16 %v22
  %v124 = vunpack.c.l.b16 %v23
  %v125 = vunpack.c.h.b16 %v23
  %v126 = vunpack.c.l.b16 %v24
  %v127 = vunpack.c.h.b16 %v24
  %v128 = vunpack.c.l.b16 %v25
  %v129 = vunpack.c.h.b16 %v25
  %v130 = vunpack.c.l.b16 %v26
  %v131 = vunpack.c.h.b16 %v26
  %v132 = vunpack.c.l.b16 %v27
  %v133 = vunpack.c.h.b16 %v27
  %v134 = vunpack.c.l.b16 %v28
  %v135 = vunpack.c.h.b16 %v28
  %v136 = vunpack.c.l.b16 %v29
  %v137 = vunpack.c.h.b16 %v29
  %v138 = vunpack.c.l.b16 %v30
  %v139 = vunpack.c.h.b16 %v30
  %v140 = vunpack.c.l.b16 %v31
  %v141 = vunpack.c.h.b16 %v31
  %v142 = vunpack.c.l.b16 %v32
  %v143 = vunpack.c.h.b16 %v32
  %v144 = vunpack.c.l.b16 %v33
  %v145 = vunpack.c.h.b16 %v33
  %v146 = vpack.c.b16 %v118, %v114
  %v147 = vpack.c.b16 %v119, %v115
  %v148 = vpack.c.b16 %v120, %v116
  %v149 = vpack.c.b16 %v121, %v117
  %v150 = vpack.c.b16 %v126, %v122
  %v151 = vpack.c.b16 %v127, %v123
  %v152 = vpack.c.b16 %v128, %v124
  %v153 = vpack.c.b16 %v129, %v125
  %v154 = vpack.c.b16 %v134, %v130
  %v155 = vpack.c.b16 %v135, %v131
  %v156 = vpack.c.b16 %v136, %v132
  %v157 = vpack.c.b16 %v137, %v133
  %v158 = vpack.c.b16 %v142, %v138
  %v159 = vpack.c.b16 %v143, %v139
  %v160 = vpack.c.b16 %v144, %v140
  %v161 = vpack.c.b16 %v145, %v141
  %v242 = vunpack.c.l.b16 %v34
  %v243 = vunpack.c.l.b16 %v35
  %v244 = vunpack.c.l.b16 %v36
  %v245 = vunpack.c.l.b16 %v37
  %v246 = vunpack.c.l.b16 %v38
  %v247 = vunpack.c.l.b16 %v39
  %v248 = vunpack.c.l.b16 %v40
  %v249 = vunpack.c.l.b16 %v41
  %v250 = vunpack.c.l.b16 %v42
  %v251 = vunpack.c.l.b16 %v43
  %v252 = vunpack.c.l.b16 %v44
  %v253 = vunpack.c.l.b16 %v45
  %v254 = vunpack.c.l.b16 %v46
  %v255 = vunpack.c.l.b16 %v47
  %v256 = vunpack.c.l.b16 %v48
  %v257 = vunpack.c.l.b16 %v49
  %v258 = vunpack.c.l.b16 %v50
  %v259 = vunpack.c.l.b16 %v51
  %v260 = vunpack.c.l.b16 %v52
  %v261 = vunpack.c.l.b16 %v53
  %v262 = vunpack.c.l.b16 %v54
  %v263 = vunpack.c.l.b16 %v55
  %v264 = vunpack.c.l.b16 %v56
  %v265 = vunpack.c.l.b16 %v57
  %v266 = vunpack.c.l.b16 %v58
  %v267 = vunpack.c.l.b16 %v59
  %v268 = vunpack.c.l.b16 %v60
  %v269 = vunpack.c.l.b16 %v61
  %v270 = vunpack.c.l.b16 %v62
  %v271 = vunpack.c.l.b16 %v63
  %v272 = vunpack.c.l.b16 %v64
  %v273 = vunpack.c.l.b16 %v65
  %v274 = vunpack.c.l.b16 %v66
  %v275 = vunpack.c.l.b16 %v67
  %v276 = vunpack.c.l.b16 %v68
  %v277 = vunpack.c.l.b16 %v69
  %v278 = vunpack.c.l.b16 %v70
  %v279 = vunpack.c.l.b16 %v71
  %v280 = vunpack.c.l.b16 %v72
  %v281 = vunpack.c.l.b16 %v73
  %v282 = vunpack.c.l.b16 %v74
  %v283 = vunpack.c.l.b16 %v75
  %v284 = vunpack.c.l.b16 %v76
  %v285 = vunpack.c.l.b16 %v77
  %v286 = vunpack.c.l.b16 %v78
  %v287 = vunpack.c.l.b16 %v79
  %v288 = vunpack.c.l.b16 %v80
  %v289 = vunpack.c.l.b16 %v81
  %v290 = vunpack.c.l.b16 %v82
  %v291 = vunpack.c.l.b16 %v83
  %v292 = vunpack.c.l.b16 %v84
  %v293 = vunpack.c.l.b16 %v85
  %v294 = vunpack.c.l.b16 %v86
  %v295 = vunpack.c.l.b16 %v87
  %v296 = vunpack.c.l.b16 %v88
  %v297 = vunpack.c.l.b16 %v89
  %v298 = vunpack.c.l.b16 %v90
  %v299 = vunpack.c.l.b16 %v91
  %v300 = vunpack.c.l.b16 %v92
  %v301 = vunpack.c.l.b16 %v93
  %v302 = vunpack.c.l.b16 %v94
  %v303 = vunpack.c.l.b16 %v95
  %v304 = vunpack.c.l.b16 %v96
  %v305 = vunpack.c.l.b16 %v97
  %v306 = vpack.c.b16 %v243, %v242
  %v307 = vpack.c.b16 %v245, %v244
  %v308 = vpack.c.b16 %v247, %v246
  %v309 = vpack.c.b16 %v249, %v248
  %v310 = vpack.c.b16 %v251, %v250
  %v311 = vpack.c.b16 %v253, %v252
  %v312 = vpack.c.b16 %v255, %v254
  %v313 = vpack.c.b16 %v257, %v256
  %v314 = vpack.c.b16 %v259, %v258
  %v315 = vpack.c.b16 %v261, %v260
  %v316 = vpack.c.b16 %v263, %v262
  %v317 = vpack.c.b16 %v265, %v264
  %v318 = vpack.c.b16 %v267, %v266
  %v319 = vpack.c.b16 %v269, %v268
  %v320 = vpack.c.b16 %v271, %v270
  %v321 = vpack.c.b16 %v273, %v272
  %v322 = vpack.c.b16 %v275, %v274
  %v323 = vpack.c.b16 %v277, %v276
  %v324 = vpack.c.b16 %v279, %v278
  %v325 = vpack.c.b16 %v281, %v280
  %v326 = vpack.c.b16 %v283, %v282
  %v327 = vpack.c.b16 %v285, %v284
  %v328 = vpack.c.b16 %v287, %v286
  %v329 = vpack.c.b16 %v289, %v288
  %v330 = vpack.c.b16 %v291, %v290
  %v331 = vpack.c.b16 %v293, %v292
  %v332 = vpack.c.b16 %v295, %v294
  %v333 = vpack.c.b16 %v297, %v296
  %v334 = vpack.c.b16 %v299, %v298
  %v335 = vpack.c.b16 %v301, %v300
  %v336 = vpack.c.b16 %v303, %v302
  %v337 = vpack.c.b16 %v305, %v304
  %370 = vmatprep.subr.bf16.mxu0 0
  %371 = vmatpush1.bf16.msra.mxu0 %v313
  %372 = vmatprep.subr.bf16.mxu0 0
  %373 = vmatpush1.bf16.msra.mxu0 %v312
  %374 = vmatprep.subr.bf16.mxu0 0
  %375 = vmatpush1.bf16.msra.mxu0 %v311
  %376 = vmatprep.subr.bf16.mxu0 0
  %377 = vmatpush1.bf16.msra.mxu0 %v310
  %378 = vmatprep.subr.bf16.mxu0 0
  %379 = vmatpush1.bf16.msra.mxu0 %v309
  %380 = vmatprep.subr.bf16.mxu0 0
  %381 = vmatpush1.bf16.msra.mxu0 %v308
  %382 = vmatprep.subr.bf16.mxu0 0
  %383 = vmatpush1.bf16.msra.mxu0 %v307
  %384 = vmatprep.subr.bf16.mxu0 0
  %385 = vmatpush1.bf16.msra.mxu0 %v306
  %386 = vmatprep.subr.bf16.mxu0 0
  %387 = vmatpush2.bf16.msra.mxu0 %v321
  %388 = vmatprep.subr.bf16.mxu0 0
  %389 = vmatpush2.bf16.msra.mxu0 %v320
  %390 = vmatprep.subr.bf16.mxu0 0
  %391 = vmatpush2.bf16.msra.mxu0 %v319
  %392 = vmatprep.subr.bf16.mxu0 0
  %393 = vmatpush2.bf16.msra.mxu0 %v318
  %394 = vmatprep.subr.bf16.mxu0 0
  %395 = vmatpush2.bf16.msra.mxu0 %v317
  %396 = vmatprep.subr.bf16.mxu0 0
  %397 = vmatpush2.bf16.msra.mxu0 %v316
  %398 = vmatprep.subr.bf16.mxu0 0
  %399 = vmatpush2.bf16.msra.mxu0 %v315
  %400 = vmatprep.subr.bf16.mxu0 0
  %401 = vmatpush2.bf16.msra.mxu0 %v314
  %402 = vmatprep.mubr.bf16.mxu0 %v147
  %403 = vmatmul.mubr.bf16.gmra.mxu0 %v146
  %v404 = vpop.f32.mrf.mxu0
  %v405 = vadd.f32 0.0, %v404
  %v406 = vpop.f32.mrf.mxu0
  %v407 = vpop.f32.mrf.mxu0
  %v408 = vadd.f32 0.0, %v407
  %v409 = vpop.f32.mrf.mxu0
  %410 = vmatprep.mubr.bf16.mxu0 %v151
  %411 = vmatmul.mubr.bf16.gmra.mxu0 %v150
  %v412 = vpop.f32.mrf.mxu0
  %v413 = vadd.f32 0.0, %v412
  %v414 = vpop.f32.mrf.mxu0
  %v415 = vpop.f32.mrf.mxu0
  %v416 = vadd.f32 0.0, %v415
  %v417 = vpop.f32.mrf.mxu0
  %418 = vmatprep.mubr.bf16.mxu0 %v155
  %419 = vmatmul.mubr.bf16.gmra.mxu0 %v154
  %v420 = vpop.f32.mrf.mxu0
  %v421 = vadd.f32 0.0, %v420
  %v422 = vpop.f32.mrf.mxu0
  %v423 = vpop.f32.mrf.mxu0
  %v424 = vadd.f32 0.0, %v423
  %v425 = vpop.f32.mrf.mxu0
  %426 = vmatprep.mubr.bf16.mxu0 %v159
  %427 = vmatmul.mubr.bf16.gmra.mxu0 %v158
  %v428 = vpop.f32.mrf.mxu0
  %v429 = vadd.f32 0.0, %v428
  %v430 = vpop.f32.mrf.mxu0
  %v431 = vpop.f32.mrf.mxu0
  %v432 = vadd.f32 0.0, %v431
  %v433 = vpop.f32.mrf.mxu0
  %434 = vdwg.mxu0
  %435 = vmatprep.subr.bf16.mxu0 0
  %436 = vmatpush1.bf16.msra.mxu0 %v329
  %437 = vmatprep.subr.bf16.mxu0 0
  %438 = vmatpush1.bf16.msra.mxu0 %v328
  %439 = vmatprep.subr.bf16.mxu0 0
  %440 = vmatpush1.bf16.msra.mxu0 %v327
  %441 = vmatprep.subr.bf16.mxu0 0
  %442 = vmatpush1.bf16.msra.mxu0 %v326
  %443 = vmatprep.subr.bf16.mxu0 0
  %444 = vmatpush1.bf16.msra.mxu0 %v325
  %445 = vmatprep.subr.bf16.mxu0 0
  %446 = vmatpush1.bf16.msra.mxu0 %v324
  %447 = vmatprep.subr.bf16.mxu0 0
  %448 = vmatpush1.bf16.msra.mxu0 %v323
  %449 = vmatprep.subr.bf16.mxu0 0
  %450 = vmatpush1.bf16.msra.mxu0 %v322
  %451 = vmatprep.subr.bf16.mxu0 0
  %452 = vmatpush2.bf16.msra.mxu0 %v337
  %453 = vmatprep.subr.bf16.mxu0 0
  %454 = vmatpush2.bf16.msra.mxu0 %v336
  %455 = vmatprep.subr.bf16.mxu0 0
  %456 = vmatpush2.bf16.msra.mxu0 %v335
  %457 = vmatprep.subr.bf16.mxu0 0
  %458 = vmatpush2.bf16.msra.mxu0 %v334
  %459 = vmatprep.subr.bf16.mxu0 0
  %460 = vmatpush2.bf16.msra.mxu0 %v333
  %461 = vmatprep.subr.bf16.mxu0 0
  %462 = vmatpush2.bf16.msra.mxu0 %v332
  %463 = vmatprep.subr.bf16.mxu0 0
  %464 = vmatpush2.bf16.msra.mxu0 %v331
  %465 = vmatprep.subr.bf16.mxu0 0
  %466 = vmatpush2.bf16.msra.mxu0 %v330
  %467 = vmatprep.mubr.bf16.mxu0 %v149
  %468 = vmatmul.mubr.bf16.gmra.mxu0 %v148
  %v469 = vpop.f32.mrf.mxu0
  %v470 = vadd.f32 %v405, %v469
  %v471 = vpop.f32.mrf.mxu0
  %v472 = vpop.f32.mrf.mxu0
  %v473 = vadd.f32 %v408, %v472
  %v474 = vpop.f32.mrf.mxu0
  %475 = vmatprep.mubr.bf16.mxu0 %v153
  %476 = vmatmul.mubr.bf16.gmra.mxu0 %v152
  %v477 = vpop.f32.mrf.mxu0
  %v478 = vadd.f32 %v413, %v477
  %v479 = vpop.f32.mrf.mxu0
  %v480 = vpop.f32.mrf.mxu0
  %v481 = vadd.f32 %v416, %v480
  %v482 = vpop.f32.mrf.mxu0
  %483 = vmatprep.mubr.bf16.mxu0 %v157
  %484 = vmatmul.mubr.bf16.gmra.mxu0 %v156
  %v485 = vpop.f32.mrf.mxu0
  %v486 = vadd.f32 %v421, %v485
  %v487 = vpop.f32.mrf.mxu0
  %v488 = vpop.f32.mrf.mxu0
  %v489 = vadd.f32 %v424, %v488
  %v490 = vpop.f32.mrf.mxu0
  %491 = vmatprep.mubr.bf16.mxu0 %v161
  %492 = vmatmul.mubr.bf16.gmra.mxu0 %v160
  %v493 = vpop.f32.mrf.mxu0
  %v494 = vadd.f32 %v429, %v493
  %v495 = vpop.f32.mrf.mxu0
  %v496 = vpop.f32.mrf.mxu0
  %v497 = vadd.f32 %v432, %v496
  %v498 = vpop.f32.mrf.mxu0
  %499 = vdwg.mxu0
  %vm500 = vcmask 261120
  %v501 = vsel %vm500, %v470, 0.0
  %502 = vadd.xlane.f32.xlu0 %v501
  %v503 = vpop.xlane.xlu0 %502
  %v504 = vsel %vm500, %v473, 0.0
  %505 = vadd.xlane.f32.xlu0 %v504
  %v506 = vpop.xlane.xlu0 %505
  %v507 = vsel %vm500, %v478, 0.0
  %508 = vadd.xlane.f32.xlu0 %v507
  %v509 = vpop.xlane.xlu0 %508
  %v510 = vsel %vm500, %v481, 0.0
  %511 = vadd.xlane.f32.xlu0 %v510
  %v512 = vpop.xlane.xlu0 %511
  %v513 = vsel %vm500, %v486, 0.0
  %514 = vadd.xlane.f32.xlu0 %v513
  %v515 = vpop.xlane.xlu0 %514
  %v516 = vsel %vm500, %v489, 0.0
  %517 = vadd.xlane.f32.xlu0 %v516
  %v518 = vpop.xlane.xlu0 %517
  %v519 = vsel %vm500, %v494, 0.0
  %520 = vadd.xlane.f32.xlu0 %v519
  %v521 = vpop.xlane.xlu0 %520
  %v522 = vsel %vm500, %v497, 0.0
  %523 = vadd.xlane.f32.xlu0 %v522
  %v524 = vpop.xlane.xlu0 %523
  %v525 = vrcp.pop 32.0
  %v526 = vmul.f32 %v503, %v525
  %v527 = vmul.f32 %v506, %v525
  %v528 = vmul.f32 %v509, %v525
  %v529 = vmul.f32 %v512, %v525
  %v530 = vmul.f32 %v515, %v525
  %v531 = vmul.f32 %v518, %v525
  %v532 = vmul.f32 %v521, %v525
  %v533 = vmul.f32 %v524, %v525
  %v534 = vmul.f32 %v470, %v470
  %v535 = vmul.f32 %v473, %v473
  %v536 = vmul.f32 %v478, %v478
  %v537 = vmul.f32 %v481, %v481
  %v538 = vmul.f32 %v486, %v486
  %v539 = vmul.f32 %v489, %v489
  %v540 = vmul.f32 %v494, %v494
  %v541 = vmul.f32 %v497, %v497
  %v542 = vsel %vm500, %v534, 0.0
  %543 = vadd.xlane.f32.xlu0 %v542
  %v544 = vpop.xlane.xlu0 %543
  %v545 = vsel %vm500, %v535, 0.0
  %546 = vadd.xlane.f32.xlu0 %v545
  %v547 = vpop.xlane.xlu0 %546
  %v548 = vsel %vm500, %v536, 0.0
  %549 = vadd.xlane.f32.xlu0 %v548
  %v550 = vpop.xlane.xlu0 %549
  %v551 = vsel %vm500, %v537, 0.0
  %552 = vadd.xlane.f32.xlu0 %v551
  %v553 = vpop.xlane.xlu0 %552
  %v554 = vsel %vm500, %v538, 0.0
  %555 = vadd.xlane.f32.xlu0 %v554
  %v556 = vpop.xlane.xlu0 %555
  %v557 = vsel %vm500, %v539, 0.0
  %558 = vadd.xlane.f32.xlu0 %v557
  %v559 = vpop.xlane.xlu0 %558
  %v560 = vsel %vm500, %v540, 0.0
  %561 = vadd.xlane.f32.xlu0 %v560
  %v562 = vpop.xlane.xlu0 %561
  %v563 = vsel %vm500, %v541, 0.0
  %564 = vadd.xlane.f32.xlu0 %v563
  %v565 = vpop.xlane.xlu0 %564
  %v566 = vmul.f32 %v544, %v525
  %v567 = vmul.f32 %v547, %v525
  %v568 = vmul.f32 %v550, %v525
  %v569 = vmul.f32 %v553, %v525
  %v570 = vmul.f32 %v556, %v525
  %v571 = vmul.f32 %v559, %v525
  %v572 = vmul.f32 %v562, %v525
  %v573 = vmul.f32 %v565, %v525
  %v574 = vmul.f32 %v526, %v526
  %v575 = vmul.f32 %v527, %v527
  %v576 = vmul.f32 %v528, %v528
  %v577 = vmul.f32 %v529, %v529
  %v578 = vmul.f32 %v530, %v530
  %v579 = vmul.f32 %v531, %v531
  %v580 = vmul.f32 %v532, %v532
  %v581 = vmul.f32 %v533, %v533
  %v582 = vsub.f32 %v566, %v574
  %v583 = vsub.f32 %v567, %v575
  %v584 = vsub.f32 %v568, %v576
  %v585 = vsub.f32 %v569, %v577
  %v586 = vsub.f32 %v570, %v578
  %v587 = vsub.f32 %v571, %v579
  %v588 = vsub.f32 %v572, %v580
  %v589 = vsub.f32 %v573, %v581
  %v590 = vmax.f32 %v582, 0.0
  %v591 = vmax.f32 %v583, 0.0
  %v592 = vmax.f32 %v584, 0.0
  %v593 = vmax.f32 %v585, 0.0
  %v594 = vmax.f32 %v586, 0.0
  %v595 = vmax.f32 %v587, 0.0
  %v596 = vmax.f32 %v588, 0.0
  %v597 = vmax.f32 %v589, 0.0
  %v598 = vadd.f32 %v590, 1e-05
  %v599 = vadd.f32 %v591, 1e-05
  %v600 = vadd.f32 %v592, 1e-05
  %v601 = vadd.f32 %v593, 1e-05
  %v602 = vadd.f32 %v594, 1e-05
  %v603 = vadd.f32 %v595, 1e-05
  %v604 = vadd.f32 %v596, 1e-05
  %v605 = vadd.f32 %v597, 1e-05
  %v606 = vrsqrt.pop %v598
  %v607 = vrsqrt.pop %v599
  %v608 = vrsqrt.pop %v600
  %v609 = vrsqrt.pop %v601
  %v610 = vrsqrt.pop %v602
  %v611 = vrsqrt.pop %v603
  %v612 = vrsqrt.pop %v604
  %v613 = vrsqrt.pop %v605
  %v614 = vld [vmem:[%s2] sm:$0xff]
  %v615 = vld [vmem:[%s2 + $0x8] sm:$0xff]
  %v616 = vld [vmem:[%s2 + $0x10] sm:$0xff]
  %v617 = vld [vmem:[%s2 + $0x18] sm:$0xff]
  %v618 = vld [vmem:[%s2 + $0x20] sm:$0xff]
  %v619 = vld [vmem:[%s2 + $0x28] sm:$0xff]
  %v620 = vld [vmem:[%s2 + $0x30] sm:$0xff]
  %v621 = vld [vmem:[%s2 + $0x38] sm:$0xff]
  %v622 = vmul.f32 %v606, %v614
  %v623 = vmul.f32 %v607, %v615
  %v624 = vmul.f32 %v608, %v616
  %v625 = vmul.f32 %v609, %v617
  %v626 = vmul.f32 %v610, %v618
  %v627 = vmul.f32 %v611, %v619
  %v628 = vmul.f32 %v612, %v620
  %v629 = vmul.f32 %v613, %v621
  %v630 = vsub.f32 %v470, %v526
  %v631 = vsub.f32 %v473, %v527
  %v632 = vsub.f32 %v478, %v528
  %v633 = vsub.f32 %v481, %v529
  %v634 = vsub.f32 %v486, %v530
  %v635 = vsub.f32 %v489, %v531
  %v636 = vsub.f32 %v494, %v532
  %v637 = vsub.f32 %v497, %v533
  %639 = vset.pattern.permute.xlu0 0
  %640 = vperm.xlu0 %639, %v622
  %v641 = vpop.permute.xlu0 %640
  %644 = vset.pattern.permute.xlu0 0
  %645 = vperm.xlu0 %644, %v623
  %v646 = vpop.permute.xlu0 %645
  %649 = vset.pattern.permute.xlu0 0
  %650 = vperm.xlu0 %649, %v624
  %v651 = vpop.permute.xlu0 %650
  %654 = vset.pattern.permute.xlu0 0
  %655 = vperm.xlu0 %654, %v625
  %v656 = vpop.permute.xlu0 %655
  %659 = vset.pattern.permute.xlu0 0
  %660 = vperm.xlu0 %659, %v626
  %v661 = vpop.permute.xlu0 %660
  %664 = vset.pattern.permute.xlu0 0
  %665 = vperm.xlu0 %664, %v627
  %v666 = vpop.permute.xlu0 %665
  %669 = vset.pattern.permute.xlu0 0
  %670 = vperm.xlu0 %669, %v628
  %v671 = vpop.permute.xlu0 %670
  %674 = vset.pattern.permute.xlu0 0
  %675 = vperm.xlu0 %674, %v629
  %v676 = vpop.permute.xlu0 %675
  %v678 = vmul.f32 %v630, %v641
  %v679 = vmul.f32 %v631, %v646
  %v680 = vmul.f32 %v632, %v651
  %v681 = vmul.f32 %v633, %v656
  %v682 = vmul.f32 %v634, %v661
  %v683 = vmul.f32 %v635, %v666
  %v684 = vmul.f32 %v636, %v671
  %v685 = vmul.f32 %v637, %v676
  %v686 = vld [vmem:[%s3] sm:$0xff]
  %v687 = vld [vmem:[%s3 + $0x8] sm:$0xff]
  %v688 = vld [vmem:[%s3 + $0x10] sm:$0xff]
  %v689 = vld [vmem:[%s3 + $0x18] sm:$0xff]
  %v690 = vld [vmem:[%s3 + $0x20] sm:$0xff]
  %v691 = vld [vmem:[%s3 + $0x28] sm:$0xff]
  %v692 = vld [vmem:[%s3 + $0x30] sm:$0xff]
  %v693 = vld [vmem:[%s3 + $0x38] sm:$0xff]
  %695 = vset.pattern.permute.xlu0 0
  %696 = vperm.xlu0 %695, %v686
  %v697 = vpop.permute.xlu0 %696
  %700 = vset.pattern.permute.xlu0 0
  %701 = vperm.xlu0 %700, %v687
  %v702 = vpop.permute.xlu0 %701
  %705 = vset.pattern.permute.xlu0 0
  %706 = vperm.xlu0 %705, %v688
  %v707 = vpop.permute.xlu0 %706
  %710 = vset.pattern.permute.xlu0 0
  %711 = vperm.xlu0 %710, %v689
  %v712 = vpop.permute.xlu0 %711
  %715 = vset.pattern.permute.xlu0 0
  %716 = vperm.xlu0 %715, %v690
  %v717 = vpop.permute.xlu0 %716
  %720 = vset.pattern.permute.xlu0 0
  %721 = vperm.xlu0 %720, %v691
  %v722 = vpop.permute.xlu0 %721
  %725 = vset.pattern.permute.xlu0 0
  %726 = vperm.xlu0 %725, %v692
  %v727 = vpop.permute.xlu0 %726
  %730 = vset.pattern.permute.xlu0 0
  %731 = vperm.xlu0 %730, %v693
  %v732 = vpop.permute.xlu0 %731
  %v734 = vadd.f32 %v678, %v697
  %v735 = vadd.f32 %v679, %v702
  %v736 = vadd.f32 %v680, %v707
  %v737 = vadd.f32 %v681, %v712
  %v738 = vadd.f32 %v682, %v717
  %v739 = vadd.f32 %v683, %v722
  %v740 = vadd.f32 %v684, %v727
  %v741 = vadd.f32 %v685, %v732
  %vm742 = vcmp.ge.f32.partialorder %v734, 0.0
  %vm743 = vcmp.ge.f32.partialorder %v735, 0.0
  %vm744 = vcmp.ge.f32.partialorder %v736, 0.0
  %vm745 = vcmp.ge.f32.partialorder %v737, 0.0
  %vm746 = vcmp.ge.f32.partialorder %v738, 0.0
  %vm747 = vcmp.ge.f32.partialorder %v739, 0.0
  %vm748 = vcmp.ge.f32.partialorder %v740, 0.0
  %vm749 = vcmp.ge.f32.partialorder %v741, 0.0
  %v750 = vmul.f32 %v734, 0.2
  %v751 = vmul.f32 %v735, 0.2
  %v752 = vmul.f32 %v736, 0.2
  %v753 = vmul.f32 %v737, 0.2
  %v754 = vmul.f32 %v738, 0.2
  %v755 = vmul.f32 %v739, 0.2
  %v756 = vmul.f32 %v740, 0.2
  %v757 = vmul.f32 %v741, 0.2
  %v758 = vsel %vm742, %v734, %v750
  %v759 = vsel %vm743, %v735, %v751
  %v760 = vsel %vm744, %v736, %v752
  %v761 = vsel %vm745, %v737, %v753
  %v762 = vsel %vm746, %v738, %v754
  %v763 = vsel %vm747, %v739, %v755
  %v764 = vsel %vm748, %v740, %v756
  %v765 = vsel %vm749, %v741, %v757
  %v766 = vpack.c.bf16 %v759, %v758
  %v767 = vpack.c.bf16 %v761, %v760
  %v768 = vpack.c.bf16 %v763, %v762
  %v769 = vpack.c.bf16 %v765, %v764
  %v774 = vunpack.c.l.b16 %v766
  %v775 = vunpack.c.h.b16 %v766
  %v776 = vunpack.c.l.b16 %v767
  %v777 = vunpack.c.h.b16 %v767
  %v778 = vunpack.c.l.b16 %v768
  %v779 = vunpack.c.h.b16 %v768
  %v780 = vunpack.c.l.b16 %v769
  %v781 = vunpack.c.h.b16 %v769
  %v782 = vpack.c.b16 %v774, %v774
  %v783 = vpack.c.b16 %v775, %v775
  %v784 = vpack.c.b16 %v776, %v776
  %v785 = vpack.c.b16 %v777, %v777
  %v786 = vpack.c.b16 %v778, %v778
  %v787 = vpack.c.b16 %v779, %v779
  %v788 = vpack.c.b16 %v780, %v780
  %v789 = vpack.c.b16 %v781, %v781
  %vm798 = vcmask 257024
  %799 = vst.msk [vmem:[%s4] sm:$0xf] %vm798, %v782
  %800 = vst.msk [vmem:[%s4 + $0x4] sm:$0xf] %vm798, %v783
  %801 = vst.msk [vmem:[%s4 + $0x8] sm:$0xf] %vm798, %v784
  %802 = vst.msk [vmem:[%s4 + $0xc] sm:$0xf] %vm798, %v785
  %803 = vst.msk [vmem:[%s4 + $0x10] sm:$0xf] %vm798, %v786
  %804 = vst.msk [vmem:[%s4 + $0x14] sm:$0xf] %vm798, %v787
  %805 = vst.msk [vmem:[%s4 + $0x18] sm:$0xf] %vm798, %v788
  %806 = vst.msk [vmem:[%s4 + $0x1c] sm:$0xf] %vm798, %v789
  // Predicated region
  $region18: #{_forward.10} parent=0 // pred_check
    _
  $region19: #{_forward.10} parent=0 // pred_check_branch
    %808 = sbr.rel (0) target = $region21
  $region20: #{_forward.10} parent=0 // pred_region
    _
  $region21: #{_forward.10} parent=0 // pred_fallthru
    _
  // Predicated region
  $region22: #{_forward.10} parent=0 // pred_check
    _
  $region23: #{_forward.10} parent=0 // pred_check_branch
    %810 = sbr.rel (0) target = $region25
  $region24: #{_forward.10} parent=0 // pred_region
    _
  $region25: #{_forward.10} parent=0 // pred_fallthru
    _

// kernel: _forward.11
$region0: #{_forward.11}
  #allocation0 [shape = 'u32[]', space=smem, size = 0x4, offset = 0x4, fixed_abs, tag = 'smem constant byte address 0x4 - core index']
  #allocation1 [shape = 'u32[144,128]{1,0:T(1,128)}', space=vmem, size = 0x12000, scoped, tag = 'internal scratch']
  %s0 = inlined_call_operand.vmem [shape: bf16[8,1024], index: 0, kind: input, shape index: {}]
  %s1 = inlined_call_operand.vmem [shape: bf16[1024,2], index: 1, kind: input, shape index: {}]
  %s2 = inlined_call_operand.vmem [shape: f32[8,2], index: 2, kind: output, shape index: {}]
  %s3 = sld [smem:[#allocation0]]
  $region18: #{_forward.11} parent=0
    _
  %s5 = ssub.s32 1, %s3
  %s6 = scalar_select 0, %s5, %s3
  // Predicated region
  $region2: #{_forward.11} parent=0 // pred_check
    _
  $region3: #{_forward.11} parent=0 // pred_check_branch
    %8 = sbr.rel (0) target = $region5
  $region4: #{_forward.11} parent=0 // pred_region
    _
  $region5: #{_forward.11} parent=0 // pred_fallthru
    _
  // Predicated region
  $region6: #{_forward.11} parent=0 // pred_check
    _
  $region7: #{_forward.11} parent=0 // pred_check_branch
    %10 = sbr.rel (0) target = $region9
  $region8: #{_forward.11} parent=0 // pred_region
    _
  $region9: #{_forward.11} parent=0 // pred_fallthru
    _
  %v12 = vld [vmem:[%s0] sm:$0xff]
  %v13 = vld [vmem:[%s0 + $0x8] sm:$0xff]
  %v14 = vld [vmem:[%s0 + $0x10] sm:$0xff]
  %v15 = vld [vmem:[%s0 + $0x18] sm:$0xff]
  %v16 = vld [vmem:[%s1] sm:$0xf]
  %v17 = vld [vmem:[%s1 + $0x4] sm:$0xf]
  %v18 = vld [vmem:[%s1 + $0x8] sm:$0xf]
  %v19 = vld [vmem:[%s1 + $0xc] sm:$0xf]
  %v20 = vld [vmem:[%s1 + $0x10] sm:$0xf]
  %v21 = vld [vmem:[%s1 + $0x14] sm:$0xf]
  %v22 = vld [vmem:[%s1 + $0x18] sm:$0xf]
  %v23 = vld [vmem:[%s1 + $0x1c] sm:$0xf]
  %v24 = vld [vmem:[%s1 + $0x20] sm:$0xf]
  %v25 = vld [vmem:[%s1 + $0x24] sm:$0xf]
  %v26 = vld [vmem:[%s1 + $0x28] sm:$0xf]
  %v27 = vld [vmem:[%s1 + $0x2c] sm:$0xf]
  %v28 = vld [vmem:[%s1 + $0x30] sm:$0xf]
  %v29 = vld [vmem:[%s1 + $0x34] sm:$0xf]
  %v30 = vld [vmem:[%s1 + $0x38] sm:$0xf]
  %v31 = vld [vmem:[%s1 + $0x3c] sm:$0xf]
  %v32 = vld [vmem:[%s1 + $0x40] sm:$0xf]
  %v33 = vld [vmem:[%s1 + $0x44] sm:$0xf]
  %v34 = vld [vmem:[%s1 + $0x48] sm:$0xf]
  %v35 = vld [vmem:[%s1 + $0x4c] sm:$0xf]
  %v36 = vld [vmem:[%s1 + $0x50] sm:$0xf]
  %v37 = vld [vmem:[%s1 + $0x54] sm:$0xf]
  %v38 = vld [vmem:[%s1 + $0x58] sm:$0xf]
  %v39 = vld [vmem:[%s1 + $0x5c] sm:$0xf]
  %v40 = vld [vmem:[%s1 + $0x60] sm:$0xf]
  %v41 = vld [vmem:[%s1 + $0x64] sm:$0xf]
  %v42 = vld [vmem:[%s1 + $0x68] sm:$0xf]
  %v43 = vld [vmem:[%s1 + $0x6c] sm:$0xf]
  %v44 = vld [vmem:[%s1 + $0x70] sm:$0xf]
  %v45 = vld [vmem:[%s1 + $0x74] sm:$0xf]
  %v46 = vld [vmem:[%s1 + $0x78] sm:$0xf]
  %v47 = vld [vmem:[%s1 + $0x7c] sm:$0xf]
  %v48 = vld [vmem:[%s1 + $0x80] sm:$0xf]
  %v49 = vld [vmem:[%s1 + $0x84] sm:$0xf]
  %v50 = vld [vmem:[%s1 + $0x88] sm:$0xf]
  %v51 = vld [vmem:[%s1 + $0x8c] sm:$0xf]
  %v52 = vld [vmem:[%s1 + $0x90] sm:$0xf]
  %v53 = vld [vmem:[%s1 + $0x94] sm:$0xf]
  %v54 = vld [vmem:[%s1 + $0x98] sm:$0xf]
  %v55 = vld [vmem:[%s1 + $0x9c] sm:$0xf]
  %v56 = vld [vmem:[%s1 + $0xa0] sm:$0xf]
  %v57 = vld [vmem:[%s1 + $0xa4] sm:$0xf]
  %v58 = vld [vmem:[%s1 + $0xa8] sm:$0xf]
  %v59 = vld [vmem:[%s1 + $0xac] sm:$0xf]
  %v60 = vld [vmem:[%s1 + $0xb0] sm:$0xf]
  %v61 = vld [vmem:[%s1 + $0xb4] sm:$0xf]
  %v62 = vld [vmem:[%s1 + $0xb8] sm:$0xf]
  %v63 = vld [vmem:[%s1 + $0xbc] sm:$0xf]
  %v64 = vld [vmem:[%s1 + $0xc0] sm:$0xf]
  %v65 = vld [vmem:[%s1 + $0xc4] sm:$0xf]
  %v66 = vld [vmem:[%s1 + $0xc8] sm:$0xf]
  %v67 = vld [vmem:[%s1 + $0xcc] sm:$0xf]
  %v68 = vld [vmem:[%s1 + $0xd0] sm:$0xf]
  %v69 = vld [vmem:[%s1 + $0xd4] sm:$0xf]
  %v70 = vld [vmem:[%s1 + $0xd8] sm:$0xf]
  %v71 = vld [vmem:[%s1 + $0xdc] sm:$0xf]
  %v72 = vld [vmem:[%s1 + $0xe0] sm:$0xf]
  %v73 = vld [vmem:[%s1 + $0xe4] sm:$0xf]
  %v74 = vld [vmem:[%s1 + $0xe8] sm:$0xf]
  %v75 = vld [vmem:[%s1 + $0xec] sm:$0xf]
  %v76 = vld [vmem:[%s1 + $0xf0] sm:$0xf]
  %v77 = vld [vmem:[%s1 + $0xf4] sm:$0xf]
  %v78 = vld [vmem:[%s1 + $0xf8] sm:$0xf]
  %v79 = vld [vmem:[%s1 + $0xfc] sm:$0xf]
  %v80 = vld [vmem:[%s1 + $0x100] sm:$0xf]
  %v81 = vld [vmem:[%s1 + $0x104] sm:$0xf]
  %v82 = vld [vmem:[%s1 + $0x108] sm:$0xf]
  %v83 = vld [vmem:[%s1 + $0x10c] sm:$0xf]
  %v84 = vld [vmem:[%s1 + $0x110] sm:$0xf]
  %v85 = vld [vmem:[%s1 + $0x114] sm:$0xf]
  %v86 = vld [vmem:[%s1 + $0x118] sm:$0xf]
  %v87 = vld [vmem:[%s1 + $0x11c] sm:$0xf]
  %v88 = vld [vmem:[%s1 + $0x120] sm:$0xf]
  %v89 = vld [vmem:[%s1 + $0x124] sm:$0xf]
  %v90 = vld [vmem:[%s1 + $0x128] sm:$0xf]
  %v91 = vld [vmem:[%s1 + $0x12c] sm:$0xf]
  %v92 = vld [vmem:[%s1 + $0x130] sm:$0xf]
  %v93 = vld [vmem:[%s1 + $0x134] sm:$0xf]
  %v94 = vld [vmem:[%s1 + $0x138] sm:$0xf]
  %v95 = vld [vmem:[%s1 + $0x13c] sm:$0xf]
  %v96 = vld [vmem:[%s1 + $0x140] sm:$0xf]
  %v97 = vld [vmem:[%s1 + $0x144] sm:$0xf]
  %v98 = vld [vmem:[%s1 + $0x148] sm:$0xf]
  %v99 = vld [vmem:[%s1 + $0x14c] sm:$0xf]
  %v100 = vld [vmem:[%s1 + $0x150] sm:$0xf]
  %v101 = vld [vmem:[%s1 + $0x154] sm:$0xf]
  %v102 = vld [vmem:[%s1 + $0x158] sm:$0xf]
  %v103 = vld [vmem:[%s1 + $0x15c] sm:$0xf]
  %v104 = vld [vmem:[%s1 + $0x160] sm:$0xf]
  %v105 = vld [vmem:[%s1 + $0x164] sm:$0xf]
  %v106 = vld [vmem:[%s1 + $0x168] sm:$0xf]
  %v107 = vld [vmem:[%s1 + $0x16c] sm:$0xf]
  %v108 = vld [vmem:[%s1 + $0x170] sm:$0xf]
  %v109 = vld [vmem:[%s1 + $0x174] sm:$0xf]
  %v110 = vld [vmem:[%s1 + $0x178] sm:$0xf]
  %v111 = vld [vmem:[%s1 + $0x17c] sm:$0xf]
  %v112 = vld [vmem:[%s1 + $0x180] sm:$0xf]
  %v113 = vld [vmem:[%s1 + $0x184] sm:$0xf]
  %v114 = vld [vmem:[%s1 + $0x188] sm:$0xf]
  %v115 = vld [vmem:[%s1 + $0x18c] sm:$0xf]
  %v116 = vld [vmem:[%s1 + $0x190] sm:$0xf]
  %v117 = vld [vmem:[%s1 + $0x194] sm:$0xf]
  %v118 = vld [vmem:[%s1 + $0x198] sm:$0xf]
  %v119 = vld [vmem:[%s1 + $0x19c] sm:$0xf]
  %v120 = vld [vmem:[%s1 + $0x1a0] sm:$0xf]
  %v121 = vld [vmem:[%s1 + $0x1a4] sm:$0xf]
  %v122 = vld [vmem:[%s1 + $0x1a8] sm:$0xf]
  %v123 = vld [vmem:[%s1 + $0x1ac] sm:$0xf]
  %v124 = vld [vmem:[%s1 + $0x1b0] sm:$0xf]
  %v125 = vld [vmem:[%s1 + $0x1b4] sm:$0xf]
  %v126 = vld [vmem:[%s1 + $0x1b8] sm:$0xf]
  %v127 = vld [vmem:[%s1 + $0x1bc] sm:$0xf]
  %v128 = vld [vmem:[%s1 + $0x1c0] sm:$0xf]
  %v129 = vld [vmem:[%s1 + $0x1c4] sm:$0xf]
  %v130 = vld [vmem:[%s1 + $0x1c8] sm:$0xf]
  %v131 = vld [vmem:[%s1 + $0x1cc] sm:$0xf]
  %v132 = vld [vmem:[%s1 + $0x1d0] sm:$0xf]
  %v133 = vld [vmem:[%s1 + $0x1d4] sm:$0xf]
  %v134 = vld [vmem:[%s1 + $0x1d8] sm:$0xf]
  %v135 = vld [vmem:[%s1 + $0x1dc] sm:$0xf]
  %v136 = vld [vmem:[%s1 + $0x1e0] sm:$0xf]
  %v137 = vld [vmem:[%s1 + $0x1e4] sm:$0xf]
  %v138 = vld [vmem:[%s1 + $0x1e8] sm:$0xf]
  %v139 = vld [vmem:[%s1 + $0x1ec] sm:$0xf]
  %v140 = vld [vmem:[%s1 + $0x1f0] sm:$0xf]
  %v141 = vld [vmem:[%s1 + $0x1f4] sm:$0xf]
  %v142 = vld [vmem:[%s1 + $0x1f8] sm:$0xf]
  %v143 = vld [vmem:[%s1 + $0x1fc] sm:$0xf]
  %v148 = vunpack.c.l.b16 %v12
  %v149 = vunpack.c.h.b16 %v12
  %v150 = vunpack.c.l.b16 %v13
  %v151 = vunpack.c.h.b16 %v13
  %v152 = vunpack.c.l.b16 %v14
  %v153 = vunpack.c.h.b16 %v14
  %v154 = vunpack.c.l.b16 %v15
  %v155 = vunpack.c.h.b16 %v15
  %v156 = vpack.c.b16 %v148, %v148
  %v157 = vpack.c.b16 %v149, %v149
  %v158 = vpack.c.b16 %v150, %v150
  %v159 = vpack.c.b16 %v151, %v151
  %v160 = vpack.c.b16 %v152, %v152
  %v161 = vpack.c.b16 %v153, %v153
  %v162 = vpack.c.b16 %v154, %v154
  %v163 = vpack.c.b16 %v155, %v155
  %v300 = vunpack.c.l.b16 %v16
  %v301 = vunpack.c.l.b16 %v17
  %v302 = vunpack.c.l.b16 %v18
  %v303 = vunpack.c.l.b16 %v19
  %v304 = vunpack.c.l.b16 %v20
  %v305 = vunpack.c.l.b16 %v21
  %v306 = vunpack.c.l.b16 %v22
  %v307 = vunpack.c.l.b16 %v23
  %v308 = vunpack.c.l.b16 %v24
  %v309 = vunpack.c.l.b16 %v25
  %v310 = vunpack.c.l.b16 %v26
  %v311 = vunpack.c.l.b16 %v27
  %v312 = vunpack.c.l.b16 %v28
  %v313 = vunpack.c.l.b16 %v29
  %v314 = vunpack.c.l.b16 %v30
  %v315 = vunpack.c.l.b16 %v31
  %v316 = vunpack.c.l.b16 %v32
  %v317 = vunpack.c.l.b16 %v33
  %v318 = vunpack.c.l.b16 %v34
  %v319 = vunpack.c.l.b16 %v35
  %v320 = vunpack.c.l.b16 %v36
  %v321 = vunpack.c.l.b16 %v37
  %v322 = vunpack.c.l.b16 %v38
  %v323 = vunpack.c.l.b16 %v39
  %v324 = vunpack.c.l.b16 %v40
  %v325 = vunpack.c.l.b16 %v41
  %v326 = vunpack.c.l.b16 %v42
  %v327 = vunpack.c.l.b16 %v43
  %v328 = vunpack.c.l.b16 %v44
  %v329 = vunpack.c.l.b16 %v45
  %v330 = vunpack.c.l.b16 %v46
  %v331 = vunpack.c.l.b16 %v47
  %v332 = vunpack.c.l.b16 %v48
  %v333 = vunpack.c.l.b16 %v49
  %v334 = vunpack.c.l.b16 %v50
  %v335 = vunpack.c.l.b16 %v51
  %v336 = vunpack.c.l.b16 %v52
  %v337 = vunpack.c.l.b16 %v53
  %v338 = vunpack.c.l.b16 %v54
  %v339 = vunpack.c.l.b16 %v55
  %v340 = vunpack.c.l.b16 %v56
  %v341 = vunpack.c.l.b16 %v57
  %v342 = vunpack.c.l.b16 %v58
  %v343 = vunpack.c.l.b16 %v59
  %v344 = vunpack.c.l.b16 %v60
  %v345 = vunpack.c.l.b16 %v61
  %v346 = vunpack.c.l.b16 %v62
  %v347 = vunpack.c.l.b16 %v63
  %v348 = vunpack.c.l.b16 %v64
  %v349 = vunpack.c.l.b16 %v65
  %v350 = vunpack.c.l.b16 %v66
  %v351 = vunpack.c.l.b16 %v67
  %v352 = vunpack.c.l.b16 %v68
  %v353 = vunpack.c.l.b16 %v69
  %v354 = vunpack.c.l.b16 %v70
  %v355 = vunpack.c.l.b16 %v71
  %v356 = vunpack.c.l.b16 %v72
  %v357 = vunpack.c.l.b16 %v73
  %v358 = vunpack.c.l.b16 %v74
  %v359 = vunpack.c.l.b16 %v75
  %v360 = vunpack.c.l.b16 %v76
  %v361 = vunpack.c.l.b16 %v77
  %v362 = vunpack.c.l.b16 %v78
  %v363 = vunpack.c.l.b16 %v79
  %v364 = vunpack.c.l.b16 %v80
  %v365 = vunpack.c.l.b16 %v81
  %v366 = vunpack.c.l.b16 %v82
  %v367 = vunpack.c.l.b16 %v83
  %v368 = vunpack.c.l.b16 %v84
  %v369 = vunpack.c.l.b16 %v85
  %v370 = vunpack.c.l.b16 %v86
  %v371 = vunpack.c.l.b16 %v87
  %v372 = vunpack.c.l.b16 %v88
  %v373 = vunpack.c.l.b16 %v89
  %v374 = vunpack.c.l.b16 %v90
  %v375 = vunpack.c.l.b16 %v91
  %v376 = vunpack.c.l.b16 %v92
  %v377 = vunpack.c.l.b16 %v93
  %v378 = vunpack.c.l.b16 %v94
  %v379 = vunpack.c.l.b16 %v95
  %v380 = vunpack.c.l.b16 %v96
  %v381 = vunpack.c.l.b16 %v97
  %v382 = vunpack.c.l.b16 %v98
  %v383 = vunpack.c.l.b16 %v99
  %v384 = vunpack.c.l.b16 %v100
  %v385 = vunpack.c.l.b16 %v101
  %v386 = vunpack.c.l.b16 %v102
  %v387 = vunpack.c.l.b16 %v103
  %v388 = vunpack.c.l.b16 %v104
  %v389 = vunpack.c.l.b16 %v105
  %v390 = vunpack.c.l.b16 %v106
  %v391 = vunpack.c.l.b16 %v107
  %v392 = vunpack.c.l.b16 %v108
  %v393 = vunpack.c.l.b16 %v109
  %v394 = vunpack.c.l.b16 %v110
  %v395 = vunpack.c.l.b16 %v111
  %v396 = vunpack.c.l.b16 %v112
  %v397 = vunpack.c.l.b16 %v113
  %v398 = vunpack.c.l.b16 %v114
  %v399 = vunpack.c.l.b16 %v115
  %v400 = vunpack.c.l.b16 %v116
  %v401 = vunpack.c.l.b16 %v117
  %v402 = vunpack.c.l.b16 %v118
  %v403 = vunpack.c.l.b16 %v119
  %v404 = vunpack.c.l.b16 %v120
  %v405 = vunpack.c.l.b16 %v121
  %v406 = vunpack.c.l.b16 %v122
  %v407 = vunpack.c.l.b16 %v123
  %v408 = vunpack.c.l.b16 %v124
  %v409 = vunpack.c.l.b16 %v125
  %v410 = vunpack.c.l.b16 %v126
  %v411 = vunpack.c.l.b16 %v127
  %v412 = vunpack.c.l.b16 %v128
  %v413 = vunpack.c.l.b16 %v129
  %v414 = vunpack.c.l.b16 %v130
  %v415 = vunpack.c.l.b16 %v131
  %v416 = vunpack.c.l.b16 %v132
  %v417 = vunpack.c.l.b16 %v133
  %v418 = vunpack.c.l.b16 %v134
  %v419 = vunpack.c.l.b16 %v135
  %v420 = vunpack.c.l.b16 %v136
  %v421 = vunpack.c.l.b16 %v137
  %v422 = vunpack.c.l.b16 %v138
  %v423 = vunpack.c.l.b16 %v139
  %v424 = vunpack.c.l.b16 %v140
  %v425 = vunpack.c.l.b16 %v141
  %v426 = vunpack.c.l.b16 %v142
  %v427 = vunpack.c.l.b16 %v143
  %v428 = vpack.c.b16 %v301, %v300
  %v429 = vpack.c.b16 %v303, %v302
  %v430 = vpack.c.b16 %v305, %v304
  %v431 = vpack.c.b16 %v307, %v306
  %v432 = vpack.c.b16 %v309, %v308
  %v433 = vpack.c.b16 %v311, %v310
  %v434 = vpack.c.b16 %v313, %v312
  %v435 = vpack.c.b16 %v315, %v314
  %v436 = vpack.c.b16 %v317, %v316
  %v437 = vpack.c.b16 %v319, %v318
  %v438 = vpack.c.b16 %v321, %v320
  %v439 = vpack.c.b16 %v323, %v322
  %v440 = vpack.c.b16 %v325, %v324
  %v441 = vpack.c.b16 %v327, %v326
  %v442 = vpack.c.b16 %v329, %v328
  %v443 = vpack.c.b16 %v331, %v330
  %v444 = vpack.c.b16 %v333, %v332
  %v445 = vpack.c.b16 %v335, %v334
  %v446 = vpack.c.b16 %v337, %v336
  %v447 = vpack.c.b16 %v339, %v338
  %v448 = vpack.c.b16 %v341, %v340
  %v449 = vpack.c.b16 %v343, %v342
  %v450 = vpack.c.b16 %v345, %v344
  %v451 = vpack.c.b16 %v347, %v346
  %v452 = vpack.c.b16 %v349, %v348
  %v453 = vpack.c.b16 %v351, %v350
  %v454 = vpack.c.b16 %v353, %v352
  %v455 = vpack.c.b16 %v355, %v354
  %v456 = vpack.c.b16 %v357, %v356
  %v457 = vpack.c.b16 %v359, %v358
  %v458 = vpack.c.b16 %v361, %v360
  %v459 = vpack.c.b16 %v363, %v362
  %v460 = vpack.c.b16 %v365, %v364
  %v461 = vpack.c.b16 %v367, %v366
  %v462 = vpack.c.b16 %v369, %v368
  %v463 = vpack.c.b16 %v371, %v370
  %v464 = vpack.c.b16 %v373, %v372
  %v465 = vpack.c.b16 %v375, %v374
  %v466 = vpack.c.b16 %v377, %v376
  %v467 = vpack.c.b16 %v379, %v378
  %v468 = vpack.c.b16 %v381, %v380
  %v469 = vpack.c.b16 %v383, %v382
  %v470 = vpack.c.b16 %v385, %v384
  %v471 = vpack.c.b16 %v387, %v386
  %v472 = vpack.c.b16 %v389, %v388
  %v473 = vpack.c.b16 %v391, %v390
  %v474 = vpack.c.b16 %v393, %v392
  %v475 = vpack.c.b16 %v395, %v394
  %v476 = vpack.c.b16 %v397, %v396
  %v477 = vpack.c.b16 %v399, %v398
  %v478 = vpack.c.b16 %v401, %v400
  %v479 = vpack.c.b16 %v403, %v402
  %v480 = vpack.c.b16 %v405, %v404
  %v481 = vpack.c.b16 %v407, %v406
  %v482 = vpack.c.b16 %v409, %v408
  %v483 = vpack.c.b16 %v411, %v410
  %v484 = vpack.c.b16 %v413, %v412
  %v485 = vpack.c.b16 %v415, %v414
  %v486 = vpack.c.b16 %v417, %v416
  %v487 = vpack.c.b16 %v419, %v418
  %v488 = vpack.c.b16 %v421, %v420
  %v489 = vpack.c.b16 %v423, %v422
  %v490 = vpack.c.b16 %v425, %v424
  %v491 = vpack.c.b16 %v427, %v426
  %556 = vmatprep.subr.bf16.mxu0 0
  %557 = vmatpush1.bf16.msra.mxu0 %v435
  %558 = vmatprep.subr.bf16.mxu0 0
  %559 = vmatpush1.bf16.msra.mxu0 %v434
  %560 = vmatprep.subr.bf16.mxu0 0
  %561 = vmatpush1.bf16.msra.mxu0 %v433
  %562 = vmatprep.subr.bf16.mxu0 0
  %563 = vmatpush1.bf16.msra.mxu0 %v432
  %564 = vmatprep.subr.bf16.mxu0 0
  %565 = vmatpush1.bf16.msra.mxu0 %v431
  %566 = vmatprep.subr.bf16.mxu0 0
  %567 = vmatpush1.bf16.msra.mxu0 %v430
  %568 = vmatprep.subr.bf16.mxu0 0
  %569 = vmatpush1.bf16.msra.mxu0 %v429
  %570 = vmatprep.subr.bf16.mxu0 0
  %571 = vmatpush1.bf16.msra.mxu0 %v428
  %572 = vmatprep.subr.bf16.mxu0 0
  %573 = vmatpush2.bf16.msra.mxu0 %v443
  %574 = vmatprep.subr.bf16.mxu0 0
  %575 = vmatpush2.bf16.msra.mxu0 %v442
  %576 = vmatprep.subr.bf16.mxu0 0
  %577 = vmatpush2.bf16.msra.mxu0 %v441
  %578 = vmatprep.subr.bf16.mxu0 0
  %579 = vmatpush2.bf16.msra.mxu0 %v440
  %580 = vmatprep.subr.bf16.mxu0 0
  %581 = vmatpush2.bf16.msra.mxu0 %v439
  %582 = vmatprep.subr.bf16.mxu0 0
  %583 = vmatpush2.bf16.msra.mxu0 %v438
  %584 = vmatprep.subr.bf16.mxu0 0
  %585 = vmatpush2.bf16.msra.mxu0 %v437
  %586 = vmatprep.subr.bf16.mxu0 0
  %587 = vmatpush2.bf16.msra.mxu0 %v436
  %588 = vmatprep.mubr.bf16.mxu0 %v157
  %589 = vmatmul.mubr.bf16.gmra.mxu0 %v156
  %v590 = vpop.f32.mrf.mxu0
  %v591 = vadd.f32 0.0, %v590
  %v592 = vpop.f32.mrf.mxu0
  %v593 = vpop.f32.mrf.mxu0
  %v594 = vpop.f32.mrf.mxu0
  %595 = vdwg.mxu0
  %596 = vmatprep.subr.bf16.mxu0 0
  %597 = vmatpush1.bf16.msra.mxu0 %v451
  %598 = vmatprep.subr.bf16.mxu0 0
  %599 = vmatpush1.bf16.msra.mxu0 %v450
  %600 = vmatprep.subr.bf16.mxu0 0
  %601 = vmatpush1.bf16.msra.mxu0 %v449
  %602 = vmatprep.subr.bf16.mxu0 0
  %603 = vmatpush1.bf16.msra.mxu0 %v448
  %604 = vmatprep.subr.bf16.mxu0 0
  %605 = vmatpush1.bf16.msra.mxu0 %v447
  %606 = vmatprep.subr.bf16.mxu0 0
  %607 = vmatpush1.bf16.msra.mxu0 %v446
  %608 = vmatprep.subr.bf16.mxu0 0
  %609 = vmatpush1.bf16.msra.mxu0 %v445
  %610 = vmatprep.subr.bf16.mxu0 0
  %611 = vmatpush1.bf16.msra.mxu0 %v444
  %612 = vmatprep.subr.bf16.mxu0 0
  %613 = vmatpush2.bf16.msra.mxu0 %v459
  %614 = vmatprep.subr.bf16.mxu0 0
  %615 = vmatpush2.bf16.msra.mxu0 %v458
  %616 = vmatprep.subr.bf16.mxu0 0
  %617 = vmatpush2.bf16.msra.mxu0 %v457
  %618 = vmatprep.subr.bf16.mxu0 0
  %619 = vmatpush2.bf16.msra.mxu0 %v456
  %620 = vmatprep.subr.bf16.mxu0 0
  %621 = vmatpush2.bf16.msra.mxu0 %v455
  %622 = vmatprep.subr.bf16.mxu0 0
  %623 = vmatpush2.bf16.msra.mxu0 %v454
  %624 = vmatprep.subr.bf16.mxu0 0
  %625 = vmatpush2.bf16.msra.mxu0 %v453
  %626 = vmatprep.subr.bf16.mxu0 0
  %627 = vmatpush2.bf16.msra.mxu0 %v452
  %628 = vmatprep.mubr.bf16.mxu0 %v159
  %629 = vmatmul.mubr.bf16.gmra.mxu0 %v158
  %v630 = vpop.f32.mrf.mxu0
  %v631 = vadd.f32 %v591, %v630
  %v632 = vpop.f32.mrf.mxu0
  %v633 = vpop.f32.mrf.mxu0
  %v634 = vpop.f32.mrf.mxu0
  %635 = vdwg.mxu0
  %636 = vmatprep.subr.bf16.mxu0 0
  %637 = vmatpush1.bf16.msra.mxu0 %v467
  %638 = vmatprep.subr.bf16.mxu0 0
  %639 = vmatpush1.bf16.msra.mxu0 %v466
  %640 = vmatprep.subr.bf16.mxu0 0
  %641 = vmatpush1.bf16.msra.mxu0 %v465
  %642 = vmatprep.subr.bf16.mxu0 0
  %643 = vmatpush1.bf16.msra.mxu0 %v464
  %644 = vmatprep.subr.bf16.mxu0 0
  %645 = vmatpush1.bf16.msra.mxu0 %v463
  %646 = vmatprep.subr.bf16.mxu0 0
  %647 = vmatpush1.bf16.msra.mxu0 %v462
  %648 = vmatprep.subr.bf16.mxu0 0
  %649 = vmatpush1.bf16.msra.mxu0 %v461
  %650 = vmatprep.subr.bf16.mxu0 0
  %651 = vmatpush1.bf16.msra.mxu0 %v460
  %652 = vmatprep.subr.bf16.mxu0 0
  %653 = vmatpush2.bf16.msra.mxu0 %v475
  %654 = vmatprep.subr.bf16.mxu0 0
  %655 = vmatpush2.bf16.msra.mxu0 %v474
  %656 = vmatprep.subr.bf16.mxu0 0
  %657 = vmatpush2.bf16.msra.mxu0 %v473
  %658 = vmatprep.subr.bf16.mxu0 0
  %659 = vmatpush2.bf16.msra.mxu0 %v472
  %660 = vmatprep.subr.bf16.mxu0 0
  %661 = vmatpush2.bf16.msra.mxu0 %v471
  %662 = vmatprep.subr.bf16.mxu0 0
  %663 = vmatpush2.bf16.msra.mxu0 %v470
  %664 = vmatprep.subr.bf16.mxu0 0
  %665 = vmatpush2.bf16.msra.mxu0 %v469
  %666 = vmatprep.subr.bf16.mxu0 0
  %667 = vmatpush2.bf16.msra.mxu0 %v468
  %668 = vmatprep.mubr.bf16.mxu0 %v161
  %669 = vmatmul.mubr.bf16.gmra.mxu0 %v160
  %v670 = vpop.f32.mrf.mxu0
  %v671 = vadd.f32 %v631, %v670
  %v672 = vpop.f32.mrf.mxu0
  %v673 = vpop.f32.mrf.mxu0
  %v674 = vpop.f32.mrf.mxu0
  %675 = vdwg.mxu0
  %676 = vmatprep.subr.bf16.mxu0 0
  %677 = vmatpush1.bf16.msra.mxu0 %v483
  %678 = vmatprep.subr.bf16.mxu0 0
  %679 = vmatpush1.bf16.msra.mxu0 %v482
  %680 = vmatprep.subr.bf16.mxu0 0
  %681 = vmatpush1.bf16.msra.mxu0 %v481
  %682 = vmatprep.subr.bf16.mxu0 0
  %683 = vmatpush1.bf16.msra.mxu0 %v480
  %684 = vmatprep.subr.bf16.mxu0 0
  %685 = vmatpush1.bf16.msra.mxu0 %v479
  %686 = vmatprep.subr.bf16.mxu0 0
  %687 = vmatpush1.bf16.msra.mxu0 %v478
  %688 = vmatprep.subr.bf16.mxu0 0
  %689 = vmatpush1.bf16.msra.mxu0 %v477
  %690 = vmatprep.subr.bf16.mxu0 0
  %691 = vmatpush1.bf16.msra.mxu0 %v476
  %692 = vmatprep.subr.bf16.mxu0 0
  %693 = vmatpush2.bf16.msra.mxu0 %v491
  %694 = vmatprep.subr.bf16.mxu0 0
  %695 = vmatpush2.bf16.msra.mxu0 %v490
  %696 = vmatprep.subr.bf16.mxu0 0
  %697 = vmatpush2.bf16.msra.mxu0 %v489
  %698 = vmatprep.subr.bf16.mxu0 0
  %699 = vmatpush2.bf16.msra.mxu0 %v488
  %700 = vmatprep.subr.bf16.mxu0 0
  %701 = vmatpush2.bf16.msra.mxu0 %v487
  %702 = vmatprep.subr.bf16.mxu0 0
  %703 = vmatpush2.bf16.msra.mxu0 %v486
  %704 = vmatprep.subr.bf16.mxu0 0
  %705 = vmatpush2.bf16.msra.mxu0 %v485
  %706 = vmatprep.subr.bf16.mxu0 0
  %707 = vmatpush2.bf16.msra.mxu0 %v484
  %708 = vmatprep.mubr.bf16.mxu0 %v163
  %709 = vmatmul.mubr.bf16.gmra.mxu0 %v162
  %v710 = vpop.f32.mrf.mxu0
  %v711 = vadd.f32 %v671, %v710
  %v712 = vpop.f32.mrf.mxu0
  %v713 = vpop.f32.mrf.mxu0
  %v714 = vpop.f32.mrf.mxu0
  %715 = vdwg.mxu0
  %v716 = vsub.f32 0.0, %v711
  %v717 = vmul.f32 %v716, 1.442695
  %v718 = vpow.pop %v717
  %v719 = vadd.f32 %v718, 1.0
  %v720 = vrcp.pop %v719
  %vm721 = vcmask 15360
  %722 = vst.msk [vmem:[%s2] sm:$0xff] %vm721, %v720
  // Predicated region
  $region10: #{_forward.11} parent=0 // pred_check
    _
  $region11: #{_forward.11} parent=0 // pred_check_branch
    %724 = sbr.rel (0) target = $region13
  $region12: #{_forward.11} parent=0 // pred_region
    _
  $region13: #{_forward.11} parent=0 // pred_fallthru
    _
  // Predicated region
  $region14: #{_forward.11} parent=0 // pred_check
    _
  $region15: #{_forward.11} parent=0 // pred_check_branch
    %726 = sbr.rel (0) target = $region17
  $region16: #{_forward.11} parent=0 // pred_region
    _
  $region17: #{_forward.11} parent=0 // pred_fallthru
    _

</llo_original>
